<compile_context>
chip_gen: v6e
topology: v6e:2x2x1
jax: 0.10.0
libtpu: 0.0.40
codegen_flags: <defaults>
</compile_context>

<pallas_src>
import numpy as np
import jax
import jax.numpy as jnp
from jax.experimental import pallas as pl
from jax.experimental.pallas import tpu as pltpu

_EPS = 1e-5


# -----------------------------------------------------------------------------
# Host-side constants
# -----------------------------------------------------------------------------
def _interp_matrix(in_size, out_size):
    """1-D interpolation matrix of nn.Upsample(mode='bilinear', align_corners=True)."""
    if in_size == 1:
        return np.ones((out_size, 1), np.float32)
    src = np.arange(out_size, dtype=np.float64) * (in_size - 1) / (out_size - 1)
    lo = np.clip(np.floor(src).astype(np.int64), 0, in_size - 1)
    hi = np.minimum(lo + 1, in_size - 1)
    frac = (src - lo).astype(np.float32)
    A = np.zeros((out_size, in_size), np.float32)
    A[np.arange(out_size), lo] += 1.0 - frac
    A[np.arange(out_size), hi] += frac
    return A


def _conv_tap_masks(h, w):
    """(9, h*w) f32 masks for a 3x3 / pad=1 conv: masks[t, y*w+x] == 1 iff the source
    pixel (y+dy, x+dx) with dy=t//3-1, dx=t%3-1 lies inside the image."""
    s = np.arange(h * w)
    yy, xx = s // w, s % w
    masks = np.zeros((9, h * w), np.float32)
    for t in range(9):
        dy, dx = t // 3 - 1, t % 3 - 1
        ok = (yy + dy >= 0) & (yy + dy < h) & (xx + dx >= 0) & (xx + dx < w)
        masks[t] = ok.astype(np.float32)
    return masks


# -----------------------------------------------------------------------------
# Pallas kernels
# -----------------------------------------------------------------------------
def _upsample_kernel(ah_ref, awt_ref, x_ref, o_ref):
    # Separable align_corners=True bilinear 2x upsample:  out_c = A_h @ x_c @ A_w^T.
    # ah: (OH, H), awt: (W, OW), x: (C, H, W) -> o: (C, OH, OW).
    # Channel loop is unrolled at trace time (C is small at this decoder stage).
    for c in range(x_ref.shape[0]):
        t = jnp.dot(ah_ref[...], x_ref[c], preferred_element_type=jnp.float32)
        o_ref[c] = jnp.dot(t, awt_ref[...], preferred_element_type=jnp.float32)


def _conv3x3_acc(xs, w_refs, m_ref, ow):
    """Direct 3x3 / pad=1 conv in VMEM, channels-first.

    xs:     list of (Ci, S) activation tiles (S = H*W on lanes).
    w_refs: matching list of (9, Cout, Ci) weight refs (tap-major, torch cin order).
    m_ref:  (9, S) zero-padding masks.
    Returns the (Cout, S) accumulator (bias / activation not applied here).
    """
    s = xs[0].shape[-1]
    cout = w_refs[0].shape[1]
    acc = jnp.zeros((cout, s), jnp.float32)
    for t in range(9):
        dy, dx = t // 3 - 1, t % 3 - 1
        off = dy * ow + dx
        m = m_ref[t:t + 1, :]                                   # (1, S) border mask
        for x, w_ref in zip(xs, w_refs):
            # patch[:, i] = x[:, i + off]   (pltpu.roll follows jnp.roll semantics);
            # wrapped / out-of-image lanes are zeroed by the mask (== zero padding).
            p = pltpu.roll(x, (-off) % s, 1) if off else x
            acc = acc + jnp.dot(w_ref[t], p * m, preferred_element_type=jnp.float32)
    return acc


def _make_conv1_kernel(ow):
    """Fused: channel concat + conv3x3 + bias + ReLU + per-batch BN partial stats."""
    def kernel(xa_ref, xb_ref, wa_ref, wb_ref, b_ref, m_ref, y_ref, s_ref, ss_ref):
        acc = _conv3x3_acc([xa_ref[0], xb_ref[0]], [wa_ref, wb_ref], m_ref, ow)
        y = jnp.maximum(acc + b_ref[...], 0.0)
        y_ref[0] = y
        s_ref[0] = jnp.sum(y, axis=1, keepdims=True)
        ss_ref[0] = jnp.sum(y * y, axis=1, keepdims=True)
    return kernel


def _make_conv2_kernel(ow):
    """Fused: BN1(train) affine + conv3x3 + bias + ReLU + per-batch BN partial stats."""
    def kernel(x_ref, sc_ref, sh_ref, w_ref, b_ref, m_ref, y_ref, s_ref, ss_ref):
        xn = x_ref[0] * sc_ref[...] + sh_ref[...]        # BN1 apply on the VMEM tile
        acc = _conv3x3_acc([xn], [w_ref], m_ref, ow)
        y = jnp.maximum(acc + b_ref[...], 0.0)
        y_ref[0] = y
        s_ref[0] = jnp.sum(y, axis=1, keepdims=True)
        ss_ref[0] = jnp.sum(y * y, axis=1, keepdims=True)
    return kernel


def _bn_apply_kernel(x_ref, sc_ref, sh_ref, o_ref):
    o_ref[0] = x_ref[0] * sc_ref[...] + sh_ref[...]


# -----------------------------------------------------------------------------
# Wrappers
# -----------------------------------------------------------------------------
def _bilinear_upsample_2x(x_nchw):
    """nn.Upsample(scale_factor=2, mode='bilinear', align_corners=True) on NCHW input.
    Returns the result channels-first with flattened spatial axis: (N, C, OH*OW)."""
    n, c, h, w = x_nchw.shape
    oh, ow = 2 * h, 2 * w
    ah = jnp.asarray(_interp_matrix(h, oh))            # (OH, H)
    awt = jnp.asarray(_interp_matrix(w, ow).T)         # (W, OW)
    x = x_nchw.reshape(n * c, h, w).astype(jnp.float32)
    out = pl.pallas_call(
        _upsample_kernel,
        out_shape=jax.ShapeDtypeStruct((n * c, oh, ow), jnp.float32),
        grid=(n,),
        in_specs=[
            pl.BlockSpec((oh, h), lambda i: (0, 0)),
            pl.BlockSpec((w, ow), lambda i: (0, 0)),
            pl.BlockSpec((c, h, w), lambda i: (i, 0, 0)),
        ],
        out_specs=pl.BlockSpec((c, oh, ow), lambda i: (i, 0, 0)),
        compiler_params=pltpu.CompilerParams(dimension_semantics=("parallel",)),
    )(ah, awt, x)
    return out.reshape(n, c, oh * ow)


def _batch_stats_to_affine(s, ss, count, gamma, beta):
    """Training-mode BatchNorm scale/shift from per-batch partial (sum, sum^2).

    Uses E[x^2]-E[x]^2 in f32; the inputs are post-ReLU activations of moderate
    magnitude, so cancellation is not a concern at these scales."""
    c = s.shape[1]
    mean = jnp.sum(s, axis=0) / count                                   # (C, 1)
    var = jnp.maximum(jnp.sum(ss, axis=0) / count - mean * mean, 0.0)   # biased var
    scale = gamma.reshape(c, 1) * jax.lax.rsqrt(var + _EPS)
    shift = beta.reshape(c, 1) - mean * scale
    return scale, shift


def upsample_forward(params, x1_nchw, x2_nchw):
    """UpSample.forward: up(x1) -> cat([x1, x2], dim=1) -> DoubleConv (train-mode BN)."""
    n, c1, _, _ = x1_nchw.shape
    _, c2, oh, ow = x2_nchw.shape
    hw = oh * ow
    cin = c1 + c2
    cout = params["w1"].shape[0]                 # torch conv weights: (Cout, Cin, 3, 3)

    # ---- bilinear 2x upsample of x1 (separable matmuls) --------------------------
    xa = _bilinear_upsample_2x(x1_nchw)                      # (N, C1, HW)
    xb = x2_nchw.reshape(n, c2, hw).astype(jnp.float32)      # (N, C2, HW), free reshape

    masks = jnp.asarray(_conv_tap_masks(oh, ow))             # (9, HW) zero-pad masks
    stat_shape = jax.ShapeDtypeStruct((n, cout, 1), jnp.float32)

    # ---- conv1 (concat fused in-kernel) + bias + ReLU + BN1 partial stats --------
    # torch (Cout, Cin, 3, 3) -> tap-major (9, Cout, Cin), split at the concat boundary
    # so x1_up / x2 never have to be concatenated in HBM.
    w1t = jnp.transpose(params["w1"], (2, 3, 0, 1)).reshape(9, cout, cin)
    w1a, w1b = w1t[:, :, :c1], w1t[:, :, c1:]
    y1, s1, ss1 = pl.pallas_call(
        _make_conv1_kernel(ow),
        out_shape=(jax.ShapeDtypeStruct((n, cout, hw), jnp.float32), stat_shape, stat_shape),
        grid=(n,),
        in_specs=[
            pl.BlockSpec((1, c1, hw), lambda i: (i, 0, 0)),
            pl.BlockSpec((1, c2, hw), lambda i: (i, 0, 0)),
            pl.BlockSpec((9, cout, c1), lambda i: (0, 0, 0)),
            pl.BlockSpec((9, cout, c2), lambda i: (0, 0, 0)),
            pl.BlockSpec((cout, 1), lambda i: (0, 0)),
            pl.BlockSpec((9, hw), lambda i: (0, 0)),
        ],
        out_specs=(
            pl.BlockSpec((1, cout, hw), lambda i: (i, 0, 0)),
            pl.BlockSpec((1, cout, 1), lambda i: (i, 0, 0)),
            pl.BlockSpec((1, cout, 1), lambda i: (i, 0, 0)),
        ),
        compiler_params=pltpu.CompilerParams(dimension_semantics=("parallel",)),
    )(xa, xb, w1a, w1b, params["b1"].reshape(cout, 1), masks)

    # ---- BN1 (training-mode batch stats), folded into the conv2 kernel -----------
    scale1, shift1 = _batch_stats_to_affine(s1, ss1, n * hw, params["g1"], params["be1"])

    w2t = jnp.transpose(params["w2"], (2, 3, 0, 1)).reshape(9, cout, cout)
    y2, s2, ss2 = pl.pallas_call(
        _make_conv2_kernel(ow),
        out_shape=(jax.ShapeDtypeStruct((n, cout, hw), jnp.float32), stat_shape, stat_shape),
        grid=(n,),
        in_specs=[
            pl.BlockSpec((1, cout, hw), lambda i: (i, 0, 0)),
            pl.BlockSpec((cout, 1), lambda i: (0, 0)),
            pl.BlockSpec((cout, 1), lambda i: (0, 0)),
            pl.BlockSpec((9, cout, cout), lambda i: (0, 0, 0)),
            pl.BlockSpec((cout, 1), lambda i: (0, 0)),
            pl.BlockSpec((9, hw), lambda i: (0, 0)),
        ],
        out_specs=(
            pl.BlockSpec((1, cout, hw), lambda i: (i, 0, 0)),
            pl.BlockSpec((1, cout, 1), lambda i: (i, 0, 0)),
            pl.BlockSpec((1, cout, 1), lambda i: (i, 0, 0)),
        ),
        compiler_params=pltpu.CompilerParams(dimension_semantics=("parallel",)),
    )(y1, scale1, shift1, w2t, params["b2"].reshape(cout, 1), masks)

    # ---- BN2 apply: the only standalone memory pass, lane-dense (Cout, HW) tiles --
    scale2, shift2 = _batch_stats_to_affine(s2, ss2, n * hw, params["g2"], params["be2"])
    out = pl.pallas_call(
        _bn_apply_kernel,
        out_shape=jax.ShapeDtypeStruct((n, cout, hw), jnp.float32),
        grid=(n,),
        in_specs=[
            pl.BlockSpec((1, cout, hw), lambda i: (i, 0, 0)),
            pl.BlockSpec((cout, 1), lambda i: (0, 0)),
            pl.BlockSpec((cout, 1), lambda i: (0, 0)),
        ],
        out_specs=pl.BlockSpec((1, cout, hw), lambda i: (i, 0, 0)),
        compiler_params=pltpu.CompilerParams(dimension_semantics=("parallel",)),
    )(y2, scale2, shift2)

    return out.reshape(n, cout, oh, ow)                # already NCHW; reshape is free


if __name__ == "__main__":
    key = jax.random.PRNGKey(0)
    k1, k2, kw1, kw2 = jax.random.split(key, 4)

    # x1 = low-res feature map (gets upsampled 2x), x2 = skip connection.
    N, C1, H, W = 2, 4, 8, 8
    C2 = 4
    in_ch, out_ch = C1 + C2, 8

    x1 = jax.random.normal(k1, (N, C1, H, W), jnp.float32)
    x2 = jax.random.normal(k2, (N, C2, 2 * H, 2 * W), jnp.float32)

    # Deterministic synthetic parameters, PyTorch layouts (conv weight = (Cout,Cin,3,3)).
    params = dict(
        w1=0.1 * jax.random.normal(kw1, (out_ch, in_ch, 3, 3), jnp.float32),
        b1=0.01 * jnp.arange(out_ch, dtype=jnp.float32),
        g1=jnp.ones((out_ch,), jnp.float32),
        be1=jnp.zeros((out_ch,), jnp.float32),
        w2=0.1 * jax.random.normal(kw2, (out_ch, out_ch, 3, 3), jnp.float32),
        b2=0.01 * jnp.arange(out_ch, dtype=jnp.float32),
        g2=jnp.ones((out_ch,), jnp.float32),
        be2=jnp.zeros((out_ch,), jnp.float32),
    )

    out = jax.jit(upsample_forward)(params, x1, x2)
    jax.block_until_ready(out)
    assert out.shape == (N, out_ch, 2 * H, 2 * W)
    print("KERNEL_OK")
</pallas_src>

<mosaic_0001>
module attributes {stable_mosaic.version = 11 : i64} {
  func.func @_upsample_kernel(%arg0: i32, %arg1: memref<16x8xf32, #tpu.memory_space<vmem>>, %arg2: memref<8x16xf32, #tpu.memory_space<vmem>>, %arg3: memref<4x8x8xf32, #tpu.memory_space<vmem>>, %arg4: memref<4x16x16xf32, #tpu.memory_space<vmem>>) attributes {dimension_semantics = [#tpu.dimension_semantics<parallel>], iteration_bounds = array<i64: 2>, scalar_prefetch = 0 : i64, scratch_operands = 0 : i64, tpu.core_type = #tpu.core_type<tc>, window_params = [{pipeline_mode = #tpu.pipeline_mode<synchronous>, transform_indices = @transform_0, window_bounds = array<i64: 16, 8>}, {pipeline_mode = #tpu.pipeline_mode<synchronous>, transform_indices = @transform_1, window_bounds = array<i64: 8, 16>}, {transform_indices = @transform_2, window_bounds = array<i64: 4, 8, 8>}, {transform_indices = @transform_3, window_bounds = array<i64: 4, 16, 16>}]} {
    %c0 = arith.constant 0 : index
    %c0_0 = arith.constant 0 : index
    %0 = vector.load %arg1[%c0, %c0_0] : memref<16x8xf32, #tpu.memory_space<vmem>>, vector<16x8xf32>
    %c0_1 = arith.constant 0 : index
    %c0_2 = arith.constant 0 : index
    %c0_3 = arith.constant 0 : index
    %1 = vector.load %arg3[%c0_1, %c0_2, %c0_3] : memref<4x8x8xf32, #tpu.memory_space<vmem>>, vector<1x8x8xf32>
    %2 = vector.shape_cast %1 : vector<1x8x8xf32> to vector<8x8xf32>
    %cst = arith.constant dense<0.000000e+00> : vector<16x8xf32>
    %3 = tpu.matmul %0, %2, %cst {dimension_numbers = #tpu.dot_dimension_numbers<[1], [0], [0], [1], [0, 0, 1, 1], [], []>} : vector<16x8xf32>, vector<8x8xf32>, vector<16x8xf32> -> vector<16x8xf32>
    %c0_4 = arith.constant 0 : index
    %c0_5 = arith.constant 0 : index
    %4 = vector.load %arg2[%c0_4, %c0_5] : memref<8x16xf32, #tpu.memory_space<vmem>>, vector<8x16xf32>
    %cst_6 = arith.constant dense<0.000000e+00> : vector<16x16xf32>
    %5 = tpu.matmul %3, %4, %cst_6 {dimension_numbers = #tpu.dot_dimension_numbers<[1], [0], [0], [1], [0, 0, 1, 1], [], []>} : vector<16x8xf32>, vector<8x16xf32>, vector<16x16xf32> -> vector<16x16xf32>
    %c0_7 = arith.constant 0 : index
    %c0_8 = arith.constant 0 : index
    %c0_9 = arith.constant 0 : index
    %6 = vector.load %arg4[%c0_7, %c0_8, %c0_9] : memref<4x16x16xf32, #tpu.memory_space<vmem>>, vector<1x16x16xf32>
    %7 = vector.shape_cast %6 : vector<1x16x16xf32> to vector<16x16xf32>
    %8 = vector.shape_cast %5 : vector<16x16xf32> to vector<1x16x16xf32>
    tpu.vector_store %arg4[%c0_7, %c0_8, %c0_9], %8 {strides = array<i32>} : memref<4x16x16xf32, #tpu.memory_space<vmem>>, vector<1x16x16xf32>,
    %c0_10 = arith.constant 0 : index
    %c0_11 = arith.constant 0 : index
    %9 = vector.load %arg1[%c0_10, %c0_11] : memref<16x8xf32, #tpu.memory_space<vmem>>, vector<16x8xf32>
    %c1 = arith.constant 1 : index
    %c0_12 = arith.constant 0 : index
    %c0_13 = arith.constant 0 : index
    %10 = vector.load %arg3[%c1, %c0_12, %c0_13] : memref<4x8x8xf32, #tpu.memory_space<vmem>>, vector<1x8x8xf32>
    %11 = vector.shape_cast %10 : vector<1x8x8xf32> to vector<8x8xf32>
    %cst_14 = arith.constant dense<0.000000e+00> : vector<16x8xf32>
    %12 = tpu.matmul %9, %11, %cst_14 {dimension_numbers = #tpu.dot_dimension_numbers<[1], [0], [0], [1], [0, 0, 1, 1], [], []>} : vector<16x8xf32>, vector<8x8xf32>, vector<16x8xf32> -> vector<16x8xf32>
    %c0_15 = arith.constant 0 : index
    %c0_16 = arith.constant 0 : index
    %13 = vector.load %arg2[%c0_15, %c0_16] : memref<8x16xf32, #tpu.memory_space<vmem>>, vector<8x16xf32>
    %cst_17 = arith.constant dense<0.000000e+00> : vector<16x16xf32>
    %14 = tpu.matmul %12, %13, %cst_17 {dimension_numbers = #tpu.dot_dimension_numbers<[1], [0], [0], [1], [0, 0, 1, 1], [], []>} : vector<16x8xf32>, vector<8x16xf32>, vector<16x16xf32> -> vector<16x16xf32>
    %c1_18 = arith.constant 1 : index
    %c0_19 = arith.constant 0 : index
    %c0_20 = arith.constant 0 : index
    %15 = vector.load %arg4[%c1_18, %c0_19, %c0_20] : memref<4x16x16xf32, #tpu.memory_space<vmem>>, vector<1x16x16xf32>
    %16 = vector.shape_cast %15 : vector<1x16x16xf32> to vector<16x16xf32>
    %17 = vector.shape_cast %14 : vector<16x16xf32> to vector<1x16x16xf32>
    tpu.vector_store %arg4[%c1_18, %c0_19, %c0_20], %17 {strides = array<i32>} : memref<4x16x16xf32, #tpu.memory_space<vmem>>, vector<1x16x16xf32>,
    %c0_21 = arith.constant 0 : index
    %c0_22 = arith.constant 0 : index
    %18 = vector.load %arg1[%c0_21, %c0_22] : memref<16x8xf32, #tpu.memory_space<vmem>>, vector<16x8xf32>
    %c2 = arith.constant 2 : index
    %c0_23 = arith.constant 0 : index
    %c0_24 = arith.constant 0 : index
    %19 = vector.load %arg3[%c2, %c0_23, %c0_24] : memref<4x8x8xf32, #tpu.memory_space<vmem>>, vector<1x8x8xf32>
    %20 = vector.shape_cast %19 : vector<1x8x8xf32> to vector<8x8xf32>
    %cst_25 = arith.constant dense<0.000000e+00> : vector<16x8xf32>
    %21 = tpu.matmul %18, %20, %cst_25 {dimension_numbers = #tpu.dot_dimension_numbers<[1], [0], [0], [1], [0, 0, 1, 1], [], []>} : vector<16x8xf32>, vector<8x8xf32>, vector<16x8xf32> -> vector<16x8xf32>
    %c0_26 = arith.constant 0 : index
    %c0_27 = arith.constant 0 : index
    %22 = vector.load %arg2[%c0_26, %c0_27] : memref<8x16xf32, #tpu.memory_space<vmem>>, vector<8x16xf32>
    %cst_28 = arith.constant dense<0.000000e+00> : vector<16x16xf32>
    %23 = tpu.matmul %21, %22, %cst_28 {dimension_numbers = #tpu.dot_dimension_numbers<[1], [0], [0], [1], [0, 0, 1, 1], [], []>} : vector<16x8xf32>, vector<8x16xf32>, vector<16x16xf32> -> vector<16x16xf32>
    %c2_29 = arith.constant 2 : index
    %c0_30 = arith.constant 0 : index
    %c0_31 = arith.constant 0 : index
    %24 = vector.load %arg4[%c2_29, %c0_30, %c0_31] : memref<4x16x16xf32, #tpu.memory_space<vmem>>, vector<1x16x16xf32>
    %25 = vector.shape_cast %24 : vector<1x16x16xf32> to vector<16x16xf32>
    %26 = vector.shape_cast %23 : vector<16x16xf32> to vector<1x16x16xf32>
    tpu.vector_store %arg4[%c2_29, %c0_30, %c0_31], %26 {strides = array<i32>} : memref<4x16x16xf32, #tpu.memory_space<vmem>>, vector<1x16x16xf32>,
    %c0_32 = arith.constant 0 : index
    %c0_33 = arith.constant 0 : index
    %27 = vector.load %arg1[%c0_32, %c0_33] : memref<16x8xf32, #tpu.memory_space<vmem>>, vector<16x8xf32>
    %c3 = arith.constant 3 : index
    %c0_34 = arith.constant 0 : index
    %c0_35 = arith.constant 0 : index
    %28 = vector.load %arg3[%c3, %c0_34, %c0_35] : memref<4x8x8xf32, #tpu.memory_space<vmem>>, vector<1x8x8xf32>
    %29 = vector.shape_cast %28 : vector<1x8x8xf32> to vector<8x8xf32>
    %cst_36 = arith.constant dense<0.000000e+00> : vector<16x8xf32>
    %30 = tpu.matmul %27, %29, %cst_36 {dimension_numbers = #tpu.dot_dimension_numbers<[1], [0], [0], [1], [0, 0, 1, 1], [], []>} : vector<16x8xf32>, vector<8x8xf32>, vector<16x8xf32> -> vector<16x8xf32>
    %c0_37 = arith.constant 0 : index
    %c0_38 = arith.constant 0 : index
    %31 = vector.load %arg2[%c0_37, %c0_38] : memref<8x16xf32, #tpu.memory_space<vmem>>, vector<8x16xf32>
    %cst_39 = arith.constant dense<0.000000e+00> : vector<16x16xf32>
    %32 = tpu.matmul %30, %31, %cst_39 {dimension_numbers = #tpu.dot_dimension_numbers<[1], [0], [0], [1], [0, 0, 1, 1], [], []>} : vector<16x8xf32>, vector<8x16xf32>, vector<16x16xf32> -> vector<16x16xf32>
    %c3_40 = arith.constant 3 : index
    %c0_41 = arith.constant 0 : index
    %c0_42 = arith.constant 0 : index
    %33 = vector.load %arg4[%c3_40, %c0_41, %c0_42] : memref<4x16x16xf32, #tpu.memory_space<vmem>>, vector<1x16x16xf32>
    %34 = vector.shape_cast %33 : vector<1x16x16xf32> to vector<16x16xf32>
    %35 = vector.shape_cast %32 : vector<16x16xf32> to vector<1x16x16xf32>
    tpu.vector_store %arg4[%c3_40, %c0_41, %c0_42], %35 {strides = array<i32>} : memref<4x16x16xf32, #tpu.memory_space<vmem>>, vector<1x16x16xf32>,
    return
  }
  func.func @transform_0(%arg0: i32) -> (i32, i32) {
    %c0_i32 = arith.constant 0 : i32
    %c0_i32_0 = arith.constant 0 : i32
    %c0_i32_1 = arith.constant 0 : i32
    return %c0_i32, %c0_i32_0 : i32, i32
  }
  func.func @transform_1(%arg0: i32) -> (i32, i32) {
    %c0_i32 = arith.constant 0 : i32
    %c0_i32_0 = arith.constant 0 : i32
    %c0_i32_1 = arith.constant 0 : i32
    return %c0_i32, %c0_i32_0 : i32, i32
  }
  func.func @transform_2(%arg0: i32) -> (i32, i32, i32) {
    %c0_i32 = arith.constant 0 : i32
    %c0_i32_0 = arith.constant 0 : i32
    %c0_i32_1 = arith.constant 0 : i32
    return %arg0, %c0_i32, %c0_i32_0 : i32, i32, i32
  }
  func.func @transform_3(%arg0: i32) -> (i32, i32, i32) {
    %c0_i32 = arith.constant 0 : i32
    %c0_i32_0 = arith.constant 0 : i32
    %c0_i32_1 = arith.constant 0 : i32
    return %arg0, %c0_i32, %c0_i32_0 : i32, i32, i32
  }
}

module attributes {stable_mosaic.version = 11 : i64} {
  func.func @kernel(%arg0: i32, %arg1: memref<1x4x256xf32, #tpu.memory_space<vmem>>, %arg2: memref<1x4x256xf32, #tpu.memory_space<vmem>>, %arg3: memref<9x8x4xf32, #tpu.memory_space<vmem>>, %arg4: memref<9x8x4xf32, #tpu.memory_space<vmem>>, %arg5: memref<8x1xf32, #tpu.memory_space<vmem>>, %arg6: memref<9x256xf32, #tpu.memory_space<vmem>>, %arg7: memref<1x8x256xf32, #tpu.memory_space<vmem>>, %arg8: memref<1x8x1xf32, #tpu.memory_space<vmem>>, %arg9: memref<1x8x1xf32, #tpu.memory_space<vmem>>) attributes {dimension_semantics = [#tpu.dimension_semantics<parallel>], iteration_bounds = array<i64: 2>, scalar_prefetch = 0 : i64, scratch_operands = 0 : i64, tpu.core_type = #tpu.core_type<tc>, window_params = [{transform_indices = @transform_0, window_bounds = array<i64: 1, 4, 256>}, {transform_indices = @transform_1, window_bounds = array<i64: 1, 4, 256>}, {pipeline_mode = #tpu.pipeline_mode<synchronous>, transform_indices = @transform_2, window_bounds = array<i64: 9, 8, 4>}, {pipeline_mode = #tpu.pipeline_mode<synchronous>, transform_indices = @transform_3, window_bounds = array<i64: 9, 8, 4>}, {pipeline_mode = #tpu.pipeline_mode<synchronous>, transform_indices = @transform_4, window_bounds = array<i64: 8, 1>}, {pipeline_mode = #tpu.pipeline_mode<synchronous>, transform_indices = @transform_5, window_bounds = array<i64: 9, 256>}, {transform_indices = @transform_6, window_bounds = array<i64: 1, 8, 256>}, {transform_indices = @transform_7, window_bounds = array<i64: 1, 8, 1>}, {transform_indices = @transform_8, window_bounds = array<i64: 1, 8, 1>}]} {
    %c0 = arith.constant 0 : index
    %c0_0 = arith.constant 0 : index
    %c0_1 = arith.constant 0 : index
    %0 = vector.load %arg1[%c0, %c0_0, %c0_1] : memref<1x4x256xf32, #tpu.memory_space<vmem>>, vector<1x4x256xf32>
    %1 = vector.shape_cast %0 : vector<1x4x256xf32> to vector<4x256xf32>
    %c0_2 = arith.constant 0 : index
    %c0_3 = arith.constant 0 : index
    %c0_4 = arith.constant 0 : index
    %2 = vector.load %arg2[%c0_2, %c0_3, %c0_4] : memref<1x4x256xf32, #tpu.memory_space<vmem>>, vector<1x4x256xf32>
    %3 = vector.shape_cast %2 : vector<1x4x256xf32> to vector<4x256xf32>
    %cst = arith.constant 0.000000e+00 : f32
    %4 = vector.broadcast %cst : f32 to vector<8x256xf32>
    %c0_5 = arith.constant 0 : index
    %c0_6 = arith.constant 0 : index
    %5 = vector.load %arg6[%c0_5, %c0_6] : memref<9x256xf32, #tpu.memory_space<vmem>>, vector<1x256xf32>
    %c17_i32 = arith.constant 17 : i32
    %6 = tpu.dynamic_rotate %1 by %c17_i32 dim 1 : vector<4x256xf32>, i32 -> vector<4x256xf32>
    %c0_7 = arith.constant 0 : index
    %c0_8 = arith.constant 0 : index
    %c0_9 = arith.constant 0 : index
    %7 = vector.load %arg3[%c0_7, %c0_8, %c0_9] : memref<9x8x4xf32, #tpu.memory_space<vmem>>, vector<1x8x4xf32>
    %8 = vector.shape_cast %7 : vector<1x8x4xf32> to vector<8x4xf32>
    %9 = vector.broadcast %5 : vector<1x256xf32> to vector<4x256xf32>
    %10 = arith.mulf %6, %9 : vector<4x256xf32>
    %cst_10 = arith.constant dense<0.000000e+00> : vector<8x256xf32>
    %11 = tpu.matmul %8, %10, %cst_10 {dimension_numbers = #tpu.dot_dimension_numbers<[1], [0], [0], [1], [0, 0, 1, 1], [], []>} : vector<8x4xf32>, vector<4x256xf32>, vector<8x256xf32> -> vector<8x256xf32>
    %12 = arith.addf %4, %11 : vector<8x256xf32>
    %c17_i32_11 = arith.constant 17 : i32
    %13 = tpu.dynamic_rotate %3 by %c17_i32_11 dim 1 : vector<4x256xf32>, i32 -> vector<4x256xf32>
    %c0_12 = arith.constant 0 : index
    %c0_13 = arith.constant 0 : index
    %c0_14 = arith.constant 0 : index
    %14 = vector.load %arg4[%c0_12, %c0_13, %c0_14] : memref<9x8x4xf32, #tpu.memory_space<vmem>>, vector<1x8x4xf32>
    %15 = vector.shape_cast %14 : vector<1x8x4xf32> to vector<8x4xf32>
    %16 = vector.broadcast %5 : vector<1x256xf32> to vector<4x256xf32>
    %17 = arith.mulf %13, %16 : vector<4x256xf32>
    %cst_15 = arith.constant dense<0.000000e+00> : vector<8x256xf32>
    %18 = tpu.matmul %15, %17, %cst_15 {dimension_numbers = #tpu.dot_dimension_numbers<[1], [0], [0], [1], [0, 0, 1, 1], [], []>} : vector<8x4xf32>, vector<4x256xf32>, vector<8x256xf32> -> vector<8x256xf32>
    %19 = arith.addf %12, %18 : vector<8x256xf32>
    %c1 = arith.constant 1 : index
    %c0_16 = arith.constant 0 : index
    %20 = vector.load %arg6[%c1, %c0_16] : memref<9x256xf32, #tpu.memory_space<vmem>>, vector<1x256xf32>
    %c16_i32 = arith.constant 16 : i32
    %21 = tpu.dynamic_rotate %1 by %c16_i32 dim 1 : vector<4x256xf32>, i32 -> vector<4x256xf32>
    %c1_17 = arith.constant 1 : index
    %c0_18 = arith.constant 0 : index
    %c0_19 = arith.constant 0 : index
    %22 = vector.load %arg3[%c1_17, %c0_18, %c0_19] : memref<9x8x4xf32, #tpu.memory_space<vmem>>, vector<1x8x4xf32>
    %23 = vector.shape_cast %22 : vector<1x8x4xf32> to vector<8x4xf32>
    %24 = vector.broadcast %20 : vector<1x256xf32> to vector<4x256xf32>
    %25 = arith.mulf %21, %24 : vector<4x256xf32>
    %cst_20 = arith.constant dense<0.000000e+00> : vector<8x256xf32>
    %26 = tpu.matmul %23, %25, %cst_20 {dimension_numbers = #tpu.dot_dimension_numbers<[1], [0], [0], [1], [0, 0, 1, 1], [], []>} : vector<8x4xf32>, vector<4x256xf32>, vector<8x256xf32> -> vector<8x256xf32>
    %27 = arith.addf %19, %26 : vector<8x256xf32>
    %c16_i32_21 = arith.constant 16 : i32
    %28 = tpu.dynamic_rotate %3 by %c16_i32_21 dim 1 : vector<4x256xf32>, i32 -> vector<4x256xf32>
    %c1_22 = arith.constant 1 : index
    %c0_23 = arith.constant 0 : index
    %c0_24 = arith.constant 0 : index
    %29 = vector.load %arg4[%c1_22, %c0_23, %c0_24] : memref<9x8x4xf32, #tpu.memory_space<vmem>>, vector<1x8x4xf32>
    %30 = vector.shape_cast %29 : vector<1x8x4xf32> to vector<8x4xf32>
    %31 = vector.broadcast %20 : vector<1x256xf32> to vector<4x256xf32>
    %32 = arith.mulf %28, %31 : vector<4x256xf32>
    %cst_25 = arith.constant dense<0.000000e+00> : vector<8x256xf32>
    %33 = tpu.matmul %30, %32, %cst_25 {dimension_numbers = #tpu.dot_dimension_numbers<[1], [0], [0], [1], [0, 0, 1, 1], [], []>} : vector<8x4xf32>, vector<4x256xf32>, vector<8x256xf32> -> vector<8x256xf32>
    %34 = arith.addf %27, %33 : vector<8x256xf32>
    %c2 = arith.constant 2 : index
    %c0_26 = arith.constant 0 : index
    %35 = vector.load %arg6[%c2, %c0_26] : memref<9x256xf32, #tpu.memory_space<vmem>>, vector<1x256xf32>
    %c15_i32 = arith.constant 15 : i32
    %36 = tpu.dynamic_rotate %1 by %c15_i32 dim 1 : vector<4x256xf32>, i32 -> vector<4x256xf32>
    %c2_27 = arith.constant 2 : index
    %c0_28 = arith.constant 0 : index
    %c0_29 = arith.constant 0 : index
    %37 = vector.load %arg3[%c2_27, %c0_28, %c0_29] : memref<9x8x4xf32, #tpu.memory_space<vmem>>, vector<1x8x4xf32>
    %38 = vector.shape_cast %37 : vector<1x8x4xf32> to vector<8x4xf32>
    %39 = vector.broadcast %35 : vector<1x256xf32> to vector<4x256xf32>
    %40 = arith.mulf %36, %39 : vector<4x256xf32>
    %cst_30 = arith.constant dense<0.000000e+00> : vector<8x256xf32>
    %41 = tpu.matmul %38, %40, %cst_30 {dimension_numbers = #tpu.dot_dimension_numbers<[1], [0], [0], [1], [0, 0, 1, 1], [], []>} : vector<8x4xf32>, vector<4x256xf32>, vector<8x256xf32> -> vector<8x256xf32>
    %42 = arith.addf %34, %41 : vector<8x256xf32>
    %c15_i32_31 = arith.constant 15 : i32
    %43 = tpu.dynamic_rotate %3 by %c15_i32_31 dim 1 : vector<4x256xf32>, i32 -> vector<4x256xf32>
    %c2_32 = arith.constant 2 : index
    %c0_33 = arith.constant 0 : index
    %c0_34 = arith.constant 0 : index
    %44 = vector.load %arg4[%c2_32, %c0_33, %c0_34] : memref<9x8x4xf32, #tpu.memory_space<vmem>>, vector<1x8x4xf32>
    %45 = vector.shape_cast %44 : vector<1x8x4xf32> to vector<8x4xf32>
    %46 = vector.broadcast %35 : vector<1x256xf32> to vector<4x256xf32>
    %47 = arith.mulf %43, %46 : vector<4x256xf32>
    %cst_35 = arith.constant dense<0.000000e+00> : vector<8x256xf32>
    %48 = tpu.matmul %45, %47, %cst_35 {dimension_numbers = #tpu.dot_dimension_numbers<[1], [0], [0], [1], [0, 0, 1, 1], [], []>} : vector<8x4xf32>, vector<4x256xf32>, vector<8x256xf32> -> vector<8x256xf32>
    %49 = arith.addf %42, %48 : vector<8x256xf32>
    %c3 = arith.constant 3 : index
    %c0_36 = arith.constant 0 : index
    %50 = vector.load %arg6[%c3, %c0_36] : memref<9x256xf32, #tpu.memory_space<vmem>>, vector<1x256xf32>
    %c1_i32 = arith.constant 1 : i32
    %51 = tpu.dynamic_rotate %1 by %c1_i32 dim 1 : vector<4x256xf32>, i32 -> vector<4x256xf32>
    %c3_37 = arith.constant 3 : index
    %c0_38 = arith.constant 0 : index
    %c0_39 = arith.constant 0 : index
    %52 = vector.load %arg3[%c3_37, %c0_38, %c0_39] : memref<9x8x4xf32, #tpu.memory_space<vmem>>, vector<1x8x4xf32>
    %53 = vector.shape_cast %52 : vector<1x8x4xf32> to vector<8x4xf32>
    %54 = vector.broadcast %50 : vector<1x256xf32> to vector<4x256xf32>
    %55 = arith.mulf %51, %54 : vector<4x256xf32>
    %cst_40 = arith.constant dense<0.000000e+00> : vector<8x256xf32>
    %56 = tpu.matmul %53, %55, %cst_40 {dimension_numbers = #tpu.dot_dimension_numbers<[1], [0], [0], [1], [0, 0, 1, 1], [], []>} : vector<8x4xf32>, vector<4x256xf32>, vector<8x256xf32> -> vector<8x256xf32>
    %57 = arith.addf %49, %56 : vector<8x256xf32>
    %c1_i32_41 = arith.constant 1 : i32
    %58 = tpu.dynamic_rotate %3 by %c1_i32_41 dim 1 : vector<4x256xf32>, i32 -> vector<4x256xf32>
    %c3_42 = arith.constant 3 : index
    %c0_43 = arith.constant 0 : index
    %c0_44 = arith.constant 0 : index
    %59 = vector.load %arg4[%c3_42, %c0_43, %c0_44] : memref<9x8x4xf32, #tpu.memory_space<vmem>>, vector<1x8x4xf32>
    %60 = vector.shape_cast %59 : vector<1x8x4xf32> to vector<8x4xf32>
    %61 = vector.broadcast %50 : vector<1x256xf32> to vector<4x256xf32>
    %62 = arith.mulf %58, %61 : vector<4x256xf32>
    %cst_45 = arith.constant dense<0.000000e+00> : vector<8x256xf32>
    %63 = tpu.matmul %60, %62, %cst_45 {dimension_numbers = #tpu.dot_dimension_numbers<[1], [0], [0], [1], [0, 0, 1, 1], [], []>} : vector<8x4xf32>, vector<4x256xf32>, vector<8x256xf32> -> vector<8x256xf32>
    %64 = arith.addf %57, %63 : vector<8x256xf32>
    %c4 = arith.constant 4 : index
    %c0_46 = arith.constant 0 : index
    %65 = vector.load %arg6[%c4, %c0_46] : memref<9x256xf32, #tpu.memory_space<vmem>>, vector<1x256xf32>
    %c4_47 = arith.constant 4 : index
    %c0_48 = arith.constant 0 : index
    %c0_49 = arith.constant 0 : index
    %66 = vector.load %arg3[%c4_47, %c0_48, %c0_49] : memref<9x8x4xf32, #tpu.memory_space<vmem>>, vector<1x8x4xf32>
    %67 = vector.shape_cast %66 : vector<1x8x4xf32> to vector<8x4xf32>
    %68 = vector.broadcast %65 : vector<1x256xf32> to vector<4x256xf32>
    %69 = arith.mulf %1, %68 : vector<4x256xf32>
    %cst_50 = arith.constant dense<0.000000e+00> : vector<8x256xf32>
    %70 = tpu.matmul %67, %69, %cst_50 {dimension_numbers = #tpu.dot_dimension_numbers<[1], [0], [0], [1], [0, 0, 1, 1], [], []>} : vector<8x4xf32>, vector<4x256xf32>, vector<8x256xf32> -> vector<8x256xf32>
    %71 = arith.addf %64, %70 : vector<8x256xf32>
    %c4_51 = arith.constant 4 : index
    %c0_52 = arith.constant 0 : index
    %c0_53 = arith.constant 0 : index
    %72 = vector.load %arg4[%c4_51, %c0_52, %c0_53] : memref<9x8x4xf32, #tpu.memory_space<vmem>>, vector<1x8x4xf32>
    %73 = vector.shape_cast %72 : vector<1x8x4xf32> to vector<8x4xf32>
    %74 = vector.broadcast %65 : vector<1x256xf32> to vector<4x256xf32>
    %75 = arith.mulf %3, %74 : vector<4x256xf32>
    %cst_54 = arith.constant dense<0.000000e+00> : vector<8x256xf32>
    %76 = tpu.matmul %73, %75, %cst_54 {dimension_numbers = #tpu.dot_dimension_numbers<[1], [0], [0], [1], [0, 0, 1, 1], [], []>} : vector<8x4xf32>, vector<4x256xf32>, vector<8x256xf32> -> vector<8x256xf32>
    %77 = arith.addf %71, %76 : vector<8x256xf32>
    %c5 = arith.constant 5 : index
    %c0_55 = arith.constant 0 : index
    %78 = vector.load %arg6[%c5, %c0_55] : memref<9x256xf32, #tpu.memory_space<vmem>>, vector<1x256xf32>
    %c255_i32 = arith.constant 255 : i32
    %79 = tpu.dynamic_rotate %1 by %c255_i32 dim 1 : vector<4x256xf32>, i32 -> vector<4x256xf32>
    %c5_56 = arith.constant 5 : index
    %c0_57 = arith.constant 0 : index
    %c0_58 = arith.constant 0 : index
    %80 = vector.load %arg3[%c5_56, %c0_57, %c0_58] : memref<9x8x4xf32, #tpu.memory_space<vmem>>, vector<1x8x4xf32>
    %81 = vector.shape_cast %80 : vector<1x8x4xf32> to vector<8x4xf32>
    %82 = vector.broadcast %78 : vector<1x256xf32> to vector<4x256xf32>
    %83 = arith.mulf %79, %82 : vector<4x256xf32>
    %cst_59 = arith.constant dense<0.000000e+00> : vector<8x256xf32>
    %84 = tpu.matmul %81, %83, %cst_59 {dimension_numbers = #tpu.dot_dimension_numbers<[1], [0], [0], [1], [0, 0, 1, 1], [], []>} : vector<8x4xf32>, vector<4x256xf32>, vector<8x256xf32> -> vector<8x256xf32>
    %85 = arith.addf %77, %84 : vector<8x256xf32>
    %c255_i32_60 = arith.constant 255 : i32
    %86 = tpu.dynamic_rotate %3 by %c255_i32_60 dim 1 : vector<4x256xf32>, i32 -> vector<4x256xf32>
    %c5_61 = arith.constant 5 : index
    %c0_62 = arith.constant 0 : index
    %c0_63 = arith.constant 0 : index
    %87 = vector.load %arg4[%c5_61, %c0_62, %c0_63] : memref<9x8x4xf32, #tpu.memory_space<vmem>>, vector<1x8x4xf32>
    %88 = vector.shape_cast %87 : vector<1x8x4xf32> to vector<8x4xf32>
    %89 = vector.broadcast %78 : vector<1x256xf32> to vector<4x256xf32>
    %90 = arith.mulf %86, %89 : vector<4x256xf32>
    %cst_64 = arith.constant dense<0.000000e+00> : vector<8x256xf32>
    %91 = tpu.matmul %88, %90, %cst_64 {dimension_numbers = #tpu.dot_dimension_numbers<[1], [0], [0], [1], [0, 0, 1, 1], [], []>} : vector<8x4xf32>, vector<4x256xf32>, vector<8x256xf32> -> vector<8x256xf32>
    %92 = arith.addf %85, %91 : vector<8x256xf32>
    %c6 = arith.constant 6 : index
    %c0_65 = arith.constant 0 : index
    %93 = vector.load %arg6[%c6, %c0_65] : memref<9x256xf32, #tpu.memory_space<vmem>>, vector<1x256xf32>
    %c241_i32 = arith.constant 241 : i32
    %94 = tpu.dynamic_rotate %1 by %c241_i32 dim 1 : vector<4x256xf32>, i32 -> vector<4x256xf32>
    %c6_66 = arith.constant 6 : index
    %c0_67 = arith.constant 0 : index
    %c0_68 = arith.constant 0 : index
    %95 = vector.load %arg3[%c6_66, %c0_67, %c0_68] : memref<9x8x4xf32, #tpu.memory_space<vmem>>, vector<1x8x4xf32>
    %96 = vector.shape_cast %95 : vector<1x8x4xf32> to vector<8x4xf32>
    %97 = vector.broadcast %93 : vector<1x256xf32> to vector<4x256xf32>
    %98 = arith.mulf %94, %97 : vector<4x256xf32>
    %cst_69 = arith.constant dense<0.000000e+00> : vector<8x256xf32>
    %99 = tpu.matmul %96, %98, %cst_69 {dimension_numbers = #tpu.dot_dimension_numbers<[1], [0], [0], [1], [0, 0, 1, 1], [], []>} : vector<8x4xf32>, vector<4x256xf32>, vector<8x256xf32> -> vector<8x256xf32>
    %100 = arith.addf %92, %99 : vector<8x256xf32>
    %c241_i32_70 = arith.constant 241 : i32
    %101 = tpu.dynamic_rotate %3 by %c241_i32_70 dim 1 : vector<4x256xf32>, i32 -> vector<4x256xf32>
    %c6_71 = arith.constant 6 : index
    %c0_72 = arith.constant 0 : index
    %c0_73 = arith.constant 0 : index
    %102 = vector.load %arg4[%c6_71, %c0_72, %c0_73] : memref<9x8x4xf32, #tpu.memory_space<vmem>>, vector<1x8x4xf32>
    %103 = vector.shape_cast %102 : vector<1x8x4xf32> to vector<8x4xf32>
    %104 = vector.broadcast %93 : vector<1x256xf32> to vector<4x256xf32>
    %105 = arith.mulf %101, %104 : vector<4x256xf32>
    %cst_74 = arith.constant dense<0.000000e+00> : vector<8x256xf32>
    %106 = tpu.matmul %103, %105, %cst_74 {dimension_numbers = #tpu.dot_dimension_numbers<[1], [0], [0], [1], [0, 0, 1, 1], [], []>} : vector<8x4xf32>, vector<4x256xf32>, vector<8x256xf32> -> vector<8x256xf32>
    %107 = arith.addf %100, %106 : vector<8x256xf32>
    %c7 = arith.constant 7 : index
    %c0_75 = arith.constant 0 : index
    %108 = vector.load %arg6[%c7, %c0_75] : memref<9x256xf32, #tpu.memory_space<vmem>>, vector<1x256xf32>
    %c240_i32 = arith.constant 240 : i32
    %109 = tpu.dynamic_rotate %1 by %c240_i32 dim 1 : vector<4x256xf32>, i32 -> vector<4x256xf32>
    %c7_76 = arith.constant 7 : index
    %c0_77 = arith.constant 0 : index
    %c0_78 = arith.constant 0 : index
    %110 = vector.load %arg3[%c7_76, %c0_77, %c0_78] : memref<9x8x4xf32, #tpu.memory_space<vmem>>, vector<1x8x4xf32>
    %111 = vector.shape_cast %110 : vector<1x8x4xf32> to vector<8x4xf32>
    %112 = vector.broadcast %108 : vector<1x256xf32> to vector<4x256xf32>
    %113 = arith.mulf %109, %112 : vector<4x256xf32>
    %cst_79 = arith.constant dense<0.000000e+00> : vector<8x256xf32>
    %114 = tpu.matmul %111, %113, %cst_79 {dimension_numbers = #tpu.dot_dimension_numbers<[1], [0], [0], [1], [0, 0, 1, 1], [], []>} : vector<8x4xf32>, vector<4x256xf32>, vector<8x256xf32> -> vector<8x256xf32>
    %115 = arith.addf %107, %114 : vector<8x256xf32>
    %c240_i32_80 = arith.constant 240 : i32
    %116 = tpu.dynamic_rotate %3 by %c240_i32_80 dim 1 : vector<4x256xf32>, i32 -> vector<4x256xf32>
    %c7_81 = arith.constant 7 : index
    %c0_82 = arith.constant 0 : index
    %c0_83 = arith.constant 0 : index
    %117 = vector.load %arg4[%c7_81, %c0_82, %c0_83] : memref<9x8x4xf32, #tpu.memory_space<vmem>>, vector<1x8x4xf32>
    %118 = vector.shape_cast %117 : vector<1x8x4xf32> to vector<8x4xf32>
    %119 = vector.broadcast %108 : vector<1x256xf32> to vector<4x256xf32>
    %120 = arith.mulf %116, %119 : vector<4x256xf32>
    %cst_84 = arith.constant dense<0.000000e+00> : vector<8x256xf32>
    %121 = tpu.matmul %118, %120, %cst_84 {dimension_numbers = #tpu.dot_dimension_numbers<[1], [0], [0], [1], [0, 0, 1, 1], [], []>} : vector<8x4xf32>, vector<4x256xf32>, vector<8x256xf32> -> vector<8x256xf32>
    %122 = arith.addf %115, %121 : vector<8x256xf32>
    %c8 = arith.constant 8 : index
    %c0_85 = arith.constant 0 : index
    %123 = vector.load %arg6[%c8, %c0_85] : memref<9x256xf32, #tpu.memory_space<vmem>>, vector<1x256xf32>
    %c239_i32 = arith.constant 239 : i32
    %124 = tpu.dynamic_rotate %1 by %c239_i32 dim 1 : vector<4x256xf32>, i32 -> vector<4x256xf32>
    %c8_86 = arith.constant 8 : index
    %c0_87 = arith.constant 0 : index
    %c0_88 = arith.constant 0 : index
    %125 = vector.load %arg3[%c8_86, %c0_87, %c0_88] : memref<9x8x4xf32, #tpu.memory_space<vmem>>, vector<1x8x4xf32>
    %126 = vector.shape_cast %125 : vector<1x8x4xf32> to vector<8x4xf32>
    %127 = vector.broadcast %123 : vector<1x256xf32> to vector<4x256xf32>
    %128 = arith.mulf %124, %127 : vector<4x256xf32>
    %cst_89 = arith.constant dense<0.000000e+00> : vector<8x256xf32>
    %129 = tpu.matmul %126, %128, %cst_89 {dimension_numbers = #tpu.dot_dimension_numbers<[1], [0], [0], [1], [0, 0, 1, 1], [], []>} : vector<8x4xf32>, vector<4x256xf32>, vector<8x256xf32> -> vector<8x256xf32>
    %130 = arith.addf %122, %129 : vector<8x256xf32>
    %c239_i32_90 = arith.constant 239 : i32
    %131 = tpu.dynamic_rotate %3 by %c239_i32_90 dim 1 : vector<4x256xf32>, i32 -> vector<4x256xf32>
    %c8_91 = arith.constant 8 : index
    %c0_92 = arith.constant 0 : index
    %c0_93 = arith.constant 0 : index
    %132 = vector.load %arg4[%c8_91, %c0_92, %c0_93] : memref<9x8x4xf32, #tpu.memory_space<vmem>>, vector<1x8x4xf32>
    %133 = vector.shape_cast %132 : vector<1x8x4xf32> to vector<8x4xf32>
    %134 = vector.broadcast %123 : vector<1x256xf32> to vector<4x256xf32>
    %135 = arith.mulf %131, %134 : vector<4x256xf32>
    %cst_94 = arith.constant dense<0.000000e+00> : vector<8x256xf32>
    %136 = tpu.matmul %133, %135, %cst_94 {dimension_numbers = #tpu.dot_dimension_numbers<[1], [0], [0], [1], [0, 0, 1, 1], [], []>} : vector<8x4xf32>, vector<4x256xf32>, vector<8x256xf32> -> vector<8x256xf32>
    %137 = arith.addf %130, %136 : vector<8x256xf32>
    %c0_95 = arith.constant 0 : index
    %c0_96 = arith.constant 0 : index
    %138 = vector.load %arg5[%c0_95, %c0_96] : memref<8x1xf32, #tpu.memory_space<vmem>>, vector<8x1xf32>
    %139 = vector.broadcast %138 : vector<8x1xf32> to vector<8x256xf32>
    %140 = arith.addf %137, %139 : vector<8x256xf32>
    %cst_97 = arith.constant 0.000000e+00 : f32
    %141 = vector.broadcast %cst_97 : f32 to vector<8x256xf32>
    %142 = arith.maximumf %140, %141 : vector<8x256xf32>
    %c0_98 = arith.constant 0 : index
    %c0_99 = arith.constant 0 : index
    %c0_100 = arith.constant 0 : index
    %143 = vector.load %arg7[%c0_98, %c0_99, %c0_100] : memref<1x8x256xf32, #tpu.memory_space<vmem>>, vector<1x8x256xf32>
    %144 = vector.shape_cast %143 : vector<1x8x256xf32> to vector<8x256xf32>
    %145 = vector.shape_cast %142 : vector<8x256xf32> to vector<1x8x256xf32>
    tpu.vector_store %arg7[%c0_98, %c0_99, %c0_100], %145 {strides = array<i32>} : memref<1x8x256xf32, #tpu.memory_space<vmem>>, vector<1x8x256xf32>,
    %cst_101 = arith.constant dense<0.000000e+00> : vector<8xf32>
    %146 = vector.multi_reduction <add>, %142, %cst_101 [1] : vector<8x256xf32> to vector<8xf32>
    %147 = vector.shape_cast %146 : vector<8xf32> to vector<8x1xf32>
    %c0_102 = arith.constant 0 : index
    %c0_103 = arith.constant 0 : index
    %c0_104 = arith.constant 0 : index
    %148 = vector.load %arg8[%c0_102, %c0_103, %c0_104] : memref<1x8x1xf32, #tpu.memory_space<vmem>>, vector<1x8x1xf32>
    %149 = vector.shape_cast %148 : vector<1x8x1xf32> to vector<8x1xf32>
    %150 = vector.shape_cast %147 : vector<8x1xf32> to vector<1x8x1xf32>
    tpu.vector_store %arg8[%c0_102, %c0_103, %c0_104], %150 {strides = array<i32>} : memref<1x8x1xf32, #tpu.memory_space<vmem>>, vector<1x8x1xf32>,
    %151 = arith.mulf %142, %142 : vector<8x256xf32>
    %cst_105 = arith.constant dense<0.000000e+00> : vector<8xf32>
    %152 = vector.multi_reduction <add>, %151, %cst_105 [1] : vector<8x256xf32> to vector<8xf32>
    %153 = vector.shape_cast %152 : vector<8xf32> to vector<8x1xf32>
    %c0_106 = arith.constant 0 : index
    %c0_107 = arith.constant 0 : index
    %c0_108 = arith.constant 0 : index
    %154 = vector.load %arg9[%c0_106, %c0_107, %c0_108] : memref<1x8x1xf32, #tpu.memory_space<vmem>>, vector<1x8x1xf32>
    %155 = vector.shape_cast %154 : vector<1x8x1xf32> to vector<8x1xf32>
    %156 = vector.shape_cast %153 : vector<8x1xf32> to vector<1x8x1xf32>
    tpu.vector_store %arg9[%c0_106, %c0_107, %c0_108], %156 {strides = array<i32>} : memref<1x8x1xf32, #tpu.memory_space<vmem>>, vector<1x8x1xf32>,
    return
  }
  func.func @transform_0(%arg0: i32) -> (i32, i32, i32) {
    %c0_i32 = arith.constant 0 : i32
    %c0_i32_0 = arith.constant 0 : i32
    %c0_i32_1 = arith.constant 0 : i32
    return %arg0, %c0_i32, %c0_i32_0 : i32, i32, i32
  }
  func.func @transform_1(%arg0: i32) -> (i32, i32, i32) {
    %c0_i32 = arith.constant 0 : i32
    %c0_i32_0 = arith.constant 0 : i32
    %c0_i32_1 = arith.constant 0 : i32
    return %arg0, %c0_i32, %c0_i32_0 : i32, i32, i32
  }
  func.func @transform_2(%arg0: i32) -> (i32, i32, i32) {
    %c0_i32 = arith.constant 0 : i32
    %c0_i32_0 = arith.constant 0 : i32
    %c0_i32_1 = arith.constant 0 : i32
    %c0_i32_2 = arith.constant 0 : i32
    return %c0_i32, %c0_i32_0, %c0_i32_1 : i32, i32, i32
  }
  func.func @transform_3(%arg0: i32) -> (i32, i32, i32) {
    %c0_i32 = arith.constant 0 : i32
    %c0_i32_0 = arith.constant 0 : i32
    %c0_i32_1 = arith.constant 0 : i32
    %c0_i32_2 = arith.constant 0 : i32
    return %c0_i32, %c0_i32_0, %c0_i32_1 : i32, i32, i32
  }
  func.func @transform_4(%arg0: i32) -> (i32, i32) {
    %c0_i32 = arith.constant 0 : i32
    %c0_i32_0 = arith.constant 0 : i32
    %c0_i32_1 = arith.constant 0 : i32
    return %c0_i32, %c0_i32_0 : i32, i32
  }
  func.func @transform_5(%arg0: i32) -> (i32, i32) {
    %c0_i32 = arith.constant 0 : i32
    %c0_i32_0 = arith.constant 0 : i32
    %c0_i32_1 = arith.constant 0 : i32
    return %c0_i32, %c0_i32_0 : i32, i32
  }
  func.func @transform_6(%arg0: i32) -> (i32, i32, i32) {
    %c0_i32 = arith.constant 0 : i32
    %c0_i32_0 = arith.constant 0 : i32
    %c0_i32_1 = arith.constant 0 : i32
    return %arg0, %c0_i32, %c0_i32_0 : i32, i32, i32
  }
  func.func @transform_7(%arg0: i32) -> (i32, i32, i32) {
    %c0_i32 = arith.constant 0 : i32
    %c0_i32_0 = arith.constant 0 : i32
    %c0_i32_1 = arith.constant 0 : i32
    return %arg0, %c0_i32, %c0_i32_0 : i32, i32, i32
  }
  func.func @transform_8(%arg0: i32) -> (i32, i32, i32) {
    %c0_i32 = arith.constant 0 : i32
    %c0_i32_0 = arith.constant 0 : i32
    %c0_i32_1 = arith.constant 0 : i32
    return %arg0, %c0_i32, %c0_i32_0 : i32, i32, i32
  }
}

module attributes {stable_mosaic.version = 11 : i64} {
  func.func @_bn_apply_kernel(%arg0: i32, %arg1: memref<1x8x256xf32, #tpu.memory_space<vmem>>, %arg2: memref<8x1xf32, #tpu.memory_space<vmem>>, %arg3: memref<8x1xf32, #tpu.memory_space<vmem>>, %arg4: memref<1x8x256xf32, #tpu.memory_space<vmem>>) attributes {dimension_semantics = [#tpu.dimension_semantics<parallel>], iteration_bounds = array<i64: 2>, scalar_prefetch = 0 : i64, scratch_operands = 0 : i64, tpu.core_type = #tpu.core_type<tc>, window_params = [{transform_indices = @transform_0, window_bounds = array<i64: 1, 8, 256>}, {pipeline_mode = #tpu.pipeline_mode<synchronous>, transform_indices = @transform_1, window_bounds = array<i64: 8, 1>}, {pipeline_mode = #tpu.pipeline_mode<synchronous>, transform_indices = @transform_2, window_bounds = array<i64: 8, 1>}, {transform_indices = @transform_3, window_bounds = array<i64: 1, 8, 256>}]} {
    %c0 = arith.constant 0 : index
    %c0_0 = arith.constant 0 : index
    %c0_1 = arith.constant 0 : index
    %0 = vector.load %arg1[%c0, %c0_0, %c0_1] : memref<1x8x256xf32, #tpu.memory_space<vmem>>, vector<1x8x256xf32>
    %1 = vector.shape_cast %0 : vector<1x8x256xf32> to vector<8x256xf32>
    %c0_2 = arith.constant 0 : index
    %c0_3 = arith.constant 0 : index
    %2 = vector.load %arg2[%c0_2, %c0_3] : memref<8x1xf32, #tpu.memory_space<vmem>>, vector<8x1xf32>
    %3 = vector.broadcast %2 : vector<8x1xf32> to vector<8x256xf32>
    %4 = arith.mulf %1, %3 : vector<8x256xf32>
    %c0_4 = arith.constant 0 : index
    %c0_5 = arith.constant 0 : index
    %5 = vector.load %arg3[%c0_4, %c0_5] : memref<8x1xf32, #tpu.memory_space<vmem>>, vector<8x1xf32>
    %6 = vector.broadcast %5 : vector<8x1xf32> to vector<8x256xf32>
    %7 = arith.addf %4, %6 : vector<8x256xf32>
    %c0_6 = arith.constant 0 : index
    %c0_7 = arith.constant 0 : index
    %c0_8 = arith.constant 0 : index
    %8 = vector.load %arg4[%c0_6, %c0_7, %c0_8] : memref<1x8x256xf32, #tpu.memory_space<vmem>>, vector<1x8x256xf32>
    %9 = vector.shape_cast %8 : vector<1x8x256xf32> to vector<8x256xf32>
    %10 = vector.shape_cast %7 : vector<8x256xf32> to vector<1x8x256xf32>
    tpu.vector_store %arg4[%c0_6, %c0_7, %c0_8], %10 {strides = array<i32>} : memref<1x8x256xf32, #tpu.memory_space<vmem>>, vector<1x8x256xf32>,
    return
  }
  func.func @transform_0(%arg0: i32) -> (i32, i32, i32) {
    %c0_i32 = arith.constant 0 : i32
    %c0_i32_0 = arith.constant 0 : i32
    %c0_i32_1 = arith.constant 0 : i32
    return %arg0, %c0_i32, %c0_i32_0 : i32, i32, i32
  }
  func.func @transform_1(%arg0: i32) -> (i32, i32) {
    %c0_i32 = arith.constant 0 : i32
    %c0_i32_0 = arith.constant 0 : i32
    %c0_i32_1 = arith.constant 0 : i32
    return %c0_i32, %c0_i32_0 : i32, i32
  }
  func.func @transform_2(%arg0: i32) -> (i32, i32) {
    %c0_i32 = arith.constant 0 : i32
    %c0_i32_0 = arith.constant 0 : i32
    %c0_i32_1 = arith.constant 0 : i32
    return %c0_i32, %c0_i32_0 : i32, i32
  }
  func.func @transform_3(%arg0: i32) -> (i32, i32, i32) {
    %c0_i32 = arith.constant 0 : i32
    %c0_i32_0 = arith.constant 0 : i32
    %c0_i32_1 = arith.constant 0 : i32
    return %arg0, %c0_i32, %c0_i32_0 : i32, i32, i32
  }
}

module attributes {stable_mosaic.version = 11 : i64} {
  func.func @kernel(%arg0: i32, %arg1: memref<1x8x256xf32, #tpu.memory_space<vmem>>, %arg2: memref<8x1xf32, #tpu.memory_space<vmem>>, %arg3: memref<8x1xf32, #tpu.memory_space<vmem>>, %arg4: memref<9x8x8xf32, #tpu.memory_space<vmem>>, %arg5: memref<8x1xf32, #tpu.memory_space<vmem>>, %arg6: memref<9x256xf32, #tpu.memory_space<vmem>>, %arg7: memref<1x8x256xf32, #tpu.memory_space<vmem>>, %arg8: memref<1x8x1xf32, #tpu.memory_space<vmem>>, %arg9: memref<1x8x1xf32, #tpu.memory_space<vmem>>) attributes {dimension_semantics = [#tpu.dimension_semantics<parallel>], iteration_bounds = array<i64: 2>, scalar_prefetch = 0 : i64, scratch_operands = 0 : i64, tpu.core_type = #tpu.core_type<tc>, window_params = [{transform_indices = @transform_0, window_bounds = array<i64: 1, 8, 256>}, {pipeline_mode = #tpu.pipeline_mode<synchronous>, transform_indices = @transform_1, window_bounds = array<i64: 8, 1>}, {pipeline_mode = #tpu.pipeline_mode<synchronous>, transform_indices = @transform_2, window_bounds = array<i64: 8, 1>}, {pipeline_mode = #tpu.pipeline_mode<synchronous>, transform_indices = @transform_3, window_bounds = array<i64: 9, 8, 8>}, {pipeline_mode = #tpu.pipeline_mode<synchronous>, transform_indices = @transform_4, window_bounds = array<i64: 8, 1>}, {pipeline_mode = #tpu.pipeline_mode<synchronous>, transform_indices = @transform_5, window_bounds = array<i64: 9, 256>}, {transform_indices = @transform_6, window_bounds = array<i64: 1, 8, 256>}, {transform_indices = @transform_7, window_bounds = array<i64: 1, 8, 1>}, {transform_indices = @transform_8, window_bounds = array<i64: 1, 8, 1>}]} {
    %c0 = arith.constant 0 : index
    %c0_0 = arith.constant 0 : index
    %c0_1 = arith.constant 0 : index
    %0 = vector.load %arg1[%c0, %c0_0, %c0_1] : memref<1x8x256xf32, #tpu.memory_space<vmem>>, vector<1x8x256xf32>
    %1 = vector.shape_cast %0 : vector<1x8x256xf32> to vector<8x256xf32>
    %c0_2 = arith.constant 0 : index
    %c0_3 = arith.constant 0 : index
    %2 = vector.load %arg2[%c0_2, %c0_3] : memref<8x1xf32, #tpu.memory_space<vmem>>, vector<8x1xf32>
    %3 = vector.broadcast %2 : vector<8x1xf32> to vector<8x256xf32>
    %4 = arith.mulf %1, %3 : vector<8x256xf32>
    %c0_4 = arith.constant 0 : index
    %c0_5 = arith.constant 0 : index
    %5 = vector.load %arg3[%c0_4, %c0_5] : memref<8x1xf32, #tpu.memory_space<vmem>>, vector<8x1xf32>
    %6 = vector.broadcast %5 : vector<8x1xf32> to vector<8x256xf32>
    %7 = arith.addf %4, %6 : vector<8x256xf32>
    %cst = arith.constant 0.000000e+00 : f32
    %8 = vector.broadcast %cst : f32 to vector<8x256xf32>
    %c0_6 = arith.constant 0 : index
    %c0_7 = arith.constant 0 : index
    %9 = vector.load %arg6[%c0_6, %c0_7] : memref<9x256xf32, #tpu.memory_space<vmem>>, vector<1x256xf32>
    %c17_i32 = arith.constant 17 : i32
    %10 = tpu.dynamic_rotate %7 by %c17_i32 dim 1 : vector<8x256xf32>, i32 -> vector<8x256xf32>
    %c0_8 = arith.constant 0 : index
    %c0_9 = arith.constant 0 : index
    %c0_10 = arith.constant 0 : index
    %11 = vector.load %arg4[%c0_8, %c0_9, %c0_10] : memref<9x8x8xf32, #tpu.memory_space<vmem>>, vector<1x8x8xf32>
    %12 = vector.shape_cast %11 : vector<1x8x8xf32> to vector<8x8xf32>
    %13 = vector.broadcast %9 : vector<1x256xf32> to vector<8x256xf32>
    %14 = arith.mulf %10, %13 : vector<8x256xf32>
    %cst_11 = arith.constant dense<0.000000e+00> : vector<8x256xf32>
    %15 = tpu.matmul %12, %14, %cst_11 {dimension_numbers = #tpu.dot_dimension_numbers<[1], [0], [0], [1], [0, 0, 1, 1], [], []>} : vector<8x8xf32>, vector<8x256xf32>, vector<8x256xf32> -> vector<8x256xf32>
    %16 = arith.addf %8, %15 : vector<8x256xf32>
    %c1 = arith.constant 1 : index
    %c0_12 = arith.constant 0 : index
    %17 = vector.load %arg6[%c1, %c0_12] : memref<9x256xf32, #tpu.memory_space<vmem>>, vector<1x256xf32>
    %c16_i32 = arith.constant 16 : i32
    %18 = tpu.dynamic_rotate %7 by %c16_i32 dim 1 : vector<8x256xf32>, i32 -> vector<8x256xf32>
    %c1_13 = arith.constant 1 : index
    %c0_14 = arith.constant 0 : index
    %c0_15 = arith.constant 0 : index
    %19 = vector.load %arg4[%c1_13, %c0_14, %c0_15] : memref<9x8x8xf32, #tpu.memory_space<vmem>>, vector<1x8x8xf32>
    %20 = vector.shape_cast %19 : vector<1x8x8xf32> to vector<8x8xf32>
    %21 = vector.broadcast %17 : vector<1x256xf32> to vector<8x256xf32>
    %22 = arith.mulf %18, %21 : vector<8x256xf32>
    %cst_16 = arith.constant dense<0.000000e+00> : vector<8x256xf32>
    %23 = tpu.matmul %20, %22, %cst_16 {dimension_numbers = #tpu.dot_dimension_numbers<[1], [0], [0], [1], [0, 0, 1, 1], [], []>} : vector<8x8xf32>, vector<8x256xf32>, vector<8x256xf32> -> vector<8x256xf32>
    %24 = arith.addf %16, %23 : vector<8x256xf32>
    %c2 = arith.constant 2 : index
    %c0_17 = arith.constant 0 : index
    %25 = vector.load %arg6[%c2, %c0_17] : memref<9x256xf32, #tpu.memory_space<vmem>>, vector<1x256xf32>
    %c15_i32 = arith.constant 15 : i32
    %26 = tpu.dynamic_rotate %7 by %c15_i32 dim 1 : vector<8x256xf32>, i32 -> vector<8x256xf32>
    %c2_18 = arith.constant 2 : index
    %c0_19 = arith.constant 0 : index
    %c0_20 = arith.constant 0 : index
    %27 = vector.load %arg4[%c2_18, %c0_19, %c0_20] : memref<9x8x8xf32, #tpu.memory_space<vmem>>, vector<1x8x8xf32>
    %28 = vector.shape_cast %27 : vector<1x8x8xf32> to vector<8x8xf32>
    %29 = vector.broadcast %25 : vector<1x256xf32> to vector<8x256xf32>
    %30 = arith.mulf %26, %29 : vector<8x256xf32>
    %cst_21 = arith.constant dense<0.000000e+00> : vector<8x256xf32>
    %31 = tpu.matmul %28, %30, %cst_21 {dimension_numbers = #tpu.dot_dimension_numbers<[1], [0], [0], [1], [0, 0, 1, 1], [], []>} : vector<8x8xf32>, vector<8x256xf32>, vector<8x256xf32> -> vector<8x256xf32>
    %32 = arith.addf %24, %31 : vector<8x256xf32>
    %c3 = arith.constant 3 : index
    %c0_22 = arith.constant 0 : index
    %33 = vector.load %arg6[%c3, %c0_22] : memref<9x256xf32, #tpu.memory_space<vmem>>, vector<1x256xf32>
    %c1_i32 = arith.constant 1 : i32
    %34 = tpu.dynamic_rotate %7 by %c1_i32 dim 1 : vector<8x256xf32>, i32 -> vector<8x256xf32>
    %c3_23 = arith.constant 3 : index
    %c0_24 = arith.constant 0 : index
    %c0_25 = arith.constant 0 : index
    %35 = vector.load %arg4[%c3_23, %c0_24, %c0_25] : memref<9x8x8xf32, #tpu.memory_space<vmem>>, vector<1x8x8xf32>
    %36 = vector.shape_cast %35 : vector<1x8x8xf32> to vector<8x8xf32>
    %37 = vector.broadcast %33 : vector<1x256xf32> to vector<8x256xf32>
    %38 = arith.mulf %34, %37 : vector<8x256xf32>
    %cst_26 = arith.constant dense<0.000000e+00> : vector<8x256xf32>
    %39 = tpu.matmul %36, %38, %cst_26 {dimension_numbers = #tpu.dot_dimension_numbers<[1], [0], [0], [1], [0, 0, 1, 1], [], []>} : vector<8x8xf32>, vector<8x256xf32>, vector<8x256xf32> -> vector<8x256xf32>
    %40 = arith.addf %32, %39 : vector<8x256xf32>
    %c4 = arith.constant 4 : index
    %c0_27 = arith.constant 0 : index
    %41 = vector.load %arg6[%c4, %c0_27] : memref<9x256xf32, #tpu.memory_space<vmem>>, vector<1x256xf32>
    %c4_28 = arith.constant 4 : index
    %c0_29 = arith.constant 0 : index
    %c0_30 = arith.constant 0 : index
    %42 = vector.load %arg4[%c4_28, %c0_29, %c0_30] : memref<9x8x8xf32, #tpu.memory_space<vmem>>, vector<1x8x8xf32>
    %43 = vector.shape_cast %42 : vector<1x8x8xf32> to vector<8x8xf32>
    %44 = vector.broadcast %41 : vector<1x256xf32> to vector<8x256xf32>
    %45 = arith.mulf %7, %44 : vector<8x256xf32>
    %cst_31 = arith.constant dense<0.000000e+00> : vector<8x256xf32>
    %46 = tpu.matmul %43, %45, %cst_31 {dimension_numbers = #tpu.dot_dimension_numbers<[1], [0], [0], [1], [0, 0, 1, 1], [], []>} : vector<8x8xf32>, vector<8x256xf32>, vector<8x256xf32> -> vector<8x256xf32>
    %47 = arith.addf %40, %46 : vector<8x256xf32>
    %c5 = arith.constant 5 : index
    %c0_32 = arith.constant 0 : index
    %48 = vector.load %arg6[%c5, %c0_32] : memref<9x256xf32, #tpu.memory_space<vmem>>, vector<1x256xf32>
    %c255_i32 = arith.constant 255 : i32
    %49 = tpu.dynamic_rotate %7 by %c255_i32 dim 1 : vector<8x256xf32>, i32 -> vector<8x256xf32>
    %c5_33 = arith.constant 5 : index
    %c0_34 = arith.constant 0 : index
    %c0_35 = arith.constant 0 : index
    %50 = vector.load %arg4[%c5_33, %c0_34, %c0_35] : memref<9x8x8xf32, #tpu.memory_space<vmem>>, vector<1x8x8xf32>
    %51 = vector.shape_cast %50 : vector<1x8x8xf32> to vector<8x8xf32>
    %52 = vector.broadcast %48 : vector<1x256xf32> to vector<8x256xf32>
    %53 = arith.mulf %49, %52 : vector<8x256xf32>
    %cst_36 = arith.constant dense<0.000000e+00> : vector<8x256xf32>
    %54 = tpu.matmul %51, %53, %cst_36 {dimension_numbers = #tpu.dot_dimension_numbers<[1], [0], [0], [1], [0, 0, 1, 1], [], []>} : vector<8x8xf32>, vector<8x256xf32>, vector<8x256xf32> -> vector<8x256xf32>
    %55 = arith.addf %47, %54 : vector<8x256xf32>
    %c6 = arith.constant 6 : index
    %c0_37 = arith.constant 0 : index
    %56 = vector.load %arg6[%c6, %c0_37] : memref<9x256xf32, #tpu.memory_space<vmem>>, vector<1x256xf32>
    %c241_i32 = arith.constant 241 : i32
    %57 = tpu.dynamic_rotate %7 by %c241_i32 dim 1 : vector<8x256xf32>, i32 -> vector<8x256xf32>
    %c6_38 = arith.constant 6 : index
    %c0_39 = arith.constant 0 : index
    %c0_40 = arith.constant 0 : index
    %58 = vector.load %arg4[%c6_38, %c0_39, %c0_40] : memref<9x8x8xf32, #tpu.memory_space<vmem>>, vector<1x8x8xf32>
    %59 = vector.shape_cast %58 : vector<1x8x8xf32> to vector<8x8xf32>
    %60 = vector.broadcast %56 : vector<1x256xf32> to vector<8x256xf32>
    %61 = arith.mulf %57, %60 : vector<8x256xf32>
    %cst_41 = arith.constant dense<0.000000e+00> : vector<8x256xf32>
    %62 = tpu.matmul %59, %61, %cst_41 {dimension_numbers = #tpu.dot_dimension_numbers<[1], [0], [0], [1], [0, 0, 1, 1], [], []>} : vector<8x8xf32>, vector<8x256xf32>, vector<8x256xf32> -> vector<8x256xf32>
    %63 = arith.addf %55, %62 : vector<8x256xf32>
    %c7 = arith.constant 7 : index
    %c0_42 = arith.constant 0 : index
    %64 = vector.load %arg6[%c7, %c0_42] : memref<9x256xf32, #tpu.memory_space<vmem>>, vector<1x256xf32>
    %c240_i32 = arith.constant 240 : i32
    %65 = tpu.dynamic_rotate %7 by %c240_i32 dim 1 : vector<8x256xf32>, i32 -> vector<8x256xf32>
    %c7_43 = arith.constant 7 : index
    %c0_44 = arith.constant 0 : index
    %c0_45 = arith.constant 0 : index
    %66 = vector.load %arg4[%c7_43, %c0_44, %c0_45] : memref<9x8x8xf32, #tpu.memory_space<vmem>>, vector<1x8x8xf32>
    %67 = vector.shape_cast %66 : vector<1x8x8xf32> to vector<8x8xf32>
    %68 = vector.broadcast %64 : vector<1x256xf32> to vector<8x256xf32>
    %69 = arith.mulf %65, %68 : vector<8x256xf32>
    %cst_46 = arith.constant dense<0.000000e+00> : vector<8x256xf32>
    %70 = tpu.matmul %67, %69, %cst_46 {dimension_numbers = #tpu.dot_dimension_numbers<[1], [0], [0], [1], [0, 0, 1, 1], [], []>} : vector<8x8xf32>, vector<8x256xf32>, vector<8x256xf32> -> vector<8x256xf32>
    %71 = arith.addf %63, %70 : vector<8x256xf32>
    %c8 = arith.constant 8 : index
    %c0_47 = arith.constant 0 : index
    %72 = vector.load %arg6[%c8, %c0_47] : memref<9x256xf32, #tpu.memory_space<vmem>>, vector<1x256xf32>
    %c239_i32 = arith.constant 239 : i32
    %73 = tpu.dynamic_rotate %7 by %c239_i32 dim 1 : vector<8x256xf32>, i32 -> vector<8x256xf32>
    %c8_48 = arith.constant 8 : index
    %c0_49 = arith.constant 0 : index
    %c0_50 = arith.constant 0 : index
    %74 = vector.load %arg4[%c8_48, %c0_49, %c0_50] : memref<9x8x8xf32, #tpu.memory_space<vmem>>, vector<1x8x8xf32>
    %75 = vector.shape_cast %74 : vector<1x8x8xf32> to vector<8x8xf32>
    %76 = vector.broadcast %72 : vector<1x256xf32> to vector<8x256xf32>
    %77 = arith.mulf %73, %76 : vector<8x256xf32>
    %cst_51 = arith.constant dense<0.000000e+00> : vector<8x256xf32>
    %78 = tpu.matmul %75, %77, %cst_51 {dimension_numbers = #tpu.dot_dimension_numbers<[1], [0], [0], [1], [0, 0, 1, 1], [], []>} : vector<8x8xf32>, vector<8x256xf32>, vector<8x256xf32> -> vector<8x256xf32>
    %79 = arith.addf %71, %78 : vector<8x256xf32>
    %c0_52 = arith.constant 0 : index
    %c0_53 = arith.constant 0 : index
    %80 = vector.load %arg5[%c0_52, %c0_53] : memref<8x1xf32, #tpu.memory_space<vmem>>, vector<8x1xf32>
    %81 = vector.broadcast %80 : vector<8x1xf32> to vector<8x256xf32>
    %82 = arith.addf %79, %81 : vector<8x256xf32>
    %cst_54 = arith.constant 0.000000e+00 : f32
    %83 = vector.broadcast %cst_54 : f32 to vector<8x256xf32>
    %84 = arith.maximumf %82, %83 : vector<8x256xf32>
    %c0_55 = arith.constant 0 : index
    %c0_56 = arith.constant 0 : index
    %c0_57 = arith.constant 0 : index
    %85 = vector.load %arg7[%c0_55, %c0_56, %c0_57] : memref<1x8x256xf32, #tpu.memory_space<vmem>>, vector<1x8x256xf32>
    %86 = vector.shape_cast %85 : vector<1x8x256xf32> to vector<8x256xf32>
    %87 = vector.shape_cast %84 : vector<8x256xf32> to vector<1x8x256xf32>
    tpu.vector_store %arg7[%c0_55, %c0_56, %c0_57], %87 {strides = array<i32>} : memref<1x8x256xf32, #tpu.memory_space<vmem>>, vector<1x8x256xf32>,
    %cst_58 = arith.constant dense<0.000000e+00> : vector<8xf32>
    %88 = vector.multi_reduction <add>, %84, %cst_58 [1] : vector<8x256xf32> to vector<8xf32>
    %89 = vector.shape_cast %88 : vector<8xf32> to vector<8x1xf32>
    %c0_59 = arith.constant 0 : index
    %c0_60 = arith.constant 0 : index
    %c0_61 = arith.constant 0 : index
    %90 = vector.load %arg8[%c0_59, %c0_60, %c0_61] : memref<1x8x1xf32, #tpu.memory_space<vmem>>, vector<1x8x1xf32>
    %91 = vector.shape_cast %90 : vector<1x8x1xf32> to vector<8x1xf32>
    %92 = vector.shape_cast %89 : vector<8x1xf32> to vector<1x8x1xf32>
    tpu.vector_store %arg8[%c0_59, %c0_60, %c0_61], %92 {strides = array<i32>} : memref<1x8x1xf32, #tpu.memory_space<vmem>>, vector<1x8x1xf32>,
    %93 = arith.mulf %84, %84 : vector<8x256xf32>
    %cst_62 = arith.constant dense<0.000000e+00> : vector<8xf32>
    %94 = vector.multi_reduction <add>, %93, %cst_62 [1] : vector<8x256xf32> to vector<8xf32>
    %95 = vector.shape_cast %94 : vector<8xf32> to vector<8x1xf32>
    %c0_63 = arith.constant 0 : index
    %c0_64 = arith.constant 0 : index
    %c0_65 = arith.constant 0 : index
    %96 = vector.load %arg9[%c0_63, %c0_64, %c0_65] : memref<1x8x1xf32, #tpu.memory_space<vmem>>, vector<1x8x1xf32>
    %97 = vector.shape_cast %96 : vector<1x8x1xf32> to vector<8x1xf32>
    %98 = vector.shape_cast %95 : vector<8x1xf32> to vector<1x8x1xf32>
    tpu.vector_store %arg9[%c0_63, %c0_64, %c0_65], %98 {strides = array<i32>} : memref<1x8x1xf32, #tpu.memory_space<vmem>>, vector<1x8x1xf32>,
    return
  }
  func.func @transform_0(%arg0: i32) -> (i32, i32, i32) {
    %c0_i32 = arith.constant 0 : i32
    %c0_i32_0 = arith.constant 0 : i32
    %c0_i32_1 = arith.constant 0 : i32
    return %arg0, %c0_i32, %c0_i32_0 : i32, i32, i32
  }
  func.func @transform_1(%arg0: i32) -> (i32, i32) {
    %c0_i32 = arith.constant 0 : i32
    %c0_i32_0 = arith.constant 0 : i32
    %c0_i32_1 = arith.constant 0 : i32
    return %c0_i32, %c0_i32_0 : i32, i32
  }
  func.func @transform_2(%arg0: i32) -> (i32, i32) {
    %c0_i32 = arith.constant 0 : i32
    %c0_i32_0 = arith.constant 0 : i32
    %c0_i32_1 = arith.constant 0 : i32
    return %c0_i32, %c0_i32_0 : i32, i32
  }
  func.func @transform_3(%arg0: i32) -> (i32, i32, i32) {
    %c0_i32 = arith.constant 0 : i32
    %c0_i32_0 = arith.constant 0 : i32
    %c0_i32_1 = arith.constant 0 : i32
    %c0_i32_2 = arith.constant 0 : i32
    return %c0_i32, %c0_i32_0, %c0_i32_1 : i32, i32, i32
  }
  func.func @transform_4(%arg0: i32) -> (i32, i32) {
    %c0_i32 = arith.constant 0 : i32
    %c0_i32_0 = arith.constant 0 : i32
    %c0_i32_1 = arith.constant 0 : i32
    return %c0_i32, %c0_i32_0 : i32, i32
  }
  func.func @transform_5(%arg0: i32) -> (i32, i32) {
    %c0_i32 = arith.constant 0 : i32
    %c0_i32_0 = arith.constant 0 : i32
    %c0_i32_1 = arith.constant 0 : i32
    return %c0_i32, %c0_i32_0 : i32, i32
  }
  func.func @transform_6(%arg0: i32) -> (i32, i32, i32) {
    %c0_i32 = arith.constant 0 : i32
    %c0_i32_0 = arith.constant 0 : i32
    %c0_i32_1 = arith.constant 0 : i32
    return %arg0, %c0_i32, %c0_i32_0 : i32, i32, i32
  }
  func.func @transform_7(%arg0: i32) -> (i32, i32, i32) {
    %c0_i32 = arith.constant 0 : i32
    %c0_i32_0 = arith.constant 0 : i32
    %c0_i32_1 = arith.constant 0 : i32
    return %arg0, %c0_i32, %c0_i32_0 : i32, i32, i32
  }
  func.func @transform_8(%arg0: i32) -> (i32, i32, i32) {
    %c0_i32 = arith.constant 0 : i32
    %c0_i32_0 = arith.constant 0 : i32
    %c0_i32_1 = arith.constant 0 : i32
    return %arg0, %c0_i32, %c0_i32_0 : i32, i32, i32
  }
}

</mosaic_0001>

<llo_original>
// kernel: upsample_forward.4
$region0: #{upsample_forward.4}
  #allocation0 [shape = 'u32[]', space=smem, size = 0x4, offset = 0x4, fixed_abs, tag = 'smem constant byte address 0x4 - core index']
  #allocation1 [shape = 'u32[144,128]{1,0:T(1,128)}', space=vmem, size = 0x12000, scoped, tag = 'internal scratch']
  %s0 = inlined_call_operand.vmem [shape: f32[16,8], index: 0, kind: input, shape index: {}]
  %s1 = inlined_call_operand.vmem [shape: f32[8,16], index: 1, kind: input, shape index: {}]
  %s2 = inlined_call_operand.vmem [shape: f32[8,8,8], index: 2, kind: input, shape index: {}]
  %s3 = inlined_call_operand.vmem [shape: f32[8,16,16], index: 3, kind: output, shape index: {}]
  %s4 = sld [smem:[#allocation0]]
  $region45: #{upsample_forward.4} parent=0
    _
  %s6 = ssub.s32 1, %s4
  %s7 = scalar_select 0, %s6, %s4
  loop: start=0, step=1, limit=4
  $region2: #{upsample_forward.4} parent=0 // loop_pre_header
    _
  $region3: #{upsample_forward.4} parent=0 // loop_header
    %s9 = sphi 0, %s13
    %p10 = scmp.ge.s32.totalorder %s9, 4
    %s17 = sphi 0, %s17
    %s19 = sphi 0, %s17
    %s20 = sphi 0, %s19
    %s34 = sphi 0, %s20
    %s38 = sphi 0, %s38
    %s40 = sphi 0, %s38
    %s41 = sphi 0, %s40
    %s55 = sphi 0, %s41
    %s61 = sphi 0, %s63
    %s64 = sphi 0, %s61
    %s65 = sphi 0, %s64
    %s81 = sphi 0, %s65
    %s87 = sphi 0, %s89
    %s90 = sphi 0, %s87
    %s91 = sphi 0, %s90
    %s107 = sphi 0, %s91
  $region4: #{upsample_forward.4} parent=0 // loop_header_branch
    %12 = sbr.rel (%p10) target = $region8
  $region5: #{upsample_forward.4} parent=0 // loop_body
    %s14 = ssub.s32 %s9, 1
    %s15 = ssub.s32 %s9, 2
    %s16 = sadd.s32 %s9, 1
    %s18 = sadd.s32 %s17, 1
    %p21 = scmp.eq.s32.totalorder %s9, 1
    %p22 = scmp.ne.s32.totalorder %s17, %s19
    %p23 = scmp.eq.s32.totalorder %s9, 0
    %p24 = por %p22, %p23
    %p25 = scmp.ne.s32.totalorder %s17, %s19
    %p26 = scmp.eq.s32.totalorder %s14, 1
    %p27 = por %p25, %p26
    %p28 = scmp.ne.s32.totalorder %s19, %s20
    %p29 = scmp.eq.s32.totalorder %s14, 0
    %p30 = por %p28, %p29
    %p31 = scmp.ne.s32.totalorder %s19, %s20
    %p32 = scmp.eq.s32.totalorder %s15, 1
    %p33 = por %p31, %p32
    %p35 = scmp.ne.s32.totalorder %s20, %s34
    %p36 = scmp.eq.s32.totalorder %s15, 0
    %p37 = por %p35, %p36
    %s39 = sadd.s32 %s38, 1
    %p42 = scmp.eq.s32.totalorder %s9, 1
    %p43 = scmp.ne.s32.totalorder %s38, %s40
    %p44 = scmp.eq.s32.totalorder %s9, 0
    %p45 = por %p43, %p44
    %p46 = scmp.ne.s32.totalorder %s38, %s40
    %p47 = scmp.eq.s32.totalorder %s14, 1
    %p48 = por %p46, %p47
    %p49 = scmp.ne.s32.totalorder %s40, %s41
    %p50 = scmp.eq.s32.totalorder %s14, 0
    %p51 = por %p49, %p50
    %p52 = scmp.ne.s32.totalorder %s40, %s41
    %p53 = scmp.eq.s32.totalorder %s15, 1
    %p54 = por %p52, %p53
    %p56 = scmp.ne.s32.totalorder %s41, %s55
    %p57 = scmp.eq.s32.totalorder %s15, 0
    %p58 = por %p56, %p57
    %s59 = ssub.s32 %s9, %s16
    %p60 = scmp.eq.s32.totalorder %s59, 0
    %s62 = sadd.s32 %s61, 1
    %s63 = scalar_select %p60, %s61, %s62
    %p66 = pneg %p60
    %p67 = scmp.eq.s32.totalorder %s9, 1
    %p68 = por %p66, %p67
    %p69 = scmp.ne.s32.totalorder %s61, %s64
    %p70 = scmp.eq.s32.totalorder %s9, 0
    %p71 = por %p69, %p70
    %p72 = scmp.ne.s32.totalorder %s61, %s64
    %p73 = scmp.eq.s32.totalorder %s14, 1
    %p74 = por %p72, %p73
    %p75 = scmp.ne.s32.totalorder %s64, %s65
    %p76 = scmp.eq.s32.totalorder %s14, 0
    %p77 = por %p75, %p76
    %p78 = scmp.ne.s32.totalorder %s64, %s65
    %p79 = scmp.eq.s32.totalorder %s15, 1
    %p80 = por %p78, %p79
    %p82 = scmp.ne.s32.totalorder %s65, %s81
    %p83 = scmp.eq.s32.totalorder %s15, 0
    %p84 = por %p82, %p83
    %s85 = ssub.s32 %s9, %s16
    %p86 = scmp.eq.s32.totalorder %s85, 0
    %s88 = sadd.s32 %s87, 1
    %s89 = scalar_select %p86, %s87, %s88
    %p92 = pneg %p86
    %p93 = scmp.eq.s32.totalorder %s9, 1
    %p94 = por %p92, %p93
    %p95 = scmp.ne.s32.totalorder %s87, %s90
    %p96 = scmp.eq.s32.totalorder %s9, 0
    %p97 = por %p95, %p96
    %p98 = scmp.ne.s32.totalorder %s87, %s90
    %p99 = scmp.eq.s32.totalorder %s14, 1
    %p100 = por %p98, %p99
    %p101 = scmp.ne.s32.totalorder %s90, %s91
    %p102 = scmp.eq.s32.totalorder %s14, 0
    %p103 = por %p101, %p102
    %p104 = scmp.ne.s32.totalorder %s90, %s91
    %p105 = scmp.eq.s32.totalorder %s15, 1
    %p106 = por %p104, %p105
    %p108 = scmp.ne.s32.totalorder %s91, %s107
    %p109 = scmp.eq.s32.totalorder %s15, 0
    %p110 = por %p108, %p109
    %p111 = scmp.le.s32.totalorder 1, %s9
    %p112 = scmp.lt.s32.totalorder %s9, 3
    %p113 = pnand %p111, %p112
    %p114 = pneg %p113
    // Predicated region
    $region9: #{upsample_forward.4} parent=5 // pred_check
      _
    $region10: #{upsample_forward.4} parent=5 // pred_check_branch
      %116 = sbr.rel (%p113) target = $region12
    $region11: #{upsample_forward.4} parent=5 // pred_region
      %s117 = ssub.s32 %s9, 1
      // Predicated region
      $region13: #{upsample_forward.4} parent=11 // pred_check
        %p118 = pneg %p30
      $region14: #{upsample_forward.4} parent=11 // pred_check_branch
        %120 = sbr.rel (%p118) target = $region16
      $region15: #{upsample_forward.4} parent=11 // pred_region
        _
      $region16: #{upsample_forward.4} parent=11 // pred_fallthru
        _
      // Predicated region
      $region17: #{upsample_forward.4} parent=11 // pred_check
        %p121 = pneg %p51
      $region18: #{upsample_forward.4} parent=11 // pred_check_branch
        %123 = sbr.rel (%p121) target = $region20
      $region19: #{upsample_forward.4} parent=11 // pred_region
        _
      $region20: #{upsample_forward.4} parent=11 // pred_fallthru
        _
    $region12: #{upsample_forward.4} parent=5 // pred_fallthru
      _
    %p124 = scmp.lt.s32.totalorder %s9, 2
    // Predicated region
    $region21: #{upsample_forward.4} parent=5 // pred_check
      %p125 = pneg %p124
    $region22: #{upsample_forward.4} parent=5 // pred_check_branch
      %127 = sbr.rel (%p125) target = $region24
    $region23: #{upsample_forward.4} parent=5 // pred_region
      // Predicated region
      $region25: #{upsample_forward.4} parent=23 // pred_check
        %p128 = pneg %p71
      $region26: #{upsample_forward.4} parent=23 // pred_check_branch
        %130 = sbr.rel (%p128) target = $region28
      $region27: #{upsample_forward.4} parent=23 // pred_region
        %s131 = smul.u32 4, %s9
        %p132 = scmp.lt.s32.totalorder %s131, 7
        %s133 = scalar_select %p132, %s131, 7
        %s134 = smul.addr %s133, 8
        %s135 = scalar_lea.vmem %s2, %s134
        %s136 = smul.u32 4, %s9
      $region28: #{upsample_forward.4} parent=23 // pred_fallthru
        _
    $region24: #{upsample_forward.4} parent=5 // pred_fallthru
      _
    %p137 = scmp.le.s32.totalorder 1, %s9
    %p138 = scmp.lt.s32.totalorder %s9, 3
    %p139 = pnand %p137, %p138
    %p140 = pneg %p139
    // Predicated region
    $region29: #{upsample_forward.4} parent=5 // pred_check
      _
    $region30: #{upsample_forward.4} parent=5 // pred_check_branch
      %142 = sbr.rel (%p139) target = $region32
    $region31: #{upsample_forward.4} parent=5 // pred_region
      %s143 = ssub.s32 %s9, 1
      %p144 = pneg %p30
      %p145 = pneg %p27
      %p146 = pneg %p51
      %p147 = pneg %p48
      %s148 = smul.u32 4, %s14
      %p149 = scmp.lt.s32.totalorder %s148, 7
      %s150 = scalar_select %p149, %s148, 7
      %s151 = smul.addr %s150, 8
      %s152 = scalar_lea.vmem %s2, %s151
      %p153 = pneg %p77
      %p154 = pneg %p74
      %p155 = pneg %p103
      %p156 = pneg %p100
      %s157 = smul.u32 4, %s14
      %p158 = scmp.lt.s32.totalorder %s157, 7
      %s159 = scalar_select %p158, %s157, 7
      %s160 = smul.addr %s159, 2
      %s161 = smul.addr %s160, 8
      %s162 = scalar_lea.vmem %s3, %s161
      %s163 = smul.u32 4, %s14
      %p164 = scmp.lt.s32.totalorder %s163, 7
      %s165 = scalar_select %p164, %s163, 7
      %s166 = smul.addr %s165, 8
      %s167 = scalar_lea.vmem %s2, %s166
      %s168 = smul.u32 4, %s14
      %s169 = smul.u32 4, %s14
      %p170 = scmp.lt.s32.totalorder %s169, 7
      %s171 = scalar_select %p170, %s169, 7
      %s172 = smul.addr %s171, 2
      %s173 = smul.addr %s172, 8
      %s174 = scalar_lea.vmem %s3, %s173
      %s175 = smul.u32 4, %s14
      %v176 = vld [vmem:[%s0] sm:$0xff]
      %v177 = vld [vmem:[%s0 + $0x8] sm:$0xff]
      %v178 = vld [vmem:[%s167] sm:$0xff]
      %vm179 = vcmask 64512
      %v181 = vsel %vm179, %v176, 0
      %v184 = vsel %vm179, %v177, 0
      %186 = vmatprep.subr.mxu0 0.0
      %187 = vmatpush1.msra.mxu0 0.0
      %188 = vmatprep.subr.mxu0 0.0
      %189 = vmatpush1.msra.mxu0 0.0
      %190 = vmatprep.subr.mxu0 0.0
      %191 = vmatpush1.msra.mxu0 0.0
      %192 = vmatprep.subr.mxu0 0.0
      %193 = vmatpush1.msra.mxu0 0.0
      %194 = vmatprep.subr.mxu0 0.0
      %195 = vmatpush1.msra.mxu0 0.0
      %196 = vmatprep.subr.mxu0 0.0
      %197 = vmatpush1.msra.mxu0 0.0
      %198 = vmatprep.subr.mxu0 0.0
      %199 = vmatpush1.msra.mxu0 0.0
      %200 = vmatprep.subr.mxu0 0.0
      %201 = vmatpush1.msra.mxu0 0.0
      %202 = vmatprep.subr.mxu0 0.0
      %203 = vmatpush1.msra.mxu0 0.0
      %204 = vmatprep.subr.mxu0 0.0
      %205 = vmatpush1.msra.mxu0 0.0
      %206 = vmatprep.subr.mxu0 0.0
      %207 = vmatpush1.msra.mxu0 0.0
      %208 = vmatprep.subr.mxu0 0.0
      %209 = vmatpush1.msra.mxu0 0.0
      %210 = vmatprep.subr.mxu0 0.0
      %211 = vmatpush1.msra.mxu0 0.0
      %212 = vmatprep.subr.mxu0 0.0
      %213 = vmatpush1.msra.mxu0 0.0
      %214 = vmatprep.subr.mxu0 0.0
      %215 = vmatpush1.msra.mxu0 0.0
      %216 = vmatprep.subr.mxu0 0.0
      %217 = vmatpush1.msra.mxu0 %v178
      %218 = vmatprep.subr.mxu0 0.0
      %219 = vmatpush2.msra.mxu0 0.0
      %220 = vmatprep.subr.mxu0 0.0
      %221 = vmatpush2.msra.mxu0 0.0
      %222 = vmatprep.subr.mxu0 0.0
      %223 = vmatpush2.msra.mxu0 0.0
      %224 = vmatprep.subr.mxu0 0.0
      %225 = vmatpush2.msra.mxu0 0.0
      %226 = vmatprep.subr.mxu0 0.0
      %227 = vmatpush2.msra.mxu0 0.0
      %228 = vmatprep.subr.mxu0 0.0
      %229 = vmatpush2.msra.mxu0 0.0
      %230 = vmatprep.subr.mxu0 0.0
      %231 = vmatpush2.msra.mxu0 0.0
      %232 = vmatprep.subr.mxu0 0.0
      %233 = vmatpush2.msra.mxu0 0.0
      %234 = vmatprep.subr.mxu0 0.0
      %235 = vmatpush2.msra.mxu0 0.0
      %236 = vmatprep.subr.mxu0 0.0
      %237 = vmatpush2.msra.mxu0 0.0
      %238 = vmatprep.subr.mxu0 0.0
      %239 = vmatpush2.msra.mxu0 0.0
      %240 = vmatprep.subr.mxu0 0.0
      %241 = vmatpush2.msra.mxu0 0.0
      %242 = vmatprep.subr.mxu0 0.0
      %243 = vmatpush2.msra.mxu0 0.0
      %244 = vmatprep.subr.mxu0 0.0
      %245 = vmatpush2.msra.mxu0 0.0
      %246 = vmatprep.subr.mxu0 0.0
      %247 = vmatpush2.msra.mxu0 0.0
      %248 = vmatprep.subr.mxu0 0.0
      %249 = vmatpush2.msra.mxu0 0.0
      %250 = vmatprep.mubr.f32.mxu0 0.0
      %251 = vmatmul.mubr.f32.gmra.mxu0 %v181
      %v252 = vpop.f32.mrf.mxu0
      %v253 = vadd.f32 0.0, %v252
      %v254 = vpop.f32.mrf.mxu0
      %255 = vmatprep.mubr.f32.mxu0 0.0
      %256 = vmatmul.mubr.f32.gmra.mxu0 %v184
      %v257 = vpop.f32.mrf.mxu0
      %v258 = vadd.f32 0.0, %v257
      %v259 = vpop.f32.mrf.mxu0
      %260 = vdwg.mxu0
      %v261 = vld [vmem:[%s1] sm:$0xff]
      %v263 = vsel %vm179, %v253, 0
      %v266 = vsel %vm179, %v258, 0
      %268 = vmatprep.subr.mxu0 0.0
      %269 = vmatpush1.msra.mxu0 0.0
      %270 = vmatprep.subr.mxu0 0.0
      %271 = vmatpush1.msra.mxu0 0.0
      %272 = vmatprep.subr.mxu0 0.0
      %273 = vmatpush1.msra.mxu0 0.0
      %274 = vmatprep.subr.mxu0 0.0
      %275 = vmatpush1.msra.mxu0 0.0
      %276 = vmatprep.subr.mxu0 0.0
      %277 = vmatpush1.msra.mxu0 0.0
      %278 = vmatprep.subr.mxu0 0.0
      %279 = vmatpush1.msra.mxu0 0.0
      %280 = vmatprep.subr.mxu0 0.0
      %281 = vmatpush1.msra.mxu0 0.0
      %282 = vmatprep.subr.mxu0 0.0
      %283 = vmatpush1.msra.mxu0 0.0
      %284 = vmatprep.subr.mxu0 0.0
      %285 = vmatpush1.msra.mxu0 0.0
      %286 = vmatprep.subr.mxu0 0.0
      %287 = vmatpush1.msra.mxu0 0.0
      %288 = vmatprep.subr.mxu0 0.0
      %289 = vmatpush1.msra.mxu0 0.0
      %290 = vmatprep.subr.mxu0 0.0
      %291 = vmatpush1.msra.mxu0 0.0
      %292 = vmatprep.subr.mxu0 0.0
      %293 = vmatpush1.msra.mxu0 0.0
      %294 = vmatprep.subr.mxu0 0.0
      %295 = vmatpush1.msra.mxu0 0.0
      %296 = vmatprep.subr.mxu0 0.0
      %297 = vmatpush1.msra.mxu0 0.0
      %298 = vmatprep.subr.mxu0 0.0
      %299 = vmatpush1.msra.mxu0 %v261
      %300 = vmatprep.subr.mxu0 0.0
      %301 = vmatpush2.msra.mxu0 0.0
      %302 = vmatprep.subr.mxu0 0.0
      %303 = vmatpush2.msra.mxu0 0.0
      %304 = vmatprep.subr.mxu0 0.0
      %305 = vmatpush2.msra.mxu0 0.0
      %306 = vmatprep.subr.mxu0 0.0
      %307 = vmatpush2.msra.mxu0 0.0
      %308 = vmatprep.subr.mxu0 0.0
      %309 = vmatpush2.msra.mxu0 0.0
      %310 = vmatprep.subr.mxu0 0.0
      %311 = vmatpush2.msra.mxu0 0.0
      %312 = vmatprep.subr.mxu0 0.0
      %313 = vmatpush2.msra.mxu0 0.0
      %314 = vmatprep.subr.mxu0 0.0
      %315 = vmatpush2.msra.mxu0 0.0
      %316 = vmatprep.subr.mxu0 0.0
      %317 = vmatpush2.msra.mxu0 0.0
      %318 = vmatprep.subr.mxu0 0.0
      %319 = vmatpush2.msra.mxu0 0.0
      %320 = vmatprep.subr.mxu0 0.0
      %321 = vmatpush2.msra.mxu0 0.0
      %322 = vmatprep.subr.mxu0 0.0
      %323 = vmatpush2.msra.mxu0 0.0
      %324 = vmatprep.subr.mxu0 0.0
      %325 = vmatpush2.msra.mxu0 0.0
      %326 = vmatprep.subr.mxu0 0.0
      %327 = vmatpush2.msra.mxu0 0.0
      %328 = vmatprep.subr.mxu0 0.0
      %329 = vmatpush2.msra.mxu0 0.0
      %330 = vmatprep.subr.mxu0 0.0
      %331 = vmatpush2.msra.mxu0 0.0
      %332 = vmatprep.mubr.f32.mxu0 0.0
      %333 = vmatmul.mubr.f32.gmra.mxu0 %v263
      %v334 = vpop.f32.mrf.mxu0
      %v335 = vadd.f32 0.0, %v334
      %v336 = vpop.f32.mrf.mxu0
      %337 = vmatprep.mubr.f32.mxu0 0.0
      %338 = vmatmul.mubr.f32.gmra.mxu0 %v266
      %v339 = vpop.f32.mrf.mxu0
      %v340 = vadd.f32 0.0, %v339
      %v341 = vpop.f32.mrf.mxu0
      %342 = vdwg.mxu0
      %vm343 = vcmask 130048
      %344 = vst.msk [vmem:[%s174] sm:$0xff] %vm343, %v335
      %345 = vst.msk [vmem:[%s174 + $0x8] sm:$0xff] %vm343, %v340
      %v346 = vld [vmem:[%s0] sm:$0xff]
      %v347 = vld [vmem:[%s0 + $0x8] sm:$0xff]
      %s348 = scalar_lea.vmem %s167, 8
      %v349 = vld [vmem:[%s348] sm:$0xff]
      %v351 = vsel %vm179, %v346, 0
      %v354 = vsel %vm179, %v347, 0
      %356 = vmatprep.subr.mxu0 0.0
      %357 = vmatpush1.msra.mxu0 0.0
      %358 = vmatprep.subr.mxu0 0.0
      %359 = vmatpush1.msra.mxu0 0.0
      %360 = vmatprep.subr.mxu0 0.0
      %361 = vmatpush1.msra.mxu0 0.0
      %362 = vmatprep.subr.mxu0 0.0
      %363 = vmatpush1.msra.mxu0 0.0
      %364 = vmatprep.subr.mxu0 0.0
      %365 = vmatpush1.msra.mxu0 0.0
      %366 = vmatprep.subr.mxu0 0.0
      %367 = vmatpush1.msra.mxu0 0.0
      %368 = vmatprep.subr.mxu0 0.0
      %369 = vmatpush1.msra.mxu0 0.0
      %370 = vmatprep.subr.mxu0 0.0
      %371 = vmatpush1.msra.mxu0 0.0
      %372 = vmatprep.subr.mxu0 0.0
      %373 = vmatpush1.msra.mxu0 0.0
      %374 = vmatprep.subr.mxu0 0.0
      %375 = vmatpush1.msra.mxu0 0.0
      %376 = vmatprep.subr.mxu0 0.0
      %377 = vmatpush1.msra.mxu0 0.0
      %378 = vmatprep.subr.mxu0 0.0
      %379 = vmatpush1.msra.mxu0 0.0
      %380 = vmatprep.subr.mxu0 0.0
      %381 = vmatpush1.msra.mxu0 0.0
      %382 = vmatprep.subr.mxu0 0.0
      %383 = vmatpush1.msra.mxu0 0.0
      %384 = vmatprep.subr.mxu0 0.0
      %385 = vmatpush1.msra.mxu0 0.0
      %386 = vmatprep.subr.mxu0 0.0
      %387 = vmatpush1.msra.mxu0 %v349
      %388 = vmatprep.subr.mxu0 0.0
      %389 = vmatpush2.msra.mxu0 0.0
      %390 = vmatprep.subr.mxu0 0.0
      %391 = vmatpush2.msra.mxu0 0.0
      %392 = vmatprep.subr.mxu0 0.0
      %393 = vmatpush2.msra.mxu0 0.0
      %394 = vmatprep.subr.mxu0 0.0
      %395 = vmatpush2.msra.mxu0 0.0
      %396 = vmatprep.subr.mxu0 0.0
      %397 = vmatpush2.msra.mxu0 0.0
      %398 = vmatprep.subr.mxu0 0.0
      %399 = vmatpush2.msra.mxu0 0.0
      %400 = vmatprep.subr.mxu0 0.0
      %401 = vmatpush2.msra.mxu0 0.0
      %402 = vmatprep.subr.mxu0 0.0
      %403 = vmatpush2.msra.mxu0 0.0
      %404 = vmatprep.subr.mxu0 0.0
      %405 = vmatpush2.msra.mxu0 0.0
      %406 = vmatprep.subr.mxu0 0.0
      %407 = vmatpush2.msra.mxu0 0.0
      %408 = vmatprep.subr.mxu0 0.0
      %409 = vmatpush2.msra.mxu0 0.0
      %410 = vmatprep.subr.mxu0 0.0
      %411 = vmatpush2.msra.mxu0 0.0
      %412 = vmatprep.subr.mxu0 0.0
      %413 = vmatpush2.msra.mxu0 0.0
      %414 = vmatprep.subr.mxu0 0.0
      %415 = vmatpush2.msra.mxu0 0.0
      %416 = vmatprep.subr.mxu0 0.0
      %417 = vmatpush2.msra.mxu0 0.0
      %418 = vmatprep.subr.mxu0 0.0
      %419 = vmatpush2.msra.mxu0 0.0
      %420 = vmatprep.mubr.f32.mxu0 0.0
      %421 = vmatmul.mubr.f32.gmra.mxu0 %v351
      %v422 = vpop.f32.mrf.mxu0
      %v423 = vadd.f32 0.0, %v422
      %v424 = vpop.f32.mrf.mxu0
      %425 = vmatprep.mubr.f32.mxu0 0.0
      %426 = vmatmul.mubr.f32.gmra.mxu0 %v354
      %v427 = vpop.f32.mrf.mxu0
      %v428 = vadd.f32 0.0, %v427
      %v429 = vpop.f32.mrf.mxu0
      %430 = vdwg.mxu0
      %v431 = vld [vmem:[%s1] sm:$0xff]
      %v433 = vsel %vm179, %v423, 0
      %v436 = vsel %vm179, %v428, 0
      %438 = vmatprep.subr.mxu0 0.0
      %439 = vmatpush1.msra.mxu0 0.0
      %440 = vmatprep.subr.mxu0 0.0
      %441 = vmatpush1.msra.mxu0 0.0
      %442 = vmatprep.subr.mxu0 0.0
      %443 = vmatpush1.msra.mxu0 0.0
      %444 = vmatprep.subr.mxu0 0.0
      %445 = vmatpush1.msra.mxu0 0.0
      %446 = vmatprep.subr.mxu0 0.0
      %447 = vmatpush1.msra.mxu0 0.0
      %448 = vmatprep.subr.mxu0 0.0
      %449 = vmatpush1.msra.mxu0 0.0
      %450 = vmatprep.subr.mxu0 0.0
      %451 = vmatpush1.msra.mxu0 0.0
      %452 = vmatprep.subr.mxu0 0.0
      %453 = vmatpush1.msra.mxu0 0.0
      %454 = vmatprep.subr.mxu0 0.0
      %455 = vmatpush1.msra.mxu0 0.0
      %456 = vmatprep.subr.mxu0 0.0
      %457 = vmatpush1.msra.mxu0 0.0
      %458 = vmatprep.subr.mxu0 0.0
      %459 = vmatpush1.msra.mxu0 0.0
      %460 = vmatprep.subr.mxu0 0.0
      %461 = vmatpush1.msra.mxu0 0.0
      %462 = vmatprep.subr.mxu0 0.0
      %463 = vmatpush1.msra.mxu0 0.0
      %464 = vmatprep.subr.mxu0 0.0
      %465 = vmatpush1.msra.mxu0 0.0
      %466 = vmatprep.subr.mxu0 0.0
      %467 = vmatpush1.msra.mxu0 0.0
      %468 = vmatprep.subr.mxu0 0.0
      %469 = vmatpush1.msra.mxu0 %v431
      %470 = vmatprep.subr.mxu0 0.0
      %471 = vmatpush2.msra.mxu0 0.0
      %472 = vmatprep.subr.mxu0 0.0
      %473 = vmatpush2.msra.mxu0 0.0
      %474 = vmatprep.subr.mxu0 0.0
      %475 = vmatpush2.msra.mxu0 0.0
      %476 = vmatprep.subr.mxu0 0.0
      %477 = vmatpush2.msra.mxu0 0.0
      %478 = vmatprep.subr.mxu0 0.0
      %479 = vmatpush2.msra.mxu0 0.0
      %480 = vmatprep.subr.mxu0 0.0
      %481 = vmatpush2.msra.mxu0 0.0
      %482 = vmatprep.subr.mxu0 0.0
      %483 = vmatpush2.msra.mxu0 0.0
      %484 = vmatprep.subr.mxu0 0.0
      %485 = vmatpush2.msra.mxu0 0.0
      %486 = vmatprep.subr.mxu0 0.0
      %487 = vmatpush2.msra.mxu0 0.0
      %488 = vmatprep.subr.mxu0 0.0
      %489 = vmatpush2.msra.mxu0 0.0
      %490 = vmatprep.subr.mxu0 0.0
      %491 = vmatpush2.msra.mxu0 0.0
      %492 = vmatprep.subr.mxu0 0.0
      %493 = vmatpush2.msra.mxu0 0.0
      %494 = vmatprep.subr.mxu0 0.0
      %495 = vmatpush2.msra.mxu0 0.0
      %496 = vmatprep.subr.mxu0 0.0
      %497 = vmatpush2.msra.mxu0 0.0
      %498 = vmatprep.subr.mxu0 0.0
      %499 = vmatpush2.msra.mxu0 0.0
      %500 = vmatprep.subr.mxu0 0.0
      %501 = vmatpush2.msra.mxu0 0.0
      %502 = vmatprep.mubr.f32.mxu0 0.0
      %503 = vmatmul.mubr.f32.gmra.mxu0 %v433
      %v504 = vpop.f32.mrf.mxu0
      %v505 = vadd.f32 0.0, %v504
      %v506 = vpop.f32.mrf.mxu0
      %507 = vmatprep.mubr.f32.mxu0 0.0
      %508 = vmatmul.mubr.f32.gmra.mxu0 %v436
      %v509 = vpop.f32.mrf.mxu0
      %v510 = vadd.f32 0.0, %v509
      %v511 = vpop.f32.mrf.mxu0
      %512 = vdwg.mxu0
      %s513 = scalar_lea.vmem %s174, 16
      %514 = vst.msk [vmem:[%s513] sm:$0xff] %vm343, %v505
      %515 = vst.msk [vmem:[%s513 + $0x8] sm:$0xff] %vm343, %v510
      %v516 = vld [vmem:[%s0] sm:$0xff]
      %v517 = vld [vmem:[%s0 + $0x8] sm:$0xff]
      %s518 = scalar_lea.vmem %s167, 16
      %v519 = vld [vmem:[%s518] sm:$0xff]
      %v521 = vsel %vm179, %v516, 0
      %v524 = vsel %vm179, %v517, 0
      %526 = vmatprep.subr.mxu0 0.0
      %527 = vmatpush1.msra.mxu0 0.0
      %528 = vmatprep.subr.mxu0 0.0
      %529 = vmatpush1.msra.mxu0 0.0
      %530 = vmatprep.subr.mxu0 0.0
      %531 = vmatpush1.msra.mxu0 0.0
      %532 = vmatprep.subr.mxu0 0.0
      %533 = vmatpush1.msra.mxu0 0.0
      %534 = vmatprep.subr.mxu0 0.0
      %535 = vmatpush1.msra.mxu0 0.0
      %536 = vmatprep.subr.mxu0 0.0
      %537 = vmatpush1.msra.mxu0 0.0
      %538 = vmatprep.subr.mxu0 0.0
      %539 = vmatpush1.msra.mxu0 0.0
      %540 = vmatprep.subr.mxu0 0.0
      %541 = vmatpush1.msra.mxu0 0.0
      %542 = vmatprep.subr.mxu0 0.0
      %543 = vmatpush1.msra.mxu0 0.0
      %544 = vmatprep.subr.mxu0 0.0
      %545 = vmatpush1.msra.mxu0 0.0
      %546 = vmatprep.subr.mxu0 0.0
      %547 = vmatpush1.msra.mxu0 0.0
      %548 = vmatprep.subr.mxu0 0.0
      %549 = vmatpush1.msra.mxu0 0.0
      %550 = vmatprep.subr.mxu0 0.0
      %551 = vmatpush1.msra.mxu0 0.0
      %552 = vmatprep.subr.mxu0 0.0
      %553 = vmatpush1.msra.mxu0 0.0
      %554 = vmatprep.subr.mxu0 0.0
      %555 = vmatpush1.msra.mxu0 0.0
      %556 = vmatprep.subr.mxu0 0.0
      %557 = vmatpush1.msra.mxu0 %v519
      %558 = vmatprep.subr.mxu0 0.0
      %559 = vmatpush2.msra.mxu0 0.0
      %560 = vmatprep.subr.mxu0 0.0
      %561 = vmatpush2.msra.mxu0 0.0
      %562 = vmatprep.subr.mxu0 0.0
      %563 = vmatpush2.msra.mxu0 0.0
      %564 = vmatprep.subr.mxu0 0.0
      %565 = vmatpush2.msra.mxu0 0.0
      %566 = vmatprep.subr.mxu0 0.0
      %567 = vmatpush2.msra.mxu0 0.0
      %568 = vmatprep.subr.mxu0 0.0
      %569 = vmatpush2.msra.mxu0 0.0
      %570 = vmatprep.subr.mxu0 0.0
      %571 = vmatpush2.msra.mxu0 0.0
      %572 = vmatprep.subr.mxu0 0.0
      %573 = vmatpush2.msra.mxu0 0.0
      %574 = vmatprep.subr.mxu0 0.0
      %575 = vmatpush2.msra.mxu0 0.0
      %576 = vmatprep.subr.mxu0 0.0
      %577 = vmatpush2.msra.mxu0 0.0
      %578 = vmatprep.subr.mxu0 0.0
      %579 = vmatpush2.msra.mxu0 0.0
      %580 = vmatprep.subr.mxu0 0.0
      %581 = vmatpush2.msra.mxu0 0.0
      %582 = vmatprep.subr.mxu0 0.0
      %583 = vmatpush2.msra.mxu0 0.0
      %584 = vmatprep.subr.mxu0 0.0
      %585 = vmatpush2.msra.mxu0 0.0
      %586 = vmatprep.subr.mxu0 0.0
      %587 = vmatpush2.msra.mxu0 0.0
      %588 = vmatprep.subr.mxu0 0.0
      %589 = vmatpush2.msra.mxu0 0.0
      %590 = vmatprep.mubr.f32.mxu0 0.0
      %591 = vmatmul.mubr.f32.gmra.mxu0 %v521
      %v592 = vpop.f32.mrf.mxu0
      %v593 = vadd.f32 0.0, %v592
      %v594 = vpop.f32.mrf.mxu0
      %595 = vmatprep.mubr.f32.mxu0 0.0
      %596 = vmatmul.mubr.f32.gmra.mxu0 %v524
      %v597 = vpop.f32.mrf.mxu0
      %v598 = vadd.f32 0.0, %v597
      %v599 = vpop.f32.mrf.mxu0
      %600 = vdwg.mxu0
      %v601 = vld [vmem:[%s1] sm:$0xff]
      %v603 = vsel %vm179, %v593, 0
      %v606 = vsel %vm179, %v598, 0
      %608 = vmatprep.subr.mxu0 0.0
      %609 = vmatpush1.msra.mxu0 0.0
      %610 = vmatprep.subr.mxu0 0.0
      %611 = vmatpush1.msra.mxu0 0.0
      %612 = vmatprep.subr.mxu0 0.0
      %613 = vmatpush1.msra.mxu0 0.0
      %614 = vmatprep.subr.mxu0 0.0
      %615 = vmatpush1.msra.mxu0 0.0
      %616 = vmatprep.subr.mxu0 0.0
      %617 = vmatpush1.msra.mxu0 0.0
      %618 = vmatprep.subr.mxu0 0.0
      %619 = vmatpush1.msra.mxu0 0.0
      %620 = vmatprep.subr.mxu0 0.0
      %621 = vmatpush1.msra.mxu0 0.0
      %622 = vmatprep.subr.mxu0 0.0
      %623 = vmatpush1.msra.mxu0 0.0
      %624 = vmatprep.subr.mxu0 0.0
      %625 = vmatpush1.msra.mxu0 0.0
      %626 = vmatprep.subr.mxu0 0.0
      %627 = vmatpush1.msra.mxu0 0.0
      %628 = vmatprep.subr.mxu0 0.0
      %629 = vmatpush1.msra.mxu0 0.0
      %630 = vmatprep.subr.mxu0 0.0
      %631 = vmatpush1.msra.mxu0 0.0
      %632 = vmatprep.subr.mxu0 0.0
      %633 = vmatpush1.msra.mxu0 0.0
      %634 = vmatprep.subr.mxu0 0.0
      %635 = vmatpush1.msra.mxu0 0.0
      %636 = vmatprep.subr.mxu0 0.0
      %637 = vmatpush1.msra.mxu0 0.0
      %638 = vmatprep.subr.mxu0 0.0
      %639 = vmatpush1.msra.mxu0 %v601
      %640 = vmatprep.subr.mxu0 0.0
      %641 = vmatpush2.msra.mxu0 0.0
      %642 = vmatprep.subr.mxu0 0.0
      %643 = vmatpush2.msra.mxu0 0.0
      %644 = vmatprep.subr.mxu0 0.0
      %645 = vmatpush2.msra.mxu0 0.0
      %646 = vmatprep.subr.mxu0 0.0
      %647 = vmatpush2.msra.mxu0 0.0
      %648 = vmatprep.subr.mxu0 0.0
      %649 = vmatpush2.msra.mxu0 0.0
      %650 = vmatprep.subr.mxu0 0.0
      %651 = vmatpush2.msra.mxu0 0.0
      %652 = vmatprep.subr.mxu0 0.0
      %653 = vmatpush2.msra.mxu0 0.0
      %654 = vmatprep.subr.mxu0 0.0
      %655 = vmatpush2.msra.mxu0 0.0
      %656 = vmatprep.subr.mxu0 0.0
      %657 = vmatpush2.msra.mxu0 0.0
      %658 = vmatprep.subr.mxu0 0.0
      %659 = vmatpush2.msra.mxu0 0.0
      %660 = vmatprep.subr.mxu0 0.0
      %661 = vmatpush2.msra.mxu0 0.0
      %662 = vmatprep.subr.mxu0 0.0
      %663 = vmatpush2.msra.mxu0 0.0
      %664 = vmatprep.subr.mxu0 0.0
      %665 = vmatpush2.msra.mxu0 0.0
      %666 = vmatprep.subr.mxu0 0.0
      %667 = vmatpush2.msra.mxu0 0.0
      %668 = vmatprep.subr.mxu0 0.0
      %669 = vmatpush2.msra.mxu0 0.0
      %670 = vmatprep.subr.mxu0 0.0
      %671 = vmatpush2.msra.mxu0 0.0
      %672 = vmatprep.mubr.f32.mxu0 0.0
      %673 = vmatmul.mubr.f32.gmra.mxu0 %v603
      %v674 = vpop.f32.mrf.mxu0
      %v675 = vadd.f32 0.0, %v674
      %v676 = vpop.f32.mrf.mxu0
      %677 = vmatprep.mubr.f32.mxu0 0.0
      %678 = vmatmul.mubr.f32.gmra.mxu0 %v606
      %v679 = vpop.f32.mrf.mxu0
      %v680 = vadd.f32 0.0, %v679
      %v681 = vpop.f32.mrf.mxu0
      %682 = vdwg.mxu0
      %s683 = scalar_lea.vmem %s174, 32
      %684 = vst.msk [vmem:[%s683] sm:$0xff] %vm343, %v675
      %685 = vst.msk [vmem:[%s683 + $0x8] sm:$0xff] %vm343, %v680
      %v686 = vld [vmem:[%s0] sm:$0xff]
      %v687 = vld [vmem:[%s0 + $0x8] sm:$0xff]
      %s688 = scalar_lea.vmem %s167, 24
      %v689 = vld [vmem:[%s688] sm:$0xff]
      %v691 = vsel %vm179, %v686, 0
      %v694 = vsel %vm179, %v687, 0
      %696 = vmatprep.subr.mxu0 0.0
      %697 = vmatpush1.msra.mxu0 0.0
      %698 = vmatprep.subr.mxu0 0.0
      %699 = vmatpush1.msra.mxu0 0.0
      %700 = vmatprep.subr.mxu0 0.0
      %701 = vmatpush1.msra.mxu0 0.0
      %702 = vmatprep.subr.mxu0 0.0
      %703 = vmatpush1.msra.mxu0 0.0
      %704 = vmatprep.subr.mxu0 0.0
      %705 = vmatpush1.msra.mxu0 0.0
      %706 = vmatprep.subr.mxu0 0.0
      %707 = vmatpush1.msra.mxu0 0.0
      %708 = vmatprep.subr.mxu0 0.0
      %709 = vmatpush1.msra.mxu0 0.0
      %710 = vmatprep.subr.mxu0 0.0
      %711 = vmatpush1.msra.mxu0 0.0
      %712 = vmatprep.subr.mxu0 0.0
      %713 = vmatpush1.msra.mxu0 0.0
      %714 = vmatprep.subr.mxu0 0.0
      %715 = vmatpush1.msra.mxu0 0.0
      %716 = vmatprep.subr.mxu0 0.0
      %717 = vmatpush1.msra.mxu0 0.0
      %718 = vmatprep.subr.mxu0 0.0
      %719 = vmatpush1.msra.mxu0 0.0
      %720 = vmatprep.subr.mxu0 0.0
      %721 = vmatpush1.msra.mxu0 0.0
      %722 = vmatprep.subr.mxu0 0.0
      %723 = vmatpush1.msra.mxu0 0.0
      %724 = vmatprep.subr.mxu0 0.0
      %725 = vmatpush1.msra.mxu0 0.0
      %726 = vmatprep.subr.mxu0 0.0
      %727 = vmatpush1.msra.mxu0 %v689
      %728 = vmatprep.subr.mxu0 0.0
      %729 = vmatpush2.msra.mxu0 0.0
      %730 = vmatprep.subr.mxu0 0.0
      %731 = vmatpush2.msra.mxu0 0.0
      %732 = vmatprep.subr.mxu0 0.0
      %733 = vmatpush2.msra.mxu0 0.0
      %734 = vmatprep.subr.mxu0 0.0
      %735 = vmatpush2.msra.mxu0 0.0
      %736 = vmatprep.subr.mxu0 0.0
      %737 = vmatpush2.msra.mxu0 0.0
      %738 = vmatprep.subr.mxu0 0.0
      %739 = vmatpush2.msra.mxu0 0.0
      %740 = vmatprep.subr.mxu0 0.0
      %741 = vmatpush2.msra.mxu0 0.0
      %742 = vmatprep.subr.mxu0 0.0
      %743 = vmatpush2.msra.mxu0 0.0
      %744 = vmatprep.subr.mxu0 0.0
      %745 = vmatpush2.msra.mxu0 0.0
      %746 = vmatprep.subr.mxu0 0.0
      %747 = vmatpush2.msra.mxu0 0.0
      %748 = vmatprep.subr.mxu0 0.0
      %749 = vmatpush2.msra.mxu0 0.0
      %750 = vmatprep.subr.mxu0 0.0
      %751 = vmatpush2.msra.mxu0 0.0
      %752 = vmatprep.subr.mxu0 0.0
      %753 = vmatpush2.msra.mxu0 0.0
      %754 = vmatprep.subr.mxu0 0.0
      %755 = vmatpush2.msra.mxu0 0.0
      %756 = vmatprep.subr.mxu0 0.0
      %757 = vmatpush2.msra.mxu0 0.0
      %758 = vmatprep.subr.mxu0 0.0
      %759 = vmatpush2.msra.mxu0 0.0
      %760 = vmatprep.mubr.f32.mxu0 0.0
      %761 = vmatmul.mubr.f32.gmra.mxu0 %v691
      %v762 = vpop.f32.mrf.mxu0
      %v763 = vadd.f32 0.0, %v762
      %v764 = vpop.f32.mrf.mxu0
      %765 = vmatprep.mubr.f32.mxu0 0.0
      %766 = vmatmul.mubr.f32.gmra.mxu0 %v694
      %v767 = vpop.f32.mrf.mxu0
      %v768 = vadd.f32 0.0, %v767
      %v769 = vpop.f32.mrf.mxu0
      %770 = vdwg.mxu0
      %v771 = vld [vmem:[%s1] sm:$0xff]
      %v773 = vsel %vm179, %v763, 0
      %v776 = vsel %vm179, %v768, 0
      %778 = vmatprep.subr.mxu0 0.0
      %779 = vmatpush1.msra.mxu0 0.0
      %780 = vmatprep.subr.mxu0 0.0
      %781 = vmatpush1.msra.mxu0 0.0
      %782 = vmatprep.subr.mxu0 0.0
      %783 = vmatpush1.msra.mxu0 0.0
      %784 = vmatprep.subr.mxu0 0.0
      %785 = vmatpush1.msra.mxu0 0.0
      %786 = vmatprep.subr.mxu0 0.0
      %787 = vmatpush1.msra.mxu0 0.0
      %788 = vmatprep.subr.mxu0 0.0
      %789 = vmatpush1.msra.mxu0 0.0
      %790 = vmatprep.subr.mxu0 0.0
      %791 = vmatpush1.msra.mxu0 0.0
      %792 = vmatprep.subr.mxu0 0.0
      %793 = vmatpush1.msra.mxu0 0.0
      %794 = vmatprep.subr.mxu0 0.0
      %795 = vmatpush1.msra.mxu0 0.0
      %796 = vmatprep.subr.mxu0 0.0
      %797 = vmatpush1.msra.mxu0 0.0
      %798 = vmatprep.subr.mxu0 0.0
      %799 = vmatpush1.msra.mxu0 0.0
      %800 = vmatprep.subr.mxu0 0.0
      %801 = vmatpush1.msra.mxu0 0.0
      %802 = vmatprep.subr.mxu0 0.0
      %803 = vmatpush1.msra.mxu0 0.0
      %804 = vmatprep.subr.mxu0 0.0
      %805 = vmatpush1.msra.mxu0 0.0
      %806 = vmatprep.subr.mxu0 0.0
      %807 = vmatpush1.msra.mxu0 0.0
      %808 = vmatprep.subr.mxu0 0.0
      %809 = vmatpush1.msra.mxu0 %v771
      %810 = vmatprep.subr.mxu0 0.0
      %811 = vmatpush2.msra.mxu0 0.0
      %812 = vmatprep.subr.mxu0 0.0
      %813 = vmatpush2.msra.mxu0 0.0
      %814 = vmatprep.subr.mxu0 0.0
      %815 = vmatpush2.msra.mxu0 0.0
      %816 = vmatprep.subr.mxu0 0.0
      %817 = vmatpush2.msra.mxu0 0.0
      %818 = vmatprep.subr.mxu0 0.0
      %819 = vmatpush2.msra.mxu0 0.0
      %820 = vmatprep.subr.mxu0 0.0
      %821 = vmatpush2.msra.mxu0 0.0
      %822 = vmatprep.subr.mxu0 0.0
      %823 = vmatpush2.msra.mxu0 0.0
      %824 = vmatprep.subr.mxu0 0.0
      %825 = vmatpush2.msra.mxu0 0.0
      %826 = vmatprep.subr.mxu0 0.0
      %827 = vmatpush2.msra.mxu0 0.0
      %828 = vmatprep.subr.mxu0 0.0
      %829 = vmatpush2.msra.mxu0 0.0
      %830 = vmatprep.subr.mxu0 0.0
      %831 = vmatpush2.msra.mxu0 0.0
      %832 = vmatprep.subr.mxu0 0.0
      %833 = vmatpush2.msra.mxu0 0.0
      %834 = vmatprep.subr.mxu0 0.0
      %835 = vmatpush2.msra.mxu0 0.0
      %836 = vmatprep.subr.mxu0 0.0
      %837 = vmatpush2.msra.mxu0 0.0
      %838 = vmatprep.subr.mxu0 0.0
      %839 = vmatpush2.msra.mxu0 0.0
      %840 = vmatprep.subr.mxu0 0.0
      %841 = vmatpush2.msra.mxu0 0.0
      %842 = vmatprep.mubr.f32.mxu0 0.0
      %843 = vmatmul.mubr.f32.gmra.mxu0 %v773
      %v844 = vpop.f32.mrf.mxu0
      %v845 = vadd.f32 0.0, %v844
      %v846 = vpop.f32.mrf.mxu0
      %847 = vmatprep.mubr.f32.mxu0 0.0
      %848 = vmatmul.mubr.f32.gmra.mxu0 %v776
      %v849 = vpop.f32.mrf.mxu0
      %v850 = vadd.f32 0.0, %v849
      %v851 = vpop.f32.mrf.mxu0
      %852 = vdwg.mxu0
      %s853 = scalar_lea.vmem %s174, 48
      %854 = vst.msk [vmem:[%s853] sm:$0xff] %vm343, %v845
      %855 = vst.msk [vmem:[%s853 + $0x8] sm:$0xff] %vm343, %v850
      %s856 = smul.u32 4, %s14
      %p857 = scmp.lt.s32.totalorder %s856, 7
      %s858 = scalar_select %p857, %s856, 7
      %s859 = smul.addr %s858, 2
      %s860 = smul.addr %s859, 8
      %s861 = scalar_lea.vmem %s3, %s860
      // Predicated region
      $region33: #{upsample_forward.4} parent=31 // pred_check
        %p862 = pneg %p100
      $region34: #{upsample_forward.4} parent=31 // pred_check_branch
        %864 = sbr.rel (%p862) target = $region36
      $region35: #{upsample_forward.4} parent=31 // pred_region
        %s865 = smul.u32 4, %s14
      $region36: #{upsample_forward.4} parent=31 // pred_fallthru
        _
    $region32: #{upsample_forward.4} parent=5 // pred_fallthru
      _
    %p866 = scmp.le.s32.totalorder 2, %s9
    // Predicated region
    $region37: #{upsample_forward.4} parent=5 // pred_check
      %p867 = pneg %p866
    $region38: #{upsample_forward.4} parent=5 // pred_check_branch
      %869 = sbr.rel (%p867) target = $region40
    $region39: #{upsample_forward.4} parent=5 // pred_region
      %s870 = ssub.s32 %s9, 2
      // Predicated region
      $region41: #{upsample_forward.4} parent=39 // pred_check
        %p871 = pneg %p106
      $region42: #{upsample_forward.4} parent=39 // pred_check_branch
        %873 = sbr.rel (%p871) target = $region44
      $region43: #{upsample_forward.4} parent=39 // pred_region
        %s874 = smul.u32 4, %s15
        %p875 = scmp.lt.s32.totalorder %s874, 7
        %s876 = scalar_select %p875, %s874, 7
        %s877 = smul.addr %s876, 2
        %s878 = smul.addr %s877, 8
        %s879 = scalar_lea.vmem %s3, %s878
      $region44: #{upsample_forward.4} parent=39 // pred_fallthru
        _
    $region40: #{upsample_forward.4} parent=5 // pred_fallthru
      _
  $region6: #{upsample_forward.4} parent=0 // loop_footer
    %s13 = sadd.s32 1, %s9
  $region7: #{upsample_forward.4} parent=0 // loop_footer_branch
    %8 = sbr.rel target = $region3
  $region8: #{upsample_forward.4} parent=0 // loop_exit
    _

// kernel: upsample_forward.7
$region0: #{upsample_forward.7}
  #allocation0 [shape = 'u32[]', space=smem, size = 0x4, offset = 0x4, fixed_abs, tag = 'smem constant byte address 0x4 - core index']
  #allocation1 [shape = 'u32[144,128]{1,0:T(1,128)}', space=vmem, size = 0x12000, scoped, tag = 'internal scratch']
  %s0 = inlined_call_operand.vmem [shape: f32[2,8,256], index: 0, kind: input, shape index: {}]
  %s1 = inlined_call_operand.vmem [shape: f32[8,1], index: 1, kind: input, shape index: {}]
  %s2 = inlined_call_operand.vmem [shape: f32[8,1], index: 2, kind: input, shape index: {}]
  %s3 = inlined_call_operand.vmem [shape: f32[2,8,256], index: 3, kind: output, shape index: {}]
  %s4 = sld [smem:[#allocation0]]
  $region45: #{upsample_forward.7} parent=0
    _
  %s6 = ssub.s32 1, %s4
  %s7 = scalar_select 0, %s6, %s4
  loop: start=0, step=1, limit=4
  $region2: #{upsample_forward.7} parent=0 // loop_pre_header
    _
  $region3: #{upsample_forward.7} parent=0 // loop_header
    %s9 = sphi 0, %s13
    %p10 = scmp.ge.s32.totalorder %s9, 4
    %s19 = sphi 0, %s21
    %s22 = sphi 0, %s19
    %s23 = sphi 0, %s22
    %s39 = sphi 0, %s23
    %s43 = sphi 0, %s43
    %s45 = sphi 0, %s43
    %s46 = sphi 0, %s45
    %s60 = sphi 0, %s46
    %s64 = sphi 0, %s64
    %s66 = sphi 0, %s64
    %s67 = sphi 0, %s66
    %s81 = sphi 0, %s67
    %s87 = sphi 0, %s89
    %s90 = sphi 0, %s87
    %s91 = sphi 0, %s90
    %s107 = sphi 0, %s91
  $region4: #{upsample_forward.7} parent=0 // loop_header_branch
    %12 = sbr.rel (%p10) target = $region8
  $region5: #{upsample_forward.7} parent=0 // loop_body
    %s14 = ssub.s32 %s9, 1
    %s15 = ssub.s32 %s9, 2
    %s16 = sadd.s32 %s9, 1
    %s17 = ssub.s32 %s9, %s16
    %p18 = scmp.eq.s32.totalorder %s17, 0
    %s20 = sadd.s32 %s19, 1
    %s21 = scalar_select %p18, %s19, %s20
    %p24 = pneg %p18
    %p25 = scmp.eq.s32.totalorder %s9, 1
    %p26 = por %p24, %p25
    %p27 = scmp.ne.s32.totalorder %s19, %s22
    %p28 = scmp.eq.s32.totalorder %s9, 0
    %p29 = por %p27, %p28
    %p30 = scmp.ne.s32.totalorder %s19, %s22
    %p31 = scmp.eq.s32.totalorder %s14, 1
    %p32 = por %p30, %p31
    %p33 = scmp.ne.s32.totalorder %s22, %s23
    %p34 = scmp.eq.s32.totalorder %s14, 0
    %p35 = por %p33, %p34
    %p36 = scmp.ne.s32.totalorder %s22, %s23
    %p37 = scmp.eq.s32.totalorder %s15, 1
    %p38 = por %p36, %p37
    %p40 = scmp.ne.s32.totalorder %s23, %s39
    %p41 = scmp.eq.s32.totalorder %s15, 0
    %p42 = por %p40, %p41
    %s44 = sadd.s32 %s43, 1
    %p47 = scmp.eq.s32.totalorder %s9, 1
    %p48 = scmp.ne.s32.totalorder %s43, %s45
    %p49 = scmp.eq.s32.totalorder %s9, 0
    %p50 = por %p48, %p49
    %p51 = scmp.ne.s32.totalorder %s43, %s45
    %p52 = scmp.eq.s32.totalorder %s14, 1
    %p53 = por %p51, %p52
    %p54 = scmp.ne.s32.totalorder %s45, %s46
    %p55 = scmp.eq.s32.totalorder %s14, 0
    %p56 = por %p54, %p55
    %p57 = scmp.ne.s32.totalorder %s45, %s46
    %p58 = scmp.eq.s32.totalorder %s15, 1
    %p59 = por %p57, %p58
    %p61 = scmp.ne.s32.totalorder %s46, %s60
    %p62 = scmp.eq.s32.totalorder %s15, 0
    %p63 = por %p61, %p62
    %s65 = sadd.s32 %s64, 1
    %p68 = scmp.eq.s32.totalorder %s9, 1
    %p69 = scmp.ne.s32.totalorder %s64, %s66
    %p70 = scmp.eq.s32.totalorder %s9, 0
    %p71 = por %p69, %p70
    %p72 = scmp.ne.s32.totalorder %s64, %s66
    %p73 = scmp.eq.s32.totalorder %s14, 1
    %p74 = por %p72, %p73
    %p75 = scmp.ne.s32.totalorder %s66, %s67
    %p76 = scmp.eq.s32.totalorder %s14, 0
    %p77 = por %p75, %p76
    %p78 = scmp.ne.s32.totalorder %s66, %s67
    %p79 = scmp.eq.s32.totalorder %s15, 1
    %p80 = por %p78, %p79
    %p82 = scmp.ne.s32.totalorder %s67, %s81
    %p83 = scmp.eq.s32.totalorder %s15, 0
    %p84 = por %p82, %p83
    %s85 = ssub.s32 %s9, %s16
    %p86 = scmp.eq.s32.totalorder %s85, 0
    %s88 = sadd.s32 %s87, 1
    %s89 = scalar_select %p86, %s87, %s88
    %p92 = pneg %p86
    %p93 = scmp.eq.s32.totalorder %s9, 1
    %p94 = por %p92, %p93
    %p95 = scmp.ne.s32.totalorder %s87, %s90
    %p96 = scmp.eq.s32.totalorder %s9, 0
    %p97 = por %p95, %p96
    %p98 = scmp.ne.s32.totalorder %s87, %s90
    %p99 = scmp.eq.s32.totalorder %s14, 1
    %p100 = por %p98, %p99
    %p101 = scmp.ne.s32.totalorder %s90, %s91
    %p102 = scmp.eq.s32.totalorder %s14, 0
    %p103 = por %p101, %p102
    %p104 = scmp.ne.s32.totalorder %s90, %s91
    %p105 = scmp.eq.s32.totalorder %s15, 1
    %p106 = por %p104, %p105
    %p108 = scmp.ne.s32.totalorder %s91, %s107
    %p109 = scmp.eq.s32.totalorder %s15, 0
    %p110 = por %p108, %p109
    %p111 = scmp.le.s32.totalorder 1, %s9
    %p112 = scmp.lt.s32.totalorder %s9, 3
    %p113 = pnand %p111, %p112
    %p114 = pneg %p113
    // Predicated region
    $region9: #{upsample_forward.7} parent=5 // pred_check
      _
    $region10: #{upsample_forward.7} parent=5 // pred_check_branch
      %116 = sbr.rel (%p113) target = $region12
    $region11: #{upsample_forward.7} parent=5 // pred_region
      %s117 = ssub.s32 %s9, 1
      // Predicated region
      $region13: #{upsample_forward.7} parent=11 // pred_check
        %p118 = pneg %p56
      $region14: #{upsample_forward.7} parent=11 // pred_check_branch
        %120 = sbr.rel (%p118) target = $region16
      $region15: #{upsample_forward.7} parent=11 // pred_region
        _
      $region16: #{upsample_forward.7} parent=11 // pred_fallthru
        _
      // Predicated region
      $region17: #{upsample_forward.7} parent=11 // pred_check
        %p121 = pneg %p77
      $region18: #{upsample_forward.7} parent=11 // pred_check_branch
        %123 = sbr.rel (%p121) target = $region20
      $region19: #{upsample_forward.7} parent=11 // pred_region
        _
      $region20: #{upsample_forward.7} parent=11 // pred_fallthru
        _
    $region12: #{upsample_forward.7} parent=5 // pred_fallthru
      _
    %p124 = scmp.lt.s32.totalorder %s9, 2
    // Predicated region
    $region21: #{upsample_forward.7} parent=5 // pred_check
      %p125 = pneg %p124
    $region22: #{upsample_forward.7} parent=5 // pred_check_branch
      %127 = sbr.rel (%p125) target = $region24
    $region23: #{upsample_forward.7} parent=5 // pred_region
      // Predicated region
      $region25: #{upsample_forward.7} parent=23 // pred_check
        %p128 = pneg %p29
      $region26: #{upsample_forward.7} parent=23 // pred_check_branch
        %130 = sbr.rel (%p128) target = $region28
      $region27: #{upsample_forward.7} parent=23 // pred_region
        %p131 = scmp.lt.s32.totalorder %s9, 1
        %s132 = scalar_select %p131, %s9, 1
        %s133 = smul.addr %s132, 2
        %s134 = smul.addr %s133, 8
        %s135 = scalar_lea.vmem %s0, %s134
      $region28: #{upsample_forward.7} parent=23 // pred_fallthru
        _
    $region24: #{upsample_forward.7} parent=5 // pred_fallthru
      _
    %p136 = scmp.le.s32.totalorder 1, %s9
    %p137 = scmp.lt.s32.totalorder %s9, 3
    %p138 = pnand %p136, %p137
    %p139 = pneg %p138
    // Predicated region
    $region29: #{upsample_forward.7} parent=5 // pred_check
      _
    $region30: #{upsample_forward.7} parent=5 // pred_check_branch
      %141 = sbr.rel (%p138) target = $region32
    $region31: #{upsample_forward.7} parent=5 // pred_region
      %s142 = ssub.s32 %s9, 1
      %p143 = scmp.lt.s32.totalorder %s14, 1
      %s144 = scalar_select %p143, %s14, 1
      %s145 = smul.addr %s144, 2
      %s146 = smul.addr %s145, 8
      %s147 = scalar_lea.vmem %s0, %s146
      %p148 = pneg %p35
      %p149 = pneg %p32
      %p150 = pneg %p56
      %p151 = pneg %p53
      %p152 = pneg %p77
      %p153 = pneg %p74
      %p154 = pneg %p103
      %p155 = pneg %p100
      %p156 = scmp.lt.s32.totalorder %s14, 1
      %s157 = scalar_select %p156, %s14, 1
      %s158 = smul.addr %s157, 2
      %s159 = smul.addr %s158, 8
      %s160 = scalar_lea.vmem %s3, %s159
      %p161 = scmp.lt.s32.totalorder %s14, 1
      %s162 = scalar_select %p161, %s14, 1
      %s163 = smul.addr %s162, 2
      %s164 = smul.addr %s163, 8
      %s165 = scalar_lea.vmem %s0, %s164
      %p166 = scmp.lt.s32.totalorder %s14, 1
      %s167 = scalar_select %p166, %s14, 1
      %s168 = smul.addr %s167, 2
      %s169 = smul.addr %s168, 8
      %s170 = scalar_lea.vmem %s3, %s169
      %v171 = vld [vmem:[%s165] sm:$0xff]
      %v172 = vld [vmem:[%s165 + $0x8] sm:$0xff]
      %v173 = vld [vmem:[%s1] sm:$0xff]
      %175 = vset.pattern.permute.xlu0 0
      %176 = vperm.xlu0 %175, %v173
      %v177 = vpop.permute.xlu0 %176
      %v179 = vmul.f32 %v171, %v177
      %v180 = vmul.f32 %v172, %v177
      %v181 = vld [vmem:[%s2] sm:$0xff]
      %183 = vset.pattern.permute.xlu0 0
      %184 = vperm.xlu0 %183, %v181
      %v185 = vpop.permute.xlu0 %184
      %v187 = vadd.f32 %v179, %v185
      %v188 = vadd.f32 %v180, %v185
      %189 = vst [vmem:[%s170] sm:$0xff] %v187
      %190 = vst [vmem:[%s170 + $0x8] sm:$0xff] %v188
      %p191 = scmp.lt.s32.totalorder %s14, 1
      %s192 = scalar_select %p191, %s14, 1
      %s193 = smul.addr %s192, 2
      %s194 = smul.addr %s193, 8
      %s195 = scalar_lea.vmem %s3, %s194
      // Predicated region
      $region33: #{upsample_forward.7} parent=31 // pred_check
        %p196 = pneg %p100
      $region34: #{upsample_forward.7} parent=31 // pred_check_branch
        %198 = sbr.rel (%p196) target = $region36
      $region35: #{upsample_forward.7} parent=31 // pred_region
        _
      $region36: #{upsample_forward.7} parent=31 // pred_fallthru
        _
    $region32: #{upsample_forward.7} parent=5 // pred_fallthru
      _
    %p199 = scmp.le.s32.totalorder 2, %s9
    // Predicated region
    $region37: #{upsample_forward.7} parent=5 // pred_check
      %p200 = pneg %p199
    $region38: #{upsample_forward.7} parent=5 // pred_check_branch
      %202 = sbr.rel (%p200) target = $region40
    $region39: #{upsample_forward.7} parent=5 // pred_region
      %s203 = ssub.s32 %s9, 2
      // Predicated region
      $region41: #{upsample_forward.7} parent=39 // pred_check
        %p204 = pneg %p106
      $region42: #{upsample_forward.7} parent=39 // pred_check_branch
        %206 = sbr.rel (%p204) target = $region44
      $region43: #{upsample_forward.7} parent=39 // pred_region
        %p207 = scmp.lt.s32.totalorder %s15, 1
        %s208 = scalar_select %p207, %s15, 1
        %s209 = smul.addr %s208, 2
        %s210 = smul.addr %s209, 8
        %s211 = scalar_lea.vmem %s3, %s210
      $region44: #{upsample_forward.7} parent=39 // pred_fallthru
        _
    $region40: #{upsample_forward.7} parent=5 // pred_fallthru
      _
  $region6: #{upsample_forward.7} parent=0 // loop_footer
    %s13 = sadd.s32 1, %s9
  $region7: #{upsample_forward.7} parent=0 // loop_footer_branch
    %8 = sbr.rel target = $region3
  $region8: #{upsample_forward.7} parent=0 // loop_exit
    _

// kernel: upsample_forward.6
$region0: #{upsample_forward.6}
  #allocation0 [shape = 'u32[]', space=smem, size = 0x4, offset = 0x4, fixed_abs, tag = 'smem constant byte address 0x4 - core index']
  #allocation1 [shape = 'u32[144,128]{1,0:T(1,128)}', space=vmem, size = 0x12000, scoped, tag = 'internal scratch']
  %s0 = inlined_call_operand.vmem [shape: f32[2,8,256], index: 0, kind: input, shape index: {}]
  %s1 = inlined_call_operand.vmem [shape: f32[8,1], index: 1, kind: input, shape index: {}]
  %s2 = inlined_call_operand.vmem [shape: f32[8,1], index: 2, kind: input, shape index: {}]
  %s3 = inlined_call_operand.vmem [shape: f32[9,8,8], index: 3, kind: input, shape index: {}]
  %s4 = inlined_call_operand.vmem [shape: f32[8,1], index: 4, kind: input, shape index: {}]
  %s5 = inlined_call_operand.vmem [shape: f32[9,256], index: 5, kind: input, shape index: {}]
  %s6 = inlined_call_operand.vmem [shape: f32[2,8,256], index: 6, kind: output, shape index: {0}]
  %s7 = inlined_call_operand.vmem [shape: f32[2,8,1], index: 7, kind: output, shape index: {1}]
  %s8 = inlined_call_operand.vmem [shape: f32[2,8,1], index: 8, kind: output, shape index: {2}]
  %9 = xla_tuple %s6, %s7, %s8
  %s10 = sld [smem:[#allocation0]]
  $region73: #{upsample_forward.6} parent=0
    _
  %s12 = ssub.s32 1, %s10
  %s13 = scalar_select 0, %s12, %s10
  loop: start=0, step=1, limit=4
  $region2: #{upsample_forward.6} parent=0 // loop_pre_header
    _
  $region3: #{upsample_forward.6} parent=0 // loop_header
    %s15 = sphi 0, %s19
    %p16 = scmp.ge.s32.totalorder %s15, 4
    %s25 = sphi 0, %s27
    %s28 = sphi 0, %s25
    %s29 = sphi 0, %s28
    %s45 = sphi 0, %s29
    %s49 = sphi 0, %s49
    %s51 = sphi 0, %s49
    %s52 = sphi 0, %s51
    %s66 = sphi 0, %s52
    %s70 = sphi 0, %s70
    %s72 = sphi 0, %s70
    %s73 = sphi 0, %s72
    %s87 = sphi 0, %s73
    %s91 = sphi 0, %s91
    %s93 = sphi 0, %s91
    %s94 = sphi 0, %s93
    %s108 = sphi 0, %s94
    %s112 = sphi 0, %s112
    %s114 = sphi 0, %s112
    %s115 = sphi 0, %s114
    %s129 = sphi 0, %s115
    %s133 = sphi 0, %s133
    %s135 = sphi 0, %s133
    %s136 = sphi 0, %s135
    %s150 = sphi 0, %s136
    %s156 = sphi 0, %s158
    %s159 = sphi 0, %s156
    %s160 = sphi 0, %s159
    %s176 = sphi 0, %s160
    %s182 = sphi 0, %s184
    %s185 = sphi 0, %s182
    %s186 = sphi 0, %s185
    %s202 = sphi 0, %s186
    %s208 = sphi 0, %s210
    %s211 = sphi 0, %s208
    %s212 = sphi 0, %s211
    %s228 = sphi 0, %s212
  $region4: #{upsample_forward.6} parent=0 // loop_header_branch
    %18 = sbr.rel (%p16) target = $region8
  $region5: #{upsample_forward.6} parent=0 // loop_body
    %s20 = ssub.s32 %s15, 1
    %s21 = ssub.s32 %s15, 2
    %s22 = sadd.s32 %s15, 1
    %s23 = ssub.s32 %s15, %s22
    %p24 = scmp.eq.s32.totalorder %s23, 0
    %s26 = sadd.s32 %s25, 1
    %s27 = scalar_select %p24, %s25, %s26
    %p30 = pneg %p24
    %p31 = scmp.eq.s32.totalorder %s15, 1
    %p32 = por %p30, %p31
    %p33 = scmp.ne.s32.totalorder %s25, %s28
    %p34 = scmp.eq.s32.totalorder %s15, 0
    %p35 = por %p33, %p34
    %p36 = scmp.ne.s32.totalorder %s25, %s28
    %p37 = scmp.eq.s32.totalorder %s20, 1
    %p38 = por %p36, %p37
    %p39 = scmp.ne.s32.totalorder %s28, %s29
    %p40 = scmp.eq.s32.totalorder %s20, 0
    %p41 = por %p39, %p40
    %p42 = scmp.ne.s32.totalorder %s28, %s29
    %p43 = scmp.eq.s32.totalorder %s21, 1
    %p44 = por %p42, %p43
    %p46 = scmp.ne.s32.totalorder %s29, %s45
    %p47 = scmp.eq.s32.totalorder %s21, 0
    %p48 = por %p46, %p47
    %s50 = sadd.s32 %s49, 1
    %p53 = scmp.eq.s32.totalorder %s15, 1
    %p54 = scmp.ne.s32.totalorder %s49, %s51
    %p55 = scmp.eq.s32.totalorder %s15, 0
    %p56 = por %p54, %p55
    %p57 = scmp.ne.s32.totalorder %s49, %s51
    %p58 = scmp.eq.s32.totalorder %s20, 1
    %p59 = por %p57, %p58
    %p60 = scmp.ne.s32.totalorder %s51, %s52
    %p61 = scmp.eq.s32.totalorder %s20, 0
    %p62 = por %p60, %p61
    %p63 = scmp.ne.s32.totalorder %s51, %s52
    %p64 = scmp.eq.s32.totalorder %s21, 1
    %p65 = por %p63, %p64
    %p67 = scmp.ne.s32.totalorder %s52, %s66
    %p68 = scmp.eq.s32.totalorder %s21, 0
    %p69 = por %p67, %p68
    %s71 = sadd.s32 %s70, 1
    %p74 = scmp.eq.s32.totalorder %s15, 1
    %p75 = scmp.ne.s32.totalorder %s70, %s72
    %p76 = scmp.eq.s32.totalorder %s15, 0
    %p77 = por %p75, %p76
    %p78 = scmp.ne.s32.totalorder %s70, %s72
    %p79 = scmp.eq.s32.totalorder %s20, 1
    %p80 = por %p78, %p79
    %p81 = scmp.ne.s32.totalorder %s72, %s73
    %p82 = scmp.eq.s32.totalorder %s20, 0
    %p83 = por %p81, %p82
    %p84 = scmp.ne.s32.totalorder %s72, %s73
    %p85 = scmp.eq.s32.totalorder %s21, 1
    %p86 = por %p84, %p85
    %p88 = scmp.ne.s32.totalorder %s73, %s87
    %p89 = scmp.eq.s32.totalorder %s21, 0
    %p90 = por %p88, %p89
    %s92 = sadd.s32 %s91, 1
    %p95 = scmp.eq.s32.totalorder %s15, 1
    %p96 = scmp.ne.s32.totalorder %s91, %s93
    %p97 = scmp.eq.s32.totalorder %s15, 0
    %p98 = por %p96, %p97
    %p99 = scmp.ne.s32.totalorder %s91, %s93
    %p100 = scmp.eq.s32.totalorder %s20, 1
    %p101 = por %p99, %p100
    %p102 = scmp.ne.s32.totalorder %s93, %s94
    %p103 = scmp.eq.s32.totalorder %s20, 0
    %p104 = por %p102, %p103
    %p105 = scmp.ne.s32.totalorder %s93, %s94
    %p106 = scmp.eq.s32.totalorder %s21, 1
    %p107 = por %p105, %p106
    %p109 = scmp.ne.s32.totalorder %s94, %s108
    %p110 = scmp.eq.s32.totalorder %s21, 0
    %p111 = por %p109, %p110
    %s113 = sadd.s32 %s112, 1
    %p116 = scmp.eq.s32.totalorder %s15, 1
    %p117 = scmp.ne.s32.totalorder %s112, %s114
    %p118 = scmp.eq.s32.totalorder %s15, 0
    %p119 = por %p117, %p118
    %p120 = scmp.ne.s32.totalorder %s112, %s114
    %p121 = scmp.eq.s32.totalorder %s20, 1
    %p122 = por %p120, %p121
    %p123 = scmp.ne.s32.totalorder %s114, %s115
    %p124 = scmp.eq.s32.totalorder %s20, 0
    %p125 = por %p123, %p124
    %p126 = scmp.ne.s32.totalorder %s114, %s115
    %p127 = scmp.eq.s32.totalorder %s21, 1
    %p128 = por %p126, %p127
    %p130 = scmp.ne.s32.totalorder %s115, %s129
    %p131 = scmp.eq.s32.totalorder %s21, 0
    %p132 = por %p130, %p131
    %s134 = sadd.s32 %s133, 1
    %p137 = scmp.eq.s32.totalorder %s15, 1
    %p138 = scmp.ne.s32.totalorder %s133, %s135
    %p139 = scmp.eq.s32.totalorder %s15, 0
    %p140 = por %p138, %p139
    %p141 = scmp.ne.s32.totalorder %s133, %s135
    %p142 = scmp.eq.s32.totalorder %s20, 1
    %p143 = por %p141, %p142
    %p144 = scmp.ne.s32.totalorder %s135, %s136
    %p145 = scmp.eq.s32.totalorder %s20, 0
    %p146 = por %p144, %p145
    %p147 = scmp.ne.s32.totalorder %s135, %s136
    %p148 = scmp.eq.s32.totalorder %s21, 1
    %p149 = por %p147, %p148
    %p151 = scmp.ne.s32.totalorder %s136, %s150
    %p152 = scmp.eq.s32.totalorder %s21, 0
    %p153 = por %p151, %p152
    %s154 = ssub.s32 %s15, %s22
    %p155 = scmp.eq.s32.totalorder %s154, 0
    %s157 = sadd.s32 %s156, 1
    %s158 = scalar_select %p155, %s156, %s157
    %p161 = pneg %p155
    %p162 = scmp.eq.s32.totalorder %s15, 1
    %p163 = por %p161, %p162
    %p164 = scmp.ne.s32.totalorder %s156, %s159
    %p165 = scmp.eq.s32.totalorder %s15, 0
    %p166 = por %p164, %p165
    %p167 = scmp.ne.s32.totalorder %s156, %s159
    %p168 = scmp.eq.s32.totalorder %s20, 1
    %p169 = por %p167, %p168
    %p170 = scmp.ne.s32.totalorder %s159, %s160
    %p171 = scmp.eq.s32.totalorder %s20, 0
    %p172 = por %p170, %p171
    %p173 = scmp.ne.s32.totalorder %s159, %s160
    %p174 = scmp.eq.s32.totalorder %s21, 1
    %p175 = por %p173, %p174
    %p177 = scmp.ne.s32.totalorder %s160, %s176
    %p178 = scmp.eq.s32.totalorder %s21, 0
    %p179 = por %p177, %p178
    %s180 = ssub.s32 %s15, %s22
    %p181 = scmp.eq.s32.totalorder %s180, 0
    %s183 = sadd.s32 %s182, 1
    %s184 = scalar_select %p181, %s182, %s183
    %p187 = pneg %p181
    %p188 = scmp.eq.s32.totalorder %s15, 1
    %p189 = por %p187, %p188
    %p190 = scmp.ne.s32.totalorder %s182, %s185
    %p191 = scmp.eq.s32.totalorder %s15, 0
    %p192 = por %p190, %p191
    %p193 = scmp.ne.s32.totalorder %s182, %s185
    %p194 = scmp.eq.s32.totalorder %s20, 1
    %p195 = por %p193, %p194
    %p196 = scmp.ne.s32.totalorder %s185, %s186
    %p197 = scmp.eq.s32.totalorder %s20, 0
    %p198 = por %p196, %p197
    %p199 = scmp.ne.s32.totalorder %s185, %s186
    %p200 = scmp.eq.s32.totalorder %s21, 1
    %p201 = por %p199, %p200
    %p203 = scmp.ne.s32.totalorder %s186, %s202
    %p204 = scmp.eq.s32.totalorder %s21, 0
    %p205 = por %p203, %p204
    %s206 = ssub.s32 %s15, %s22
    %p207 = scmp.eq.s32.totalorder %s206, 0
    %s209 = sadd.s32 %s208, 1
    %s210 = scalar_select %p207, %s208, %s209
    %p213 = pneg %p207
    %p214 = scmp.eq.s32.totalorder %s15, 1
    %p215 = por %p213, %p214
    %p216 = scmp.ne.s32.totalorder %s208, %s211
    %p217 = scmp.eq.s32.totalorder %s15, 0
    %p218 = por %p216, %p217
    %p219 = scmp.ne.s32.totalorder %s208, %s211
    %p220 = scmp.eq.s32.totalorder %s20, 1
    %p221 = por %p219, %p220
    %p222 = scmp.ne.s32.totalorder %s211, %s212
    %p223 = scmp.eq.s32.totalorder %s20, 0
    %p224 = por %p222, %p223
    %p225 = scmp.ne.s32.totalorder %s211, %s212
    %p226 = scmp.eq.s32.totalorder %s21, 1
    %p227 = por %p225, %p226
    %p229 = scmp.ne.s32.totalorder %s212, %s228
    %p230 = scmp.eq.s32.totalorder %s21, 0
    %p231 = por %p229, %p230
    %p232 = scmp.le.s32.totalorder 1, %s15
    %p233 = scmp.lt.s32.totalorder %s15, 3
    %p234 = pnand %p232, %p233
    %p235 = pneg %p234
    // Predicated region
    $region9: #{upsample_forward.6} parent=5 // pred_check
      _
    $region10: #{upsample_forward.6} parent=5 // pred_check_branch
      %237 = sbr.rel (%p234) target = $region12
    $region11: #{upsample_forward.6} parent=5 // pred_region
      %s238 = ssub.s32 %s15, 1
      // Predicated region
      $region13: #{upsample_forward.6} parent=11 // pred_check
        %p239 = pneg %p62
      $region14: #{upsample_forward.6} parent=11 // pred_check_branch
        %241 = sbr.rel (%p239) target = $region16
      $region15: #{upsample_forward.6} parent=11 // pred_region
        _
      $region16: #{upsample_forward.6} parent=11 // pred_fallthru
        _
      // Predicated region
      $region17: #{upsample_forward.6} parent=11 // pred_check
        %p242 = pneg %p83
      $region18: #{upsample_forward.6} parent=11 // pred_check_branch
        %244 = sbr.rel (%p242) target = $region20
      $region19: #{upsample_forward.6} parent=11 // pred_region
        _
      $region20: #{upsample_forward.6} parent=11 // pred_fallthru
        _
      // Predicated region
      $region21: #{upsample_forward.6} parent=11 // pred_check
        %p245 = pneg %p104
      $region22: #{upsample_forward.6} parent=11 // pred_check_branch
        %247 = sbr.rel (%p245) target = $region24
      $region23: #{upsample_forward.6} parent=11 // pred_region
        _
      $region24: #{upsample_forward.6} parent=11 // pred_fallthru
        _
      // Predicated region
      $region25: #{upsample_forward.6} parent=11 // pred_check
        %p248 = pneg %p125
      $region26: #{upsample_forward.6} parent=11 // pred_check_branch
        %250 = sbr.rel (%p248) target = $region28
      $region27: #{upsample_forward.6} parent=11 // pred_region
        _
      $region28: #{upsample_forward.6} parent=11 // pred_fallthru
        _
      // Predicated region
      $region29: #{upsample_forward.6} parent=11 // pred_check
        %p251 = pneg %p146
      $region30: #{upsample_forward.6} parent=11 // pred_check_branch
        %253 = sbr.rel (%p251) target = $region32
      $region31: #{upsample_forward.6} parent=11 // pred_region
        _
      $region32: #{upsample_forward.6} parent=11 // pred_fallthru
        _
    $region12: #{upsample_forward.6} parent=5 // pred_fallthru
      _
    %p254 = scmp.lt.s32.totalorder %s15, 2
    // Predicated region
    $region33: #{upsample_forward.6} parent=5 // pred_check
      %p255 = pneg %p254
    $region34: #{upsample_forward.6} parent=5 // pred_check_branch
      %257 = sbr.rel (%p255) target = $region36
    $region35: #{upsample_forward.6} parent=5 // pred_region
      // Predicated region
      $region37: #{upsample_forward.6} parent=35 // pred_check
        %p258 = pneg %p35
      $region38: #{upsample_forward.6} parent=35 // pred_check_branch
        %260 = sbr.rel (%p258) target = $region40
      $region39: #{upsample_forward.6} parent=35 // pred_region
        %p261 = scmp.lt.s32.totalorder %s15, 1
        %s262 = scalar_select %p261, %s15, 1
        %s263 = smul.addr %s262, 2
        %s264 = smul.addr %s263, 8
        %s265 = scalar_lea.vmem %s0, %s264
      $region40: #{upsample_forward.6} parent=35 // pred_fallthru
        _
    $region36: #{upsample_forward.6} parent=5 // pred_fallthru
      _
    %p266 = scmp.le.s32.totalorder 1, %s15
    %p267 = scmp.lt.s32.totalorder %s15, 3
    %p268 = pnand %p266, %p267
    %p269 = pneg %p268
    // Predicated region
    $region41: #{upsample_forward.6} parent=5 // pred_check
      _
    $region42: #{upsample_forward.6} parent=5 // pred_check_branch
      %271 = sbr.rel (%p268) target = $region44
    $region43: #{upsample_forward.6} parent=5 // pred_region
      %s272 = ssub.s32 %s15, 1
      %p273 = scmp.lt.s32.totalorder %s20, 1
      %s274 = scalar_select %p273, %s20, 1
      %s275 = smul.addr %s274, 2
      %s276 = smul.addr %s275, 8
      %s277 = scalar_lea.vmem %s0, %s276
      %p278 = pneg %p41
      %p279 = pneg %p38
      %p280 = pneg %p62
      %p281 = pneg %p59
      %p282 = pneg %p83
      %p283 = pneg %p80
      %p284 = pneg %p104
      %p285 = pneg %p101
      %p286 = pneg %p125
      %p287 = pneg %p122
      %p288 = pneg %p146
      %p289 = pneg %p143
      %p290 = pneg %p172
      %p291 = pneg %p169
      %p292 = scmp.lt.s32.totalorder %s20, 1
      %s293 = scalar_select %p292, %s20, 1
      %s294 = smul.addr %s293, 2
      %s295 = smul.addr %s294, 8
      %s296 = scalar_lea.vmem %s6, %s295
      %p297 = pneg %p198
      %p298 = pneg %p195
      %p299 = scmp.lt.s32.totalorder %s20, 1
      %s300 = scalar_select %p299, %s20, 1
      %s301 = smul.addr %s300, 8
      %s302 = scalar_lea.vmem %s7, %s301
      %p303 = pneg %p224
      %p304 = pneg %p221
      %p305 = scmp.lt.s32.totalorder %s20, 1
      %s306 = scalar_select %p305, %s20, 1
      %s307 = smul.addr %s306, 8
      %s308 = scalar_lea.vmem %s8, %s307
      %p309 = scmp.lt.s32.totalorder %s20, 1
      %s310 = scalar_select %p309, %s20, 1
      %s311 = smul.addr %s310, 2
      %s312 = smul.addr %s311, 8
      %s313 = scalar_lea.vmem %s0, %s312
      %p314 = scmp.lt.s32.totalorder %s20, 1
      %s315 = scalar_select %p314, %s20, 1
      %s316 = smul.addr %s315, 2
      %s317 = smul.addr %s316, 8
      %s318 = scalar_lea.vmem %s6, %s317
      %p319 = scmp.lt.s32.totalorder %s20, 1
      %s320 = scalar_select %p319, %s20, 1
      %s321 = smul.addr %s320, 8
      %s322 = scalar_lea.vmem %s7, %s321
      %p323 = scmp.lt.s32.totalorder %s20, 1
      %s324 = scalar_select %p323, %s20, 1
      %s325 = smul.addr %s324, 8
      %s326 = scalar_lea.vmem %s8, %s325
      %v327 = vld [vmem:[%s313] sm:$0xff]
      %v328 = vld [vmem:[%s313 + $0x8] sm:$0xff]
      %v329 = vld [vmem:[%s1] sm:$0xff]
      %331 = vset.pattern.permute.xlu0 0
      %332 = vperm.xlu0 %331, %v329
      %v333 = vpop.permute.xlu0 %332
      %v335 = vmul.f32 %v327, %v333
      %v336 = vmul.f32 %v328, %v333
      %v337 = vld [vmem:[%s2] sm:$0xff]
      %339 = vset.pattern.permute.xlu0 0
      %340 = vperm.xlu0 %339, %v337
      %v341 = vpop.permute.xlu0 %340
      %v343 = vadd.f32 %v335, %v341
      %v344 = vadd.f32 %v336, %v341
      %v345 = vld [vmem:[%s5] ss:$8 sm:$0x3]
      %346 = vrot.lane.b32.xlu0 %v343, 17
      %v347 = vpop.permute.xlu0 %346
      %348 = vrot.lane.b32.xlu0 %v344, 17
      %v349 = vpop.permute.xlu0 %348
      %v350 = vlaneseq
      %v351 = vand.u32 %v350, 127
      %vm352 = vcmp.lt.s32.totalorder %v351, 17
      %v353 = vsel %vm352, %v347, %v349
      %v354 = vsel %vm352, %v349, %v347
      %v355 = vld [vmem:[%s3] sm:$0xff]
      %v357 = vlaneseq
      %v358 = vshrl.u32 %v357, 7
      %v359 = vsub.s32 0, %v358
      %v360 = vrot.slane %v345, %v359
      %v361 = vlaneseq
      %v362 = vshrl.u32 %v361, 7
      %v363 = vsub.s32 1, %v362
      %v364 = vrot.slane %v345, %v363
      %v367 = vmul.f32 %v354, %v360
      %v368 = vmul.f32 %v353, %v364
      %s369 = scalar_lea.vmem %s5, 1
      %v370 = vld [vmem:[%s369] ss:$8 sm:$0x3]
      %371 = vrot.lane.b32.xlu0 %v343, 16
      %v372 = vpop.permute.xlu0 %371
      %373 = vrot.lane.b32.xlu0 %v344, 16
      %v374 = vpop.permute.xlu0 %373
      %vm375 = vcmp.lt.s32.totalorder %v351, 16
      %v376 = vsel %vm375, %v372, %v374
      %v377 = vsel %vm375, %v374, %v372
      %s378 = scalar_lea.vmem %s3, 8
      %v379 = vld [vmem:[%s378] sm:$0xff]
      %v381 = vlaneseq
      %v382 = vshrl.u32 %v381, 7
      %v383 = vsub.s32 0, %v382
      %v384 = vrot.slane %v370, %v383
      %v385 = vlaneseq
      %v386 = vshrl.u32 %v385, 7
      %v387 = vsub.s32 1, %v386
      %v388 = vrot.slane %v370, %v387
      %v391 = vmul.f32 %v377, %v384
      %v392 = vmul.f32 %v376, %v388
      %vm393 = vcmask 64512
      %v395 = vsel %vm393, %v379, 0
      %397 = vmatprep.subr.mxu0 0.0
      %398 = vmatpush1.msra.mxu0 0.0
      %399 = vmatprep.subr.mxu0 0.0
      %400 = vmatpush1.msra.mxu0 0.0
      %401 = vmatprep.subr.mxu0 0.0
      %402 = vmatpush1.msra.mxu0 0.0
      %403 = vmatprep.subr.mxu0 0.0
      %404 = vmatpush1.msra.mxu0 0.0
      %405 = vmatprep.subr.mxu0 0.0
      %406 = vmatpush1.msra.mxu0 0.0
      %407 = vmatprep.subr.mxu0 0.0
      %408 = vmatpush1.msra.mxu0 0.0
      %409 = vmatprep.subr.mxu0 0.0
      %410 = vmatpush1.msra.mxu0 0.0
      %411 = vmatprep.subr.mxu0 0.0
      %412 = vmatpush1.msra.mxu0 0.0
      %413 = vmatprep.subr.mxu0 0.0
      %414 = vmatpush1.msra.mxu0 0.0
      %415 = vmatprep.subr.mxu0 0.0
      %416 = vmatpush1.msra.mxu0 0.0
      %417 = vmatprep.subr.mxu0 0.0
      %418 = vmatpush1.msra.mxu0 0.0
      %419 = vmatprep.subr.mxu0 0.0
      %420 = vmatpush1.msra.mxu0 0.0
      %421 = vmatprep.subr.mxu0 0.0
      %422 = vmatpush1.msra.mxu0 0.0
      %423 = vmatprep.subr.mxu0 0.0
      %424 = vmatpush1.msra.mxu0 0.0
      %425 = vmatprep.subr.mxu0 0.0
      %426 = vmatpush1.msra.mxu0 0.0
      %427 = vmatprep.subr.mxu0 %v392
      %428 = vmatpush1.msra.mxu0 %v391
      %429 = vmatprep.subr.mxu0 0.0
      %430 = vmatpush2.msra.mxu0 0.0
      %431 = vmatprep.subr.mxu0 0.0
      %432 = vmatpush2.msra.mxu0 0.0
      %433 = vmatprep.subr.mxu0 0.0
      %434 = vmatpush2.msra.mxu0 0.0
      %435 = vmatprep.subr.mxu0 0.0
      %436 = vmatpush2.msra.mxu0 0.0
      %437 = vmatprep.subr.mxu0 0.0
      %438 = vmatpush2.msra.mxu0 0.0
      %439 = vmatprep.subr.mxu0 0.0
      %440 = vmatpush2.msra.mxu0 0.0
      %441 = vmatprep.subr.mxu0 0.0
      %442 = vmatpush2.msra.mxu0 0.0
      %443 = vmatprep.subr.mxu0 0.0
      %444 = vmatpush2.msra.mxu0 0.0
      %445 = vmatprep.subr.mxu0 0.0
      %446 = vmatpush2.msra.mxu0 0.0
      %447 = vmatprep.subr.mxu0 0.0
      %448 = vmatpush2.msra.mxu0 0.0
      %449 = vmatprep.subr.mxu0 0.0
      %450 = vmatpush2.msra.mxu0 0.0
      %451 = vmatprep.subr.mxu0 0.0
      %452 = vmatpush2.msra.mxu0 0.0
      %453 = vmatprep.subr.mxu0 0.0
      %454 = vmatpush2.msra.mxu0 0.0
      %455 = vmatprep.subr.mxu0 0.0
      %456 = vmatpush2.msra.mxu0 0.0
      %457 = vmatprep.subr.mxu0 0.0
      %458 = vmatpush2.msra.mxu0 0.0
      %459 = vmatprep.subr.mxu0 0.0
      %460 = vmatpush2.msra.mxu0 0.0
      %461 = vmatprep.mubr.f32.mxu0 0.0
      %462 = vmatmul.mubr.f32.gmra.mxu0 %v395
      %v463 = vpop.f32.mrf.mxu0
      %v464 = vadd.f32 0.0, %v463
      %v465 = vpop.f32.mrf.mxu0
      %v466 = vadd.f32 0.0, %v465
      %467 = vdwg.mxu0
      %v469 = vsel %vm393, %v355, 0
      %471 = vmatprep.subr.mxu0 0.0
      %472 = vmatpush1.msra.mxu0 0.0
      %473 = vmatprep.subr.mxu0 0.0
      %474 = vmatpush1.msra.mxu0 0.0
      %475 = vmatprep.subr.mxu0 0.0
      %476 = vmatpush1.msra.mxu0 0.0
      %477 = vmatprep.subr.mxu0 0.0
      %478 = vmatpush1.msra.mxu0 0.0
      %479 = vmatprep.subr.mxu0 0.0
      %480 = vmatpush1.msra.mxu0 0.0
      %481 = vmatprep.subr.mxu0 0.0
      %482 = vmatpush1.msra.mxu0 0.0
      %483 = vmatprep.subr.mxu0 0.0
      %484 = vmatpush1.msra.mxu0 0.0
      %485 = vmatprep.subr.mxu0 0.0
      %486 = vmatpush1.msra.mxu0 0.0
      %487 = vmatprep.subr.mxu0 0.0
      %488 = vmatpush1.msra.mxu0 0.0
      %489 = vmatprep.subr.mxu0 0.0
      %490 = vmatpush1.msra.mxu0 0.0
      %491 = vmatprep.subr.mxu0 0.0
      %492 = vmatpush1.msra.mxu0 0.0
      %493 = vmatprep.subr.mxu0 0.0
      %494 = vmatpush1.msra.mxu0 0.0
      %495 = vmatprep.subr.mxu0 0.0
      %496 = vmatpush1.msra.mxu0 0.0
      %497 = vmatprep.subr.mxu0 0.0
      %498 = vmatpush1.msra.mxu0 0.0
      %499 = vmatprep.subr.mxu0 0.0
      %500 = vmatpush1.msra.mxu0 0.0
      %501 = vmatprep.subr.mxu0 %v368
      %502 = vmatpush1.msra.mxu0 %v367
      %503 = vmatprep.subr.mxu0 0.0
      %504 = vmatpush2.msra.mxu0 0.0
      %505 = vmatprep.subr.mxu0 0.0
      %506 = vmatpush2.msra.mxu0 0.0
      %507 = vmatprep.subr.mxu0 0.0
      %508 = vmatpush2.msra.mxu0 0.0
      %509 = vmatprep.subr.mxu0 0.0
      %510 = vmatpush2.msra.mxu0 0.0
      %511 = vmatprep.subr.mxu0 0.0
      %512 = vmatpush2.msra.mxu0 0.0
      %513 = vmatprep.subr.mxu0 0.0
      %514 = vmatpush2.msra.mxu0 0.0
      %515 = vmatprep.subr.mxu0 0.0
      %516 = vmatpush2.msra.mxu0 0.0
      %517 = vmatprep.subr.mxu0 0.0
      %518 = vmatpush2.msra.mxu0 0.0
      %519 = vmatprep.subr.mxu0 0.0
      %520 = vmatpush2.msra.mxu0 0.0
      %521 = vmatprep.subr.mxu0 0.0
      %522 = vmatpush2.msra.mxu0 0.0
      %523 = vmatprep.subr.mxu0 0.0
      %524 = vmatpush2.msra.mxu0 0.0
      %525 = vmatprep.subr.mxu0 0.0
      %526 = vmatpush2.msra.mxu0 0.0
      %527 = vmatprep.subr.mxu0 0.0
      %528 = vmatpush2.msra.mxu0 0.0
      %529 = vmatprep.subr.mxu0 0.0
      %530 = vmatpush2.msra.mxu0 0.0
      %531 = vmatprep.subr.mxu0 0.0
      %532 = vmatpush2.msra.mxu0 0.0
      %533 = vmatprep.subr.mxu0 0.0
      %534 = vmatpush2.msra.mxu0 0.0
      %535 = vmatprep.mubr.f32.mxu0 0.0
      %536 = vmatmul.mubr.f32.gmra.mxu0 %v469
      %v537 = vpop.f32.mrf.mxu0
      %v538 = vadd.f32 %v464, %v537
      %v539 = vpop.f32.mrf.mxu0
      %v540 = vadd.f32 %v466, %v539
      %541 = vdwg.mxu0
      %s542 = scalar_lea.vmem %s5, 2
      %v543 = vld [vmem:[%s542] ss:$8 sm:$0x3]
      %544 = vrot.lane.b32.xlu0 %v343, 15
      %v545 = vpop.permute.xlu0 %544
      %546 = vrot.lane.b32.xlu0 %v344, 15
      %v547 = vpop.permute.xlu0 %546
      %vm548 = vcmp.lt.s32.totalorder %v351, 15
      %v549 = vsel %vm548, %v545, %v547
      %v550 = vsel %vm548, %v547, %v545
      %s551 = scalar_lea.vmem %s3, 16
      %v552 = vld [vmem:[%s551] sm:$0xff]
      %v554 = vlaneseq
      %v555 = vshrl.u32 %v554, 7
      %v556 = vsub.s32 0, %v555
      %v557 = vrot.slane %v543, %v556
      %v558 = vlaneseq
      %v559 = vshrl.u32 %v558, 7
      %v560 = vsub.s32 1, %v559
      %v561 = vrot.slane %v543, %v560
      %v564 = vmul.f32 %v550, %v557
      %v565 = vmul.f32 %v549, %v561
      %v567 = vsel %vm393, %v552, 0
      %569 = vmatprep.subr.mxu0 0.0
      %570 = vmatpush1.msra.mxu0 0.0
      %571 = vmatprep.subr.mxu0 0.0
      %572 = vmatpush1.msra.mxu0 0.0
      %573 = vmatprep.subr.mxu0 0.0
      %574 = vmatpush1.msra.mxu0 0.0
      %575 = vmatprep.subr.mxu0 0.0
      %576 = vmatpush1.msra.mxu0 0.0
      %577 = vmatprep.subr.mxu0 0.0
      %578 = vmatpush1.msra.mxu0 0.0
      %579 = vmatprep.subr.mxu0 0.0
      %580 = vmatpush1.msra.mxu0 0.0
      %581 = vmatprep.subr.mxu0 0.0
      %582 = vmatpush1.msra.mxu0 0.0
      %583 = vmatprep.subr.mxu0 0.0
      %584 = vmatpush1.msra.mxu0 0.0
      %585 = vmatprep.subr.mxu0 0.0
      %586 = vmatpush1.msra.mxu0 0.0
      %587 = vmatprep.subr.mxu0 0.0
      %588 = vmatpush1.msra.mxu0 0.0
      %589 = vmatprep.subr.mxu0 0.0
      %590 = vmatpush1.msra.mxu0 0.0
      %591 = vmatprep.subr.mxu0 0.0
      %592 = vmatpush1.msra.mxu0 0.0
      %593 = vmatprep.subr.mxu0 0.0
      %594 = vmatpush1.msra.mxu0 0.0
      %595 = vmatprep.subr.mxu0 0.0
      %596 = vmatpush1.msra.mxu0 0.0
      %597 = vmatprep.subr.mxu0 0.0
      %598 = vmatpush1.msra.mxu0 0.0
      %599 = vmatprep.subr.mxu0 %v565
      %600 = vmatpush1.msra.mxu0 %v564
      %601 = vmatprep.subr.mxu0 0.0
      %602 = vmatpush2.msra.mxu0 0.0
      %603 = vmatprep.subr.mxu0 0.0
      %604 = vmatpush2.msra.mxu0 0.0
      %605 = vmatprep.subr.mxu0 0.0
      %606 = vmatpush2.msra.mxu0 0.0
      %607 = vmatprep.subr.mxu0 0.0
      %608 = vmatpush2.msra.mxu0 0.0
      %609 = vmatprep.subr.mxu0 0.0
      %610 = vmatpush2.msra.mxu0 0.0
      %611 = vmatprep.subr.mxu0 0.0
      %612 = vmatpush2.msra.mxu0 0.0
      %613 = vmatprep.subr.mxu0 0.0
      %614 = vmatpush2.msra.mxu0 0.0
      %615 = vmatprep.subr.mxu0 0.0
      %616 = vmatpush2.msra.mxu0 0.0
      %617 = vmatprep.subr.mxu0 0.0
      %618 = vmatpush2.msra.mxu0 0.0
      %619 = vmatprep.subr.mxu0 0.0
      %620 = vmatpush2.msra.mxu0 0.0
      %621 = vmatprep.subr.mxu0 0.0
      %622 = vmatpush2.msra.mxu0 0.0
      %623 = vmatprep.subr.mxu0 0.0
      %624 = vmatpush2.msra.mxu0 0.0
      %625 = vmatprep.subr.mxu0 0.0
      %626 = vmatpush2.msra.mxu0 0.0
      %627 = vmatprep.subr.mxu0 0.0
      %628 = vmatpush2.msra.mxu0 0.0
      %629 = vmatprep.subr.mxu0 0.0
      %630 = vmatpush2.msra.mxu0 0.0
      %631 = vmatprep.subr.mxu0 0.0
      %632 = vmatpush2.msra.mxu0 0.0
      %633 = vmatprep.mubr.f32.mxu0 0.0
      %634 = vmatmul.mubr.f32.gmra.mxu0 %v567
      %v635 = vpop.f32.mrf.mxu0
      %v636 = vadd.f32 0.0, %v635
      %v637 = vpop.f32.mrf.mxu0
      %v638 = vadd.f32 0.0, %v637
      %639 = vdwg.mxu0
      %v640 = vadd.f32 %v538, %v636
      %v641 = vadd.f32 %v540, %v638
      %s642 = scalar_lea.vmem %s5, 3
      %v643 = vld [vmem:[%s642] ss:$8 sm:$0x3]
      %644 = vrot.lane.b32.xlu0 %v343, 1
      %v645 = vpop.permute.xlu0 %644
      %646 = vrot.lane.b32.xlu0 %v344, 1
      %v647 = vpop.permute.xlu0 %646
      %vm648 = vcmp.lt.s32.totalorder %v351, 1
      %v649 = vsel %vm648, %v645, %v647
      %v650 = vsel %vm648, %v647, %v645
      %s651 = scalar_lea.vmem %s3, 24
      %v652 = vld [vmem:[%s651] sm:$0xff]
      %v654 = vlaneseq
      %v655 = vshrl.u32 %v654, 7
      %v656 = vsub.s32 0, %v655
      %v657 = vrot.slane %v643, %v656
      %v658 = vlaneseq
      %v659 = vshrl.u32 %v658, 7
      %v660 = vsub.s32 1, %v659
      %v661 = vrot.slane %v643, %v660
      %v664 = vmul.f32 %v650, %v657
      %v665 = vmul.f32 %v649, %v661
      %v667 = vsel %vm393, %v652, 0
      %669 = vmatprep.subr.mxu0 0.0
      %670 = vmatpush1.msra.mxu0 0.0
      %671 = vmatprep.subr.mxu0 0.0
      %672 = vmatpush1.msra.mxu0 0.0
      %673 = vmatprep.subr.mxu0 0.0
      %674 = vmatpush1.msra.mxu0 0.0
      %675 = vmatprep.subr.mxu0 0.0
      %676 = vmatpush1.msra.mxu0 0.0
      %677 = vmatprep.subr.mxu0 0.0
      %678 = vmatpush1.msra.mxu0 0.0
      %679 = vmatprep.subr.mxu0 0.0
      %680 = vmatpush1.msra.mxu0 0.0
      %681 = vmatprep.subr.mxu0 0.0
      %682 = vmatpush1.msra.mxu0 0.0
      %683 = vmatprep.subr.mxu0 0.0
      %684 = vmatpush1.msra.mxu0 0.0
      %685 = vmatprep.subr.mxu0 0.0
      %686 = vmatpush1.msra.mxu0 0.0
      %687 = vmatprep.subr.mxu0 0.0
      %688 = vmatpush1.msra.mxu0 0.0
      %689 = vmatprep.subr.mxu0 0.0
      %690 = vmatpush1.msra.mxu0 0.0
      %691 = vmatprep.subr.mxu0 0.0
      %692 = vmatpush1.msra.mxu0 0.0
      %693 = vmatprep.subr.mxu0 0.0
      %694 = vmatpush1.msra.mxu0 0.0
      %695 = vmatprep.subr.mxu0 0.0
      %696 = vmatpush1.msra.mxu0 0.0
      %697 = vmatprep.subr.mxu0 0.0
      %698 = vmatpush1.msra.mxu0 0.0
      %699 = vmatprep.subr.mxu0 %v665
      %700 = vmatpush1.msra.mxu0 %v664
      %701 = vmatprep.subr.mxu0 0.0
      %702 = vmatpush2.msra.mxu0 0.0
      %703 = vmatprep.subr.mxu0 0.0
      %704 = vmatpush2.msra.mxu0 0.0
      %705 = vmatprep.subr.mxu0 0.0
      %706 = vmatpush2.msra.mxu0 0.0
      %707 = vmatprep.subr.mxu0 0.0
      %708 = vmatpush2.msra.mxu0 0.0
      %709 = vmatprep.subr.mxu0 0.0
      %710 = vmatpush2.msra.mxu0 0.0
      %711 = vmatprep.subr.mxu0 0.0
      %712 = vmatpush2.msra.mxu0 0.0
      %713 = vmatprep.subr.mxu0 0.0
      %714 = vmatpush2.msra.mxu0 0.0
      %715 = vmatprep.subr.mxu0 0.0
      %716 = vmatpush2.msra.mxu0 0.0
      %717 = vmatprep.subr.mxu0 0.0
      %718 = vmatpush2.msra.mxu0 0.0
      %719 = vmatprep.subr.mxu0 0.0
      %720 = vmatpush2.msra.mxu0 0.0
      %721 = vmatprep.subr.mxu0 0.0
      %722 = vmatpush2.msra.mxu0 0.0
      %723 = vmatprep.subr.mxu0 0.0
      %724 = vmatpush2.msra.mxu0 0.0
      %725 = vmatprep.subr.mxu0 0.0
      %726 = vmatpush2.msra.mxu0 0.0
      %727 = vmatprep.subr.mxu0 0.0
      %728 = vmatpush2.msra.mxu0 0.0
      %729 = vmatprep.subr.mxu0 0.0
      %730 = vmatpush2.msra.mxu0 0.0
      %731 = vmatprep.subr.mxu0 0.0
      %732 = vmatpush2.msra.mxu0 0.0
      %733 = vmatprep.mubr.f32.mxu0 0.0
      %734 = vmatmul.mubr.f32.gmra.mxu0 %v667
      %v735 = vpop.f32.mrf.mxu0
      %v736 = vadd.f32 0.0, %v735
      %v737 = vpop.f32.mrf.mxu0
      %v738 = vadd.f32 0.0, %v737
      %739 = vdwg.mxu0
      %v740 = vadd.f32 %v640, %v736
      %v741 = vadd.f32 %v641, %v738
      %s742 = scalar_lea.vmem %s5, 4
      %v743 = vld [vmem:[%s742] ss:$8 sm:$0x3]
      %s744 = scalar_lea.vmem %s3, 32
      %v745 = vld [vmem:[%s744] sm:$0xff]
      %v747 = vlaneseq
      %v748 = vshrl.u32 %v747, 7
      %v749 = vsub.s32 0, %v748
      %v750 = vrot.slane %v743, %v749
      %v751 = vlaneseq
      %v752 = vshrl.u32 %v751, 7
      %v753 = vsub.s32 1, %v752
      %v754 = vrot.slane %v743, %v753
      %v757 = vmul.f32 %v343, %v750
      %v758 = vmul.f32 %v344, %v754
      %v760 = vsel %vm393, %v745, 0
      %762 = vmatprep.subr.mxu0 0.0
      %763 = vmatpush1.msra.mxu0 0.0
      %764 = vmatprep.subr.mxu0 0.0
      %765 = vmatpush1.msra.mxu0 0.0
      %766 = vmatprep.subr.mxu0 0.0
      %767 = vmatpush1.msra.mxu0 0.0
      %768 = vmatprep.subr.mxu0 0.0
      %769 = vmatpush1.msra.mxu0 0.0
      %770 = vmatprep.subr.mxu0 0.0
      %771 = vmatpush1.msra.mxu0 0.0
      %772 = vmatprep.subr.mxu0 0.0
      %773 = vmatpush1.msra.mxu0 0.0
      %774 = vmatprep.subr.mxu0 0.0
      %775 = vmatpush1.msra.mxu0 0.0
      %776 = vmatprep.subr.mxu0 0.0
      %777 = vmatpush1.msra.mxu0 0.0
      %778 = vmatprep.subr.mxu0 0.0
      %779 = vmatpush1.msra.mxu0 0.0
      %780 = vmatprep.subr.mxu0 0.0
      %781 = vmatpush1.msra.mxu0 0.0
      %782 = vmatprep.subr.mxu0 0.0
      %783 = vmatpush1.msra.mxu0 0.0
      %784 = vmatprep.subr.mxu0 0.0
      %785 = vmatpush1.msra.mxu0 0.0
      %786 = vmatprep.subr.mxu0 0.0
      %787 = vmatpush1.msra.mxu0 0.0
      %788 = vmatprep.subr.mxu0 0.0
      %789 = vmatpush1.msra.mxu0 0.0
      %790 = vmatprep.subr.mxu0 0.0
      %791 = vmatpush1.msra.mxu0 0.0
      %792 = vmatprep.subr.mxu0 %v758
      %793 = vmatpush1.msra.mxu0 %v757
      %794 = vmatprep.subr.mxu0 0.0
      %795 = vmatpush2.msra.mxu0 0.0
      %796 = vmatprep.subr.mxu0 0.0
      %797 = vmatpush2.msra.mxu0 0.0
      %798 = vmatprep.subr.mxu0 0.0
      %799 = vmatpush2.msra.mxu0 0.0
      %800 = vmatprep.subr.mxu0 0.0
      %801 = vmatpush2.msra.mxu0 0.0
      %802 = vmatprep.subr.mxu0 0.0
      %803 = vmatpush2.msra.mxu0 0.0
      %804 = vmatprep.subr.mxu0 0.0
      %805 = vmatpush2.msra.mxu0 0.0
      %806 = vmatprep.subr.mxu0 0.0
      %807 = vmatpush2.msra.mxu0 0.0
      %808 = vmatprep.subr.mxu0 0.0
      %809 = vmatpush2.msra.mxu0 0.0
      %810 = vmatprep.subr.mxu0 0.0
      %811 = vmatpush2.msra.mxu0 0.0
      %812 = vmatprep.subr.mxu0 0.0
      %813 = vmatpush2.msra.mxu0 0.0
      %814 = vmatprep.subr.mxu0 0.0
      %815 = vmatpush2.msra.mxu0 0.0
      %816 = vmatprep.subr.mxu0 0.0
      %817 = vmatpush2.msra.mxu0 0.0
      %818 = vmatprep.subr.mxu0 0.0
      %819 = vmatpush2.msra.mxu0 0.0
      %820 = vmatprep.subr.mxu0 0.0
      %821 = vmatpush2.msra.mxu0 0.0
      %822 = vmatprep.subr.mxu0 0.0
      %823 = vmatpush2.msra.mxu0 0.0
      %824 = vmatprep.subr.mxu0 0.0
      %825 = vmatpush2.msra.mxu0 0.0
      %826 = vmatprep.mubr.f32.mxu0 0.0
      %827 = vmatmul.mubr.f32.gmra.mxu0 %v760
      %v828 = vpop.f32.mrf.mxu0
      %v829 = vadd.f32 0.0, %v828
      %v830 = vpop.f32.mrf.mxu0
      %v831 = vadd.f32 0.0, %v830
      %832 = vdwg.mxu0
      %v833 = vadd.f32 %v740, %v829
      %v834 = vadd.f32 %v741, %v831
      %s835 = scalar_lea.vmem %s5, 5
      %v836 = vld [vmem:[%s835] ss:$8 sm:$0x3]
      %837 = vrot.lane.b32.xlu0 %v343, 127
      %v838 = vpop.permute.xlu0 %837
      %839 = vrot.lane.b32.xlu0 %v344, 127
      %v840 = vpop.permute.xlu0 %839
      %vm841 = vcmp.lt.s32.totalorder %v351, 127
      %v842 = vsel %vm841, %v838, %v840
      %v843 = vsel %vm841, %v840, %v838
      %s844 = scalar_lea.vmem %s3, 40
      %v845 = vld [vmem:[%s844] sm:$0xff]
      %v847 = vlaneseq
      %v848 = vshrl.u32 %v847, 7
      %v849 = vsub.s32 0, %v848
      %v850 = vrot.slane %v836, %v849
      %v851 = vlaneseq
      %v852 = vshrl.u32 %v851, 7
      %v853 = vsub.s32 1, %v852
      %v854 = vrot.slane %v836, %v853
      %v857 = vmul.f32 %v842, %v850
      %v858 = vmul.f32 %v843, %v854
      %v860 = vsel %vm393, %v845, 0
      %862 = vmatprep.subr.mxu0 0.0
      %863 = vmatpush1.msra.mxu0 0.0
      %864 = vmatprep.subr.mxu0 0.0
      %865 = vmatpush1.msra.mxu0 0.0
      %866 = vmatprep.subr.mxu0 0.0
      %867 = vmatpush1.msra.mxu0 0.0
      %868 = vmatprep.subr.mxu0 0.0
      %869 = vmatpush1.msra.mxu0 0.0
      %870 = vmatprep.subr.mxu0 0.0
      %871 = vmatpush1.msra.mxu0 0.0
      %872 = vmatprep.subr.mxu0 0.0
      %873 = vmatpush1.msra.mxu0 0.0
      %874 = vmatprep.subr.mxu0 0.0
      %875 = vmatpush1.msra.mxu0 0.0
      %876 = vmatprep.subr.mxu0 0.0
      %877 = vmatpush1.msra.mxu0 0.0
      %878 = vmatprep.subr.mxu0 0.0
      %879 = vmatpush1.msra.mxu0 0.0
      %880 = vmatprep.subr.mxu0 0.0
      %881 = vmatpush1.msra.mxu0 0.0
      %882 = vmatprep.subr.mxu0 0.0
      %883 = vmatpush1.msra.mxu0 0.0
      %884 = vmatprep.subr.mxu0 0.0
      %885 = vmatpush1.msra.mxu0 0.0
      %886 = vmatprep.subr.mxu0 0.0
      %887 = vmatpush1.msra.mxu0 0.0
      %888 = vmatprep.subr.mxu0 0.0
      %889 = vmatpush1.msra.mxu0 0.0
      %890 = vmatprep.subr.mxu0 0.0
      %891 = vmatpush1.msra.mxu0 0.0
      %892 = vmatprep.subr.mxu0 %v858
      %893 = vmatpush1.msra.mxu0 %v857
      %894 = vmatprep.subr.mxu0 0.0
      %895 = vmatpush2.msra.mxu0 0.0
      %896 = vmatprep.subr.mxu0 0.0
      %897 = vmatpush2.msra.mxu0 0.0
      %898 = vmatprep.subr.mxu0 0.0
      %899 = vmatpush2.msra.mxu0 0.0
      %900 = vmatprep.subr.mxu0 0.0
      %901 = vmatpush2.msra.mxu0 0.0
      %902 = vmatprep.subr.mxu0 0.0
      %903 = vmatpush2.msra.mxu0 0.0
      %904 = vmatprep.subr.mxu0 0.0
      %905 = vmatpush2.msra.mxu0 0.0
      %906 = vmatprep.subr.mxu0 0.0
      %907 = vmatpush2.msra.mxu0 0.0
      %908 = vmatprep.subr.mxu0 0.0
      %909 = vmatpush2.msra.mxu0 0.0
      %910 = vmatprep.subr.mxu0 0.0
      %911 = vmatpush2.msra.mxu0 0.0
      %912 = vmatprep.subr.mxu0 0.0
      %913 = vmatpush2.msra.mxu0 0.0
      %914 = vmatprep.subr.mxu0 0.0
      %915 = vmatpush2.msra.mxu0 0.0
      %916 = vmatprep.subr.mxu0 0.0
      %917 = vmatpush2.msra.mxu0 0.0
      %918 = vmatprep.subr.mxu0 0.0
      %919 = vmatpush2.msra.mxu0 0.0
      %920 = vmatprep.subr.mxu0 0.0
      %921 = vmatpush2.msra.mxu0 0.0
      %922 = vmatprep.subr.mxu0 0.0
      %923 = vmatpush2.msra.mxu0 0.0
      %924 = vmatprep.subr.mxu0 0.0
      %925 = vmatpush2.msra.mxu0 0.0
      %926 = vmatprep.mubr.f32.mxu0 0.0
      %927 = vmatmul.mubr.f32.gmra.mxu0 %v860
      %v928 = vpop.f32.mrf.mxu0
      %v929 = vadd.f32 0.0, %v928
      %v930 = vpop.f32.mrf.mxu0
      %v931 = vadd.f32 0.0, %v930
      %932 = vdwg.mxu0
      %v933 = vadd.f32 %v833, %v929
      %v934 = vadd.f32 %v834, %v931
      %s935 = scalar_lea.vmem %s5, 6
      %v936 = vld [vmem:[%s935] ss:$8 sm:$0x3]
      %937 = vrot.lane.b32.xlu0 %v343, 113
      %v938 = vpop.permute.xlu0 %937
      %939 = vrot.lane.b32.xlu0 %v344, 113
      %v940 = vpop.permute.xlu0 %939
      %vm941 = vcmp.lt.s32.totalorder %v351, 113
      %v942 = vsel %vm941, %v938, %v940
      %v943 = vsel %vm941, %v940, %v938
      %s944 = scalar_lea.vmem %s3, 48
      %v945 = vld [vmem:[%s944] sm:$0xff]
      %v947 = vlaneseq
      %v948 = vshrl.u32 %v947, 7
      %v949 = vsub.s32 0, %v948
      %v950 = vrot.slane %v936, %v949
      %v951 = vlaneseq
      %v952 = vshrl.u32 %v951, 7
      %v953 = vsub.s32 1, %v952
      %v954 = vrot.slane %v936, %v953
      %v957 = vmul.f32 %v942, %v950
      %v958 = vmul.f32 %v943, %v954
      %v960 = vsel %vm393, %v945, 0
      %962 = vmatprep.subr.mxu0 0.0
      %963 = vmatpush1.msra.mxu0 0.0
      %964 = vmatprep.subr.mxu0 0.0
      %965 = vmatpush1.msra.mxu0 0.0
      %966 = vmatprep.subr.mxu0 0.0
      %967 = vmatpush1.msra.mxu0 0.0
      %968 = vmatprep.subr.mxu0 0.0
      %969 = vmatpush1.msra.mxu0 0.0
      %970 = vmatprep.subr.mxu0 0.0
      %971 = vmatpush1.msra.mxu0 0.0
      %972 = vmatprep.subr.mxu0 0.0
      %973 = vmatpush1.msra.mxu0 0.0
      %974 = vmatprep.subr.mxu0 0.0
      %975 = vmatpush1.msra.mxu0 0.0
      %976 = vmatprep.subr.mxu0 0.0
      %977 = vmatpush1.msra.mxu0 0.0
      %978 = vmatprep.subr.mxu0 0.0
      %979 = vmatpush1.msra.mxu0 0.0
      %980 = vmatprep.subr.mxu0 0.0
      %981 = vmatpush1.msra.mxu0 0.0
      %982 = vmatprep.subr.mxu0 0.0
      %983 = vmatpush1.msra.mxu0 0.0
      %984 = vmatprep.subr.mxu0 0.0
      %985 = vmatpush1.msra.mxu0 0.0
      %986 = vmatprep.subr.mxu0 0.0
      %987 = vmatpush1.msra.mxu0 0.0
      %988 = vmatprep.subr.mxu0 0.0
      %989 = vmatpush1.msra.mxu0 0.0
      %990 = vmatprep.subr.mxu0 0.0
      %991 = vmatpush1.msra.mxu0 0.0
      %992 = vmatprep.subr.mxu0 %v958
      %993 = vmatpush1.msra.mxu0 %v957
      %994 = vmatprep.subr.mxu0 0.0
      %995 = vmatpush2.msra.mxu0 0.0
      %996 = vmatprep.subr.mxu0 0.0
      %997 = vmatpush2.msra.mxu0 0.0
      %998 = vmatprep.subr.mxu0 0.0
      %999 = vmatpush2.msra.mxu0 0.0
      %1000 = vmatprep.subr.mxu0 0.0
      %1001 = vmatpush2.msra.mxu0 0.0
      %1002 = vmatprep.subr.mxu0 0.0
      %1003 = vmatpush2.msra.mxu0 0.0
      %1004 = vmatprep.subr.mxu0 0.0
      %1005 = vmatpush2.msra.mxu0 0.0
      %1006 = vmatprep.subr.mxu0 0.0
      %1007 = vmatpush2.msra.mxu0 0.0
      %1008 = vmatprep.subr.mxu0 0.0
      %1009 = vmatpush2.msra.mxu0 0.0
      %1010 = vmatprep.subr.mxu0 0.0
      %1011 = vmatpush2.msra.mxu0 0.0
      %1012 = vmatprep.subr.mxu0 0.0
      %1013 = vmatpush2.msra.mxu0 0.0
      %1014 = vmatprep.subr.mxu0 0.0
      %1015 = vmatpush2.msra.mxu0 0.0
      %1016 = vmatprep.subr.mxu0 0.0
      %1017 = vmatpush2.msra.mxu0 0.0
      %1018 = vmatprep.subr.mxu0 0.0
      %1019 = vmatpush2.msra.mxu0 0.0
      %1020 = vmatprep.subr.mxu0 0.0
      %1021 = vmatpush2.msra.mxu0 0.0
      %1022 = vmatprep.subr.mxu0 0.0
      %1023 = vmatpush2.msra.mxu0 0.0
      %1024 = vmatprep.subr.mxu0 0.0
      %1025 = vmatpush2.msra.mxu0 0.0
      %1026 = vmatprep.mubr.f32.mxu0 0.0
      %1027 = vmatmul.mubr.f32.gmra.mxu0 %v960
      %v1028 = vpop.f32.mrf.mxu0
      %v1029 = vadd.f32 0.0, %v1028
      %v1030 = vpop.f32.mrf.mxu0
      %v1031 = vadd.f32 0.0, %v1030
      %1032 = vdwg.mxu0
      %v1033 = vadd.f32 %v933, %v1029
      %v1034 = vadd.f32 %v934, %v1031
      %s1035 = scalar_lea.vmem %s5, 7
      %v1036 = vld [vmem:[%s1035] ss:$8 sm:$0x3]
      %1037 = vrot.lane.b32.xlu0 %v343, 112
      %v1038 = vpop.permute.xlu0 %1037
      %1039 = vrot.lane.b32.xlu0 %v344, 112
      %v1040 = vpop.permute.xlu0 %1039
      %vm1041 = vcmp.lt.s32.totalorder %v351, 112
      %v1042 = vsel %vm1041, %v1038, %v1040
      %v1043 = vsel %vm1041, %v1040, %v1038
      %s1044 = scalar_lea.vmem %s3, 56
      %v1045 = vld [vmem:[%s1044] sm:$0xff]
      %v1047 = vlaneseq
      %v1048 = vshrl.u32 %v1047, 7
      %v1049 = vsub.s32 0, %v1048
      %v1050 = vrot.slane %v1036, %v1049
      %v1051 = vlaneseq
      %v1052 = vshrl.u32 %v1051, 7
      %v1053 = vsub.s32 1, %v1052
      %v1054 = vrot.slane %v1036, %v1053
      %v1057 = vmul.f32 %v1042, %v1050
      %v1058 = vmul.f32 %v1043, %v1054
      %v1060 = vsel %vm393, %v1045, 0
      %1062 = vmatprep.subr.mxu0 0.0
      %1063 = vmatpush1.msra.mxu0 0.0
      %1064 = vmatprep.subr.mxu0 0.0
      %1065 = vmatpush1.msra.mxu0 0.0
      %1066 = vmatprep.subr.mxu0 0.0
      %1067 = vmatpush1.msra.mxu0 0.0
      %1068 = vmatprep.subr.mxu0 0.0
      %1069 = vmatpush1.msra.mxu0 0.0
      %1070 = vmatprep.subr.mxu0 0.0
      %1071 = vmatpush1.msra.mxu0 0.0
      %1072 = vmatprep.subr.mxu0 0.0
      %1073 = vmatpush1.msra.mxu0 0.0
      %1074 = vmatprep.subr.mxu0 0.0
      %1075 = vmatpush1.msra.mxu0 0.0
      %1076 = vmatprep.subr.mxu0 0.0
      %1077 = vmatpush1.msra.mxu0 0.0
      %1078 = vmatprep.subr.mxu0 0.0
      %1079 = vmatpush1.msra.mxu0 0.0
      %1080 = vmatprep.subr.mxu0 0.0
      %1081 = vmatpush1.msra.mxu0 0.0
      %1082 = vmatprep.subr.mxu0 0.0
      %1083 = vmatpush1.msra.mxu0 0.0
      %1084 = vmatprep.subr.mxu0 0.0
      %1085 = vmatpush1.msra.mxu0 0.0
      %1086 = vmatprep.subr.mxu0 0.0
      %1087 = vmatpush1.msra.mxu0 0.0
      %1088 = vmatprep.subr.mxu0 0.0
      %1089 = vmatpush1.msra.mxu0 0.0
      %1090 = vmatprep.subr.mxu0 0.0
      %1091 = vmatpush1.msra.mxu0 0.0
      %1092 = vmatprep.subr.mxu0 %v1058
      %1093 = vmatpush1.msra.mxu0 %v1057
      %1094 = vmatprep.subr.mxu0 0.0
      %1095 = vmatpush2.msra.mxu0 0.0
      %1096 = vmatprep.subr.mxu0 0.0
      %1097 = vmatpush2.msra.mxu0 0.0
      %1098 = vmatprep.subr.mxu0 0.0
      %1099 = vmatpush2.msra.mxu0 0.0
      %1100 = vmatprep.subr.mxu0 0.0
      %1101 = vmatpush2.msra.mxu0 0.0
      %1102 = vmatprep.subr.mxu0 0.0
      %1103 = vmatpush2.msra.mxu0 0.0
      %1104 = vmatprep.subr.mxu0 0.0
      %1105 = vmatpush2.msra.mxu0 0.0
      %1106 = vmatprep.subr.mxu0 0.0
      %1107 = vmatpush2.msra.mxu0 0.0
      %1108 = vmatprep.subr.mxu0 0.0
      %1109 = vmatpush2.msra.mxu0 0.0
      %1110 = vmatprep.subr.mxu0 0.0
      %1111 = vmatpush2.msra.mxu0 0.0
      %1112 = vmatprep.subr.mxu0 0.0
      %1113 = vmatpush2.msra.mxu0 0.0
      %1114 = vmatprep.subr.mxu0 0.0
      %1115 = vmatpush2.msra.mxu0 0.0
      %1116 = vmatprep.subr.mxu0 0.0
      %1117 = vmatpush2.msra.mxu0 0.0
      %1118 = vmatprep.subr.mxu0 0.0
      %1119 = vmatpush2.msra.mxu0 0.0
      %1120 = vmatprep.subr.mxu0 0.0
      %1121 = vmatpush2.msra.mxu0 0.0
      %1122 = vmatprep.subr.mxu0 0.0
      %1123 = vmatpush2.msra.mxu0 0.0
      %1124 = vmatprep.subr.mxu0 0.0
      %1125 = vmatpush2.msra.mxu0 0.0
      %1126 = vmatprep.mubr.f32.mxu0 0.0
      %1127 = vmatmul.mubr.f32.gmra.mxu0 %v1060
      %v1128 = vpop.f32.mrf.mxu0
      %v1129 = vadd.f32 0.0, %v1128
      %v1130 = vpop.f32.mrf.mxu0
      %v1131 = vadd.f32 0.0, %v1130
      %1132 = vdwg.mxu0
      %v1133 = vadd.f32 %v1033, %v1129
      %v1134 = vadd.f32 %v1034, %v1131
      %s1135 = scalar_lea.vmem %s5, 16
      %v1136 = vld [vmem:[%s1135] ss:$8 sm:$0x3]
      %1137 = vrot.lane.b32.xlu0 %v343, 111
      %v1138 = vpop.permute.xlu0 %1137
      %1139 = vrot.lane.b32.xlu0 %v344, 111
      %v1140 = vpop.permute.xlu0 %1139
      %vm1141 = vcmp.lt.s32.totalorder %v351, 111
      %v1142 = vsel %vm1141, %v1138, %v1140
      %v1143 = vsel %vm1141, %v1140, %v1138
      %s1144 = scalar_lea.vmem %s3, 64
      %v1145 = vld [vmem:[%s1144] sm:$0xff]
      %v1147 = vlaneseq
      %v1148 = vshrl.u32 %v1147, 7
      %v1149 = vsub.s32 0, %v1148
      %v1150 = vrot.slane %v1136, %v1149
      %v1151 = vlaneseq
      %v1152 = vshrl.u32 %v1151, 7
      %v1153 = vsub.s32 1, %v1152
      %v1154 = vrot.slane %v1136, %v1153
      %v1157 = vmul.f32 %v1142, %v1150
      %v1158 = vmul.f32 %v1143, %v1154
      %v1160 = vsel %vm393, %v1145, 0
      %1162 = vmatprep.subr.mxu0 0.0
      %1163 = vmatpush1.msra.mxu0 0.0
      %1164 = vmatprep.subr.mxu0 0.0
      %1165 = vmatpush1.msra.mxu0 0.0
      %1166 = vmatprep.subr.mxu0 0.0
      %1167 = vmatpush1.msra.mxu0 0.0
      %1168 = vmatprep.subr.mxu0 0.0
      %1169 = vmatpush1.msra.mxu0 0.0
      %1170 = vmatprep.subr.mxu0 0.0
      %1171 = vmatpush1.msra.mxu0 0.0
      %1172 = vmatprep.subr.mxu0 0.0
      %1173 = vmatpush1.msra.mxu0 0.0
      %1174 = vmatprep.subr.mxu0 0.0
      %1175 = vmatpush1.msra.mxu0 0.0
      %1176 = vmatprep.subr.mxu0 0.0
      %1177 = vmatpush1.msra.mxu0 0.0
      %1178 = vmatprep.subr.mxu0 0.0
      %1179 = vmatpush1.msra.mxu0 0.0
      %1180 = vmatprep.subr.mxu0 0.0
      %1181 = vmatpush1.msra.mxu0 0.0
      %1182 = vmatprep.subr.mxu0 0.0
      %1183 = vmatpush1.msra.mxu0 0.0
      %1184 = vmatprep.subr.mxu0 0.0
      %1185 = vmatpush1.msra.mxu0 0.0
      %1186 = vmatprep.subr.mxu0 0.0
      %1187 = vmatpush1.msra.mxu0 0.0
      %1188 = vmatprep.subr.mxu0 0.0
      %1189 = vmatpush1.msra.mxu0 0.0
      %1190 = vmatprep.subr.mxu0 0.0
      %1191 = vmatpush1.msra.mxu0 0.0
      %1192 = vmatprep.subr.mxu0 %v1158
      %1193 = vmatpush1.msra.mxu0 %v1157
      %1194 = vmatprep.subr.mxu0 0.0
      %1195 = vmatpush2.msra.mxu0 0.0
      %1196 = vmatprep.subr.mxu0 0.0
      %1197 = vmatpush2.msra.mxu0 0.0
      %1198 = vmatprep.subr.mxu0 0.0
      %1199 = vmatpush2.msra.mxu0 0.0
      %1200 = vmatprep.subr.mxu0 0.0
      %1201 = vmatpush2.msra.mxu0 0.0
      %1202 = vmatprep.subr.mxu0 0.0
      %1203 = vmatpush2.msra.mxu0 0.0
      %1204 = vmatprep.subr.mxu0 0.0
      %1205 = vmatpush2.msra.mxu0 0.0
      %1206 = vmatprep.subr.mxu0 0.0
      %1207 = vmatpush2.msra.mxu0 0.0
      %1208 = vmatprep.subr.mxu0 0.0
      %1209 = vmatpush2.msra.mxu0 0.0
      %1210 = vmatprep.subr.mxu0 0.0
      %1211 = vmatpush2.msra.mxu0 0.0
      %1212 = vmatprep.subr.mxu0 0.0
      %1213 = vmatpush2.msra.mxu0 0.0
      %1214 = vmatprep.subr.mxu0 0.0
      %1215 = vmatpush2.msra.mxu0 0.0
      %1216 = vmatprep.subr.mxu0 0.0
      %1217 = vmatpush2.msra.mxu0 0.0
      %1218 = vmatprep.subr.mxu0 0.0
      %1219 = vmatpush2.msra.mxu0 0.0
      %1220 = vmatprep.subr.mxu0 0.0
      %1221 = vmatpush2.msra.mxu0 0.0
      %1222 = vmatprep.subr.mxu0 0.0
      %1223 = vmatpush2.msra.mxu0 0.0
      %1224 = vmatprep.subr.mxu0 0.0
      %1225 = vmatpush2.msra.mxu0 0.0
      %1226 = vmatprep.mubr.f32.mxu0 0.0
      %1227 = vmatmul.mubr.f32.gmra.mxu0 %v1160
      %v1228 = vpop.f32.mrf.mxu0
      %v1229 = vadd.f32 0.0, %v1228
      %v1230 = vpop.f32.mrf.mxu0
      %v1231 = vadd.f32 0.0, %v1230
      %1232 = vdwg.mxu0
      %v1233 = vadd.f32 %v1133, %v1229
      %v1234 = vadd.f32 %v1134, %v1231
      %v1235 = vld [vmem:[%s4] sm:$0xff]
      %1237 = vset.pattern.permute.xlu0 0
      %1238 = vperm.xlu0 %1237, %v1235
      %v1239 = vpop.permute.xlu0 %1238
      %v1241 = vadd.f32 %v1233, %v1239
      %v1242 = vadd.f32 %v1234, %v1239
      %v1243 = vmax.f32 %v1241, 0.0
      %v1244 = vmax.f32 %v1242, 0.0
      %1245 = vst [vmem:[%s318] sm:$0xff] %v1243
      %1246 = vst [vmem:[%s318 + $0x8] sm:$0xff] %v1244
      %v1247 = vadd.f32 %v1243, %v1244
      %1248 = vadd.xlane.f32.xlu0 %v1247
      %v1249 = vpop.xlane.xlu0 %1248
      %vm1250 = vcmask 7168
      %1251 = vst.msk [vmem:[%s322] sm:$0xff] %vm1250, %v1249
      %v1252 = vmul.f32 %v1243, %v1243
      %v1253 = vmul.f32 %v1244, %v1244
      %v1254 = vadd.f32 %v1252, %v1253
      %1255 = vadd.xlane.f32.xlu0 %v1254
      %v1256 = vpop.xlane.xlu0 %1255
      %1257 = vst.msk [vmem:[%s326] sm:$0xff] %vm1250, %v1256
      %p1258 = scmp.lt.s32.totalorder %s20, 1
      %s1259 = scalar_select %p1258, %s20, 1
      %s1260 = smul.addr %s1259, 2
      %s1261 = smul.addr %s1260, 8
      %s1262 = scalar_lea.vmem %s6, %s1261
      %p1263 = scmp.lt.s32.totalorder %s20, 1
      %s1264 = scalar_select %p1263, %s20, 1
      %s1265 = smul.addr %s1264, 8
      %s1266 = scalar_lea.vmem %s7, %s1265
      %p1267 = scmp.lt.s32.totalorder %s20, 1
      %s1268 = scalar_select %p1267, %s20, 1
      %s1269 = smul.addr %s1268, 8
      %s1270 = scalar_lea.vmem %s8, %s1269
      // Predicated region
      $region45: #{upsample_forward.6} parent=43 // pred_check
        %p1271 = pneg %p169
      $region46: #{upsample_forward.6} parent=43 // pred_check_branch
        %1273 = sbr.rel (%p1271) target = $region48
      $region47: #{upsample_forward.6} parent=43 // pred_region
        _
      $region48: #{upsample_forward.6} parent=43 // pred_fallthru
        _
      // Predicated region
      $region49: #{upsample_forward.6} parent=43 // pred_check
        %p1274 = pneg %p195
      $region50: #{upsample_forward.6} parent=43 // pred_check_branch
        %1276 = sbr.rel (%p1274) target = $region52
      $region51: #{upsample_forward.6} parent=43 // pred_region
        _
      $region52: #{upsample_forward.6} parent=43 // pred_fallthru
        _
      // Predicated region
      $region53: #{upsample_forward.6} parent=43 // pred_check
        %p1277 = pneg %p221
      $region54: #{upsample_forward.6} parent=43 // pred_check_branch
        %1279 = sbr.rel (%p1277) target = $region56
      $region55: #{upsample_forward.6} parent=43 // pred_region
        _
      $region56: #{upsample_forward.6} parent=43 // pred_fallthru
        _
    $region44: #{upsample_forward.6} parent=5 // pred_fallthru
      _
    %p1280 = scmp.le.s32.totalorder 2, %s15
    // Predicated region
    $region57: #{upsample_forward.6} parent=5 // pred_check
      %p1281 = pneg %p1280
    $region58: #{upsample_forward.6} parent=5 // pred_check_branch
      %1283 = sbr.rel (%p1281) target = $region60
    $region59: #{upsample_forward.6} parent=5 // pred_region
      %s1284 = ssub.s32 %s15, 2
      // Predicated region
      $region61: #{upsample_forward.6} parent=59 // pred_check
        %p1285 = pneg %p175
      $region62: #{upsample_forward.6} parent=59 // pred_check_branch
        %1287 = sbr.rel (%p1285) target = $region64
      $region63: #{upsample_forward.6} parent=59 // pred_region
        %p1288 = scmp.lt.s32.totalorder %s21, 1
        %s1289 = scalar_select %p1288, %s21, 1
        %s1290 = smul.addr %s1289, 2
        %s1291 = smul.addr %s1290, 8
        %s1292 = scalar_lea.vmem %s6, %s1291
      $region64: #{upsample_forward.6} parent=59 // pred_fallthru
        _
      // Predicated region
      $region65: #{upsample_forward.6} parent=59 // pred_check
        %p1293 = pneg %p201
      $region66: #{upsample_forward.6} parent=59 // pred_check_branch
        %1295 = sbr.rel (%p1293) target = $region68
      $region67: #{upsample_forward.6} parent=59 // pred_region
        %p1296 = scmp.lt.s32.totalorder %s21, 1
        %s1297 = scalar_select %p1296, %s21, 1
        %s1298 = smul.addr %s1297, 8
        %s1299 = scalar_lea.vmem %s7, %s1298
      $region68: #{upsample_forward.6} parent=59 // pred_fallthru
        _
      // Predicated region
      $region69: #{upsample_forward.6} parent=59 // pred_check
        %p1300 = pneg %p227
      $region70: #{upsample_forward.6} parent=59 // pred_check_branch
        %1302 = sbr.rel (%p1300) target = $region72
      $region71: #{upsample_forward.6} parent=59 // pred_region
        %p1303 = scmp.lt.s32.totalorder %s21, 1
        %s1304 = scalar_select %p1303, %s21, 1
        %s1305 = smul.addr %s1304, 8
        %s1306 = scalar_lea.vmem %s8, %s1305
      $region72: #{upsample_forward.6} parent=59 // pred_fallthru
        _
    $region60: #{upsample_forward.6} parent=5 // pred_fallthru
      _
  $region6: #{upsample_forward.6} parent=0 // loop_footer
    %s19 = sadd.s32 1, %s15
  $region7: #{upsample_forward.6} parent=0 // loop_footer_branch
    %14 = sbr.rel target = $region3
  $region8: #{upsample_forward.6} parent=0 // loop_exit
    _

// kernel: upsample_forward.5
$region0: #{upsample_forward.5}
  #allocation0 [shape = 'u32[]', space=smem, size = 0x4, offset = 0x4, fixed_abs, tag = 'smem constant byte address 0x4 - core index']
  #allocation1 [shape = 'u32[144,128]{1,0:T(1,128)}', space=vmem, size = 0x12000, scoped, tag = 'internal scratch']
  %s0 = inlined_call_operand.vmem [shape: f32[2,4,256], index: 0, kind: input, shape index: {}]
  %s1 = inlined_call_operand.vmem [shape: f32[2,4,256], index: 1, kind: input, shape index: {}]
  %s2 = inlined_call_operand.vmem [shape: f32[9,8,4], index: 2, kind: input, shape index: {}]
  %s3 = inlined_call_operand.vmem [shape: f32[9,8,4], index: 3, kind: input, shape index: {}]
  %s4 = inlined_call_operand.vmem [shape: f32[8,1], index: 4, kind: input, shape index: {}]
  %s5 = inlined_call_operand.vmem [shape: f32[9,256], index: 5, kind: input, shape index: {}]
  %s6 = inlined_call_operand.vmem [shape: f32[2,8,256], index: 6, kind: output, shape index: {0}]
  %s7 = inlined_call_operand.vmem [shape: f32[2,8,1], index: 7, kind: output, shape index: {1}]
  %s8 = inlined_call_operand.vmem [shape: f32[2,8,1], index: 8, kind: output, shape index: {2}]
  %9 = xla_tuple %s6, %s7, %s8
  %s10 = sld [smem:[#allocation0]]
  $region73: #{upsample_forward.5} parent=0
    _
  %s12 = ssub.s32 1, %s10
  %s13 = scalar_select 0, %s12, %s10
  loop: start=0, step=1, limit=4
  $region2: #{upsample_forward.5} parent=0 // loop_pre_header
    _
  $region3: #{upsample_forward.5} parent=0 // loop_header
    %s15 = sphi 0, %s19
    %p16 = scmp.ge.s32.totalorder %s15, 4
    %s25 = sphi 0, %s27
    %s28 = sphi 0, %s25
    %s29 = sphi 0, %s28
    %s45 = sphi 0, %s29
    %s51 = sphi 0, %s53
    %s54 = sphi 0, %s51
    %s55 = sphi 0, %s54
    %s71 = sphi 0, %s55
    %s75 = sphi 0, %s75
    %s77 = sphi 0, %s75
    %s78 = sphi 0, %s77
    %s92 = sphi 0, %s78
    %s96 = sphi 0, %s96
    %s98 = sphi 0, %s96
    %s99 = sphi 0, %s98
    %s113 = sphi 0, %s99
    %s117 = sphi 0, %s117
    %s119 = sphi 0, %s117
    %s120 = sphi 0, %s119
    %s134 = sphi 0, %s120
    %s138 = sphi 0, %s138
    %s140 = sphi 0, %s138
    %s141 = sphi 0, %s140
    %s155 = sphi 0, %s141
    %s161 = sphi 0, %s163
    %s164 = sphi 0, %s161
    %s165 = sphi 0, %s164
    %s181 = sphi 0, %s165
    %s187 = sphi 0, %s189
    %s190 = sphi 0, %s187
    %s191 = sphi 0, %s190
    %s207 = sphi 0, %s191
    %s213 = sphi 0, %s215
    %s216 = sphi 0, %s213
    %s217 = sphi 0, %s216
    %s233 = sphi 0, %s217
  $region4: #{upsample_forward.5} parent=0 // loop_header_branch
    %18 = sbr.rel (%p16) target = $region8
  $region5: #{upsample_forward.5} parent=0 // loop_body
    %s20 = ssub.s32 %s15, 1
    %s21 = ssub.s32 %s15, 2
    %s22 = sadd.s32 %s15, 1
    %s23 = ssub.s32 %s15, %s22
    %p24 = scmp.eq.s32.totalorder %s23, 0
    %s26 = sadd.s32 %s25, 1
    %s27 = scalar_select %p24, %s25, %s26
    %p30 = pneg %p24
    %p31 = scmp.eq.s32.totalorder %s15, 1
    %p32 = por %p30, %p31
    %p33 = scmp.ne.s32.totalorder %s25, %s28
    %p34 = scmp.eq.s32.totalorder %s15, 0
    %p35 = por %p33, %p34
    %p36 = scmp.ne.s32.totalorder %s25, %s28
    %p37 = scmp.eq.s32.totalorder %s20, 1
    %p38 = por %p36, %p37
    %p39 = scmp.ne.s32.totalorder %s28, %s29
    %p40 = scmp.eq.s32.totalorder %s20, 0
    %p41 = por %p39, %p40
    %p42 = scmp.ne.s32.totalorder %s28, %s29
    %p43 = scmp.eq.s32.totalorder %s21, 1
    %p44 = por %p42, %p43
    %p46 = scmp.ne.s32.totalorder %s29, %s45
    %p47 = scmp.eq.s32.totalorder %s21, 0
    %p48 = por %p46, %p47
    %s49 = ssub.s32 %s15, %s22
    %p50 = scmp.eq.s32.totalorder %s49, 0
    %s52 = sadd.s32 %s51, 1
    %s53 = scalar_select %p50, %s51, %s52
    %p56 = pneg %p50
    %p57 = scmp.eq.s32.totalorder %s15, 1
    %p58 = por %p56, %p57
    %p59 = scmp.ne.s32.totalorder %s51, %s54
    %p60 = scmp.eq.s32.totalorder %s15, 0
    %p61 = por %p59, %p60
    %p62 = scmp.ne.s32.totalorder %s51, %s54
    %p63 = scmp.eq.s32.totalorder %s20, 1
    %p64 = por %p62, %p63
    %p65 = scmp.ne.s32.totalorder %s54, %s55
    %p66 = scmp.eq.s32.totalorder %s20, 0
    %p67 = por %p65, %p66
    %p68 = scmp.ne.s32.totalorder %s54, %s55
    %p69 = scmp.eq.s32.totalorder %s21, 1
    %p70 = por %p68, %p69
    %p72 = scmp.ne.s32.totalorder %s55, %s71
    %p73 = scmp.eq.s32.totalorder %s21, 0
    %p74 = por %p72, %p73
    %s76 = sadd.s32 %s75, 1
    %p79 = scmp.eq.s32.totalorder %s15, 1
    %p80 = scmp.ne.s32.totalorder %s75, %s77
    %p81 = scmp.eq.s32.totalorder %s15, 0
    %p82 = por %p80, %p81
    %p83 = scmp.ne.s32.totalorder %s75, %s77
    %p84 = scmp.eq.s32.totalorder %s20, 1
    %p85 = por %p83, %p84
    %p86 = scmp.ne.s32.totalorder %s77, %s78
    %p87 = scmp.eq.s32.totalorder %s20, 0
    %p88 = por %p86, %p87
    %p89 = scmp.ne.s32.totalorder %s77, %s78
    %p90 = scmp.eq.s32.totalorder %s21, 1
    %p91 = por %p89, %p90
    %p93 = scmp.ne.s32.totalorder %s78, %s92
    %p94 = scmp.eq.s32.totalorder %s21, 0
    %p95 = por %p93, %p94
    %s97 = sadd.s32 %s96, 1
    %p100 = scmp.eq.s32.totalorder %s15, 1
    %p101 = scmp.ne.s32.totalorder %s96, %s98
    %p102 = scmp.eq.s32.totalorder %s15, 0
    %p103 = por %p101, %p102
    %p104 = scmp.ne.s32.totalorder %s96, %s98
    %p105 = scmp.eq.s32.totalorder %s20, 1
    %p106 = por %p104, %p105
    %p107 = scmp.ne.s32.totalorder %s98, %s99
    %p108 = scmp.eq.s32.totalorder %s20, 0
    %p109 = por %p107, %p108
    %p110 = scmp.ne.s32.totalorder %s98, %s99
    %p111 = scmp.eq.s32.totalorder %s21, 1
    %p112 = por %p110, %p111
    %p114 = scmp.ne.s32.totalorder %s99, %s113
    %p115 = scmp.eq.s32.totalorder %s21, 0
    %p116 = por %p114, %p115
    %s118 = sadd.s32 %s117, 1
    %p121 = scmp.eq.s32.totalorder %s15, 1
    %p122 = scmp.ne.s32.totalorder %s117, %s119
    %p123 = scmp.eq.s32.totalorder %s15, 0
    %p124 = por %p122, %p123
    %p125 = scmp.ne.s32.totalorder %s117, %s119
    %p126 = scmp.eq.s32.totalorder %s20, 1
    %p127 = por %p125, %p126
    %p128 = scmp.ne.s32.totalorder %s119, %s120
    %p129 = scmp.eq.s32.totalorder %s20, 0
    %p130 = por %p128, %p129
    %p131 = scmp.ne.s32.totalorder %s119, %s120
    %p132 = scmp.eq.s32.totalorder %s21, 1
    %p133 = por %p131, %p132
    %p135 = scmp.ne.s32.totalorder %s120, %s134
    %p136 = scmp.eq.s32.totalorder %s21, 0
    %p137 = por %p135, %p136
    %s139 = sadd.s32 %s138, 1
    %p142 = scmp.eq.s32.totalorder %s15, 1
    %p143 = scmp.ne.s32.totalorder %s138, %s140
    %p144 = scmp.eq.s32.totalorder %s15, 0
    %p145 = por %p143, %p144
    %p146 = scmp.ne.s32.totalorder %s138, %s140
    %p147 = scmp.eq.s32.totalorder %s20, 1
    %p148 = por %p146, %p147
    %p149 = scmp.ne.s32.totalorder %s140, %s141
    %p150 = scmp.eq.s32.totalorder %s20, 0
    %p151 = por %p149, %p150
    %p152 = scmp.ne.s32.totalorder %s140, %s141
    %p153 = scmp.eq.s32.totalorder %s21, 1
    %p154 = por %p152, %p153
    %p156 = scmp.ne.s32.totalorder %s141, %s155
    %p157 = scmp.eq.s32.totalorder %s21, 0
    %p158 = por %p156, %p157
    %s159 = ssub.s32 %s15, %s22
    %p160 = scmp.eq.s32.totalorder %s159, 0
    %s162 = sadd.s32 %s161, 1
    %s163 = scalar_select %p160, %s161, %s162
    %p166 = pneg %p160
    %p167 = scmp.eq.s32.totalorder %s15, 1
    %p168 = por %p166, %p167
    %p169 = scmp.ne.s32.totalorder %s161, %s164
    %p170 = scmp.eq.s32.totalorder %s15, 0
    %p171 = por %p169, %p170
    %p172 = scmp.ne.s32.totalorder %s161, %s164
    %p173 = scmp.eq.s32.totalorder %s20, 1
    %p174 = por %p172, %p173
    %p175 = scmp.ne.s32.totalorder %s164, %s165
    %p176 = scmp.eq.s32.totalorder %s20, 0
    %p177 = por %p175, %p176
    %p178 = scmp.ne.s32.totalorder %s164, %s165
    %p179 = scmp.eq.s32.totalorder %s21, 1
    %p180 = por %p178, %p179
    %p182 = scmp.ne.s32.totalorder %s165, %s181
    %p183 = scmp.eq.s32.totalorder %s21, 0
    %p184 = por %p182, %p183
    %s185 = ssub.s32 %s15, %s22
    %p186 = scmp.eq.s32.totalorder %s185, 0
    %s188 = sadd.s32 %s187, 1
    %s189 = scalar_select %p186, %s187, %s188
    %p192 = pneg %p186
    %p193 = scmp.eq.s32.totalorder %s15, 1
    %p194 = por %p192, %p193
    %p195 = scmp.ne.s32.totalorder %s187, %s190
    %p196 = scmp.eq.s32.totalorder %s15, 0
    %p197 = por %p195, %p196
    %p198 = scmp.ne.s32.totalorder %s187, %s190
    %p199 = scmp.eq.s32.totalorder %s20, 1
    %p200 = por %p198, %p199
    %p201 = scmp.ne.s32.totalorder %s190, %s191
    %p202 = scmp.eq.s32.totalorder %s20, 0
    %p203 = por %p201, %p202
    %p204 = scmp.ne.s32.totalorder %s190, %s191
    %p205 = scmp.eq.s32.totalorder %s21, 1
    %p206 = por %p204, %p205
    %p208 = scmp.ne.s32.totalorder %s191, %s207
    %p209 = scmp.eq.s32.totalorder %s21, 0
    %p210 = por %p208, %p209
    %s211 = ssub.s32 %s15, %s22
    %p212 = scmp.eq.s32.totalorder %s211, 0
    %s214 = sadd.s32 %s213, 1
    %s215 = scalar_select %p212, %s213, %s214
    %p218 = pneg %p212
    %p219 = scmp.eq.s32.totalorder %s15, 1
    %p220 = por %p218, %p219
    %p221 = scmp.ne.s32.totalorder %s213, %s216
    %p222 = scmp.eq.s32.totalorder %s15, 0
    %p223 = por %p221, %p222
    %p224 = scmp.ne.s32.totalorder %s213, %s216
    %p225 = scmp.eq.s32.totalorder %s20, 1
    %p226 = por %p224, %p225
    %p227 = scmp.ne.s32.totalorder %s216, %s217
    %p228 = scmp.eq.s32.totalorder %s20, 0
    %p229 = por %p227, %p228
    %p230 = scmp.ne.s32.totalorder %s216, %s217
    %p231 = scmp.eq.s32.totalorder %s21, 1
    %p232 = por %p230, %p231
    %p234 = scmp.ne.s32.totalorder %s217, %s233
    %p235 = scmp.eq.s32.totalorder %s21, 0
    %p236 = por %p234, %p235
    %p237 = scmp.le.s32.totalorder 1, %s15
    %p238 = scmp.lt.s32.totalorder %s15, 3
    %p239 = pnand %p237, %p238
    %p240 = pneg %p239
    // Predicated region
    $region9: #{upsample_forward.5} parent=5 // pred_check
      _
    $region10: #{upsample_forward.5} parent=5 // pred_check_branch
      %242 = sbr.rel (%p239) target = $region12
    $region11: #{upsample_forward.5} parent=5 // pred_region
      %s243 = ssub.s32 %s15, 1
      // Predicated region
      $region13: #{upsample_forward.5} parent=11 // pred_check
        %p244 = pneg %p88
      $region14: #{upsample_forward.5} parent=11 // pred_check_branch
        %246 = sbr.rel (%p244) target = $region16
      $region15: #{upsample_forward.5} parent=11 // pred_region
        _
      $region16: #{upsample_forward.5} parent=11 // pred_fallthru
        _
      // Predicated region
      $region17: #{upsample_forward.5} parent=11 // pred_check
        %p247 = pneg %p109
      $region18: #{upsample_forward.5} parent=11 // pred_check_branch
        %249 = sbr.rel (%p247) target = $region20
      $region19: #{upsample_forward.5} parent=11 // pred_region
        _
      $region20: #{upsample_forward.5} parent=11 // pred_fallthru
        _
      // Predicated region
      $region21: #{upsample_forward.5} parent=11 // pred_check
        %p250 = pneg %p130
      $region22: #{upsample_forward.5} parent=11 // pred_check_branch
        %252 = sbr.rel (%p250) target = $region24
      $region23: #{upsample_forward.5} parent=11 // pred_region
        _
      $region24: #{upsample_forward.5} parent=11 // pred_fallthru
        _
      // Predicated region
      $region25: #{upsample_forward.5} parent=11 // pred_check
        %p253 = pneg %p151
      $region26: #{upsample_forward.5} parent=11 // pred_check_branch
        %255 = sbr.rel (%p253) target = $region28
      $region27: #{upsample_forward.5} parent=11 // pred_region
        _
      $region28: #{upsample_forward.5} parent=11 // pred_fallthru
        _
    $region12: #{upsample_forward.5} parent=5 // pred_fallthru
      _
    %p256 = scmp.lt.s32.totalorder %s15, 2
    // Predicated region
    $region29: #{upsample_forward.5} parent=5 // pred_check
      %p257 = pneg %p256
    $region30: #{upsample_forward.5} parent=5 // pred_check_branch
      %259 = sbr.rel (%p257) target = $region32
    $region31: #{upsample_forward.5} parent=5 // pred_region
      // Predicated region
      $region33: #{upsample_forward.5} parent=31 // pred_check
        %p260 = pneg %p35
      $region34: #{upsample_forward.5} parent=31 // pred_check_branch
        %262 = sbr.rel (%p260) target = $region36
      $region35: #{upsample_forward.5} parent=31 // pred_region
        %p263 = scmp.lt.s32.totalorder %s15, 1
        %s264 = scalar_select %p263, %s15, 1
        %s265 = smul.addr %s264, 2
        %s266 = smul.addr %s265, 4
        %s267 = scalar_lea.vmem %s0, %s266
      $region36: #{upsample_forward.5} parent=31 // pred_fallthru
        _
      // Predicated region
      $region37: #{upsample_forward.5} parent=31 // pred_check
        %p268 = pneg %p61
      $region38: #{upsample_forward.5} parent=31 // pred_check_branch
        %270 = sbr.rel (%p268) target = $region40
      $region39: #{upsample_forward.5} parent=31 // pred_region
        %p271 = scmp.lt.s32.totalorder %s15, 1
        %s272 = scalar_select %p271, %s15, 1
        %s273 = smul.addr %s272, 2
        %s274 = smul.addr %s273, 4
        %s275 = scalar_lea.vmem %s1, %s274
      $region40: #{upsample_forward.5} parent=31 // pred_fallthru
        _
    $region32: #{upsample_forward.5} parent=5 // pred_fallthru
      _
    %p276 = scmp.le.s32.totalorder 1, %s15
    %p277 = scmp.lt.s32.totalorder %s15, 3
    %p278 = pnand %p276, %p277
    %p279 = pneg %p278
    // Predicated region
    $region41: #{upsample_forward.5} parent=5 // pred_check
      _
    $region42: #{upsample_forward.5} parent=5 // pred_check_branch
      %281 = sbr.rel (%p278) target = $region44
    $region43: #{upsample_forward.5} parent=5 // pred_region
      %s282 = ssub.s32 %s15, 1
      %p283 = scmp.lt.s32.totalorder %s20, 1
      %s284 = scalar_select %p283, %s20, 1
      %s285 = smul.addr %s284, 2
      %s286 = smul.addr %s285, 4
      %s287 = scalar_lea.vmem %s0, %s286
      %p288 = pneg %p41
      %p289 = pneg %p38
      %p290 = scmp.lt.s32.totalorder %s20, 1
      %s291 = scalar_select %p290, %s20, 1
      %s292 = smul.addr %s291, 2
      %s293 = smul.addr %s292, 4
      %s294 = scalar_lea.vmem %s1, %s293
      %p295 = pneg %p67
      %p296 = pneg %p64
      %p297 = pneg %p88
      %p298 = pneg %p85
      %p299 = pneg %p109
      %p300 = pneg %p106
      %p301 = pneg %p130
      %p302 = pneg %p127
      %p303 = pneg %p151
      %p304 = pneg %p148
      %p305 = pneg %p177
      %p306 = pneg %p174
      %p307 = scmp.lt.s32.totalorder %s20, 1
      %s308 = scalar_select %p307, %s20, 1
      %s309 = smul.addr %s308, 2
      %s310 = smul.addr %s309, 8
      %s311 = scalar_lea.vmem %s6, %s310
      %p312 = pneg %p203
      %p313 = pneg %p200
      %p314 = scmp.lt.s32.totalorder %s20, 1
      %s315 = scalar_select %p314, %s20, 1
      %s316 = smul.addr %s315, 8
      %s317 = scalar_lea.vmem %s7, %s316
      %p318 = pneg %p229
      %p319 = pneg %p226
      %p320 = scmp.lt.s32.totalorder %s20, 1
      %s321 = scalar_select %p320, %s20, 1
      %s322 = smul.addr %s321, 8
      %s323 = scalar_lea.vmem %s8, %s322
      %p324 = scmp.lt.s32.totalorder %s20, 1
      %s325 = scalar_select %p324, %s20, 1
      %s326 = smul.addr %s325, 2
      %s327 = smul.addr %s326, 4
      %s328 = scalar_lea.vmem %s0, %s327
      %p329 = scmp.lt.s32.totalorder %s20, 1
      %s330 = scalar_select %p329, %s20, 1
      %s331 = smul.addr %s330, 2
      %s332 = smul.addr %s331, 4
      %s333 = scalar_lea.vmem %s1, %s332
      %p334 = scmp.lt.s32.totalorder %s20, 1
      %s335 = scalar_select %p334, %s20, 1
      %s336 = smul.addr %s335, 2
      %s337 = smul.addr %s336, 8
      %s338 = scalar_lea.vmem %s6, %s337
      %p339 = scmp.lt.s32.totalorder %s20, 1
      %s340 = scalar_select %p339, %s20, 1
      %s341 = smul.addr %s340, 8
      %s342 = scalar_lea.vmem %s7, %s341
      %p343 = scmp.lt.s32.totalorder %s20, 1
      %s344 = scalar_select %p343, %s20, 1
      %s345 = smul.addr %s344, 8
      %s346 = scalar_lea.vmem %s8, %s345
      %v347 = vld [vmem:[%s328] sm:$0xff]
      %v348 = vld [vmem:[%s333] sm:$0xff]
      %v349 = vld [vmem:[%s5] ss:$8 sm:$0x3]
      %v351 = vcombine.high %v347, %v347
      %353 = vrot.lane.b32.xlu0 %v347, 17
      %v354 = vpop.permute.xlu0 %353
      %355 = vrot.lane.b32.xlu0 %v351, 17
      %v356 = vpop.permute.xlu0 %355
      %v357 = vlaneseq
      %v358 = vand.u32 %v357, 127
      %vm359 = vcmp.lt.s32.totalorder %v358, 17
      %v360 = vsel %vm359, %v354, %v356
      %v361 = vsel %vm359, %v356, %v354
      %v362 = vld [vmem:[%s2] sm:$0xff]
      %v364 = vlaneseq
      %v365 = vshrl.u32 %v364, 7
      %v366 = vsub.s32 0, %v365
      %v367 = vrot.slane %v349, %v366
      %v368 = vlaneseq
      %v369 = vshrl.u32 %v368, 7
      %v370 = vsub.s32 1, %v369
      %v371 = vrot.slane %v349, %v370
      %v374 = vmul.f32 %v361, %v367
      %v375 = vmul.f32 %v360, %v371
      %v377 = vcombine.high %v348, %v348
      %379 = vrot.lane.b32.xlu0 %v348, 17
      %v380 = vpop.permute.xlu0 %379
      %381 = vrot.lane.b32.xlu0 %v377, 17
      %v382 = vpop.permute.xlu0 %381
      %v383 = vsel %vm359, %v380, %v382
      %v384 = vsel %vm359, %v382, %v380
      %v385 = vld [vmem:[%s3] sm:$0xff]
      %v386 = vmul.f32 %v384, %v367
      %v387 = vmul.f32 %v383, %v371
      %vm388 = vcmask 31744
      %v390 = vsel %vm388, %v385, 0
      %vm392 = vcmask 1043456
      %v394 = vsel %vm392, %v386, 0
      %v397 = vsel %vm392, %v387, 0
      %399 = vmatprep.subr.mxu0 0.0
      %400 = vmatpush1.msra.mxu0 0.0
      %401 = vmatprep.subr.mxu0 0.0
      %402 = vmatpush1.msra.mxu0 0.0
      %403 = vmatprep.subr.mxu0 0.0
      %404 = vmatpush1.msra.mxu0 0.0
      %405 = vmatprep.subr.mxu0 0.0
      %406 = vmatpush1.msra.mxu0 0.0
      %407 = vmatprep.subr.mxu0 0.0
      %408 = vmatpush1.msra.mxu0 0.0
      %409 = vmatprep.subr.mxu0 0.0
      %410 = vmatpush1.msra.mxu0 0.0
      %411 = vmatprep.subr.mxu0 0.0
      %412 = vmatpush1.msra.mxu0 0.0
      %413 = vmatprep.subr.mxu0 0.0
      %414 = vmatpush1.msra.mxu0 0.0
      %415 = vmatprep.subr.mxu0 0.0
      %416 = vmatpush1.msra.mxu0 0.0
      %417 = vmatprep.subr.mxu0 0.0
      %418 = vmatpush1.msra.mxu0 0.0
      %419 = vmatprep.subr.mxu0 0.0
      %420 = vmatpush1.msra.mxu0 0.0
      %421 = vmatprep.subr.mxu0 0.0
      %422 = vmatpush1.msra.mxu0 0.0
      %423 = vmatprep.subr.mxu0 0.0
      %424 = vmatpush1.msra.mxu0 0.0
      %425 = vmatprep.subr.mxu0 0.0
      %426 = vmatpush1.msra.mxu0 0.0
      %427 = vmatprep.subr.mxu0 0.0
      %428 = vmatpush1.msra.mxu0 0.0
      %429 = vmatprep.subr.mxu0 %v397
      %430 = vmatpush1.msra.mxu0 %v394
      %431 = vmatprep.subr.mxu0 0.0
      %432 = vmatpush2.msra.mxu0 0.0
      %433 = vmatprep.subr.mxu0 0.0
      %434 = vmatpush2.msra.mxu0 0.0
      %435 = vmatprep.subr.mxu0 0.0
      %436 = vmatpush2.msra.mxu0 0.0
      %437 = vmatprep.subr.mxu0 0.0
      %438 = vmatpush2.msra.mxu0 0.0
      %439 = vmatprep.subr.mxu0 0.0
      %440 = vmatpush2.msra.mxu0 0.0
      %441 = vmatprep.subr.mxu0 0.0
      %442 = vmatpush2.msra.mxu0 0.0
      %443 = vmatprep.subr.mxu0 0.0
      %444 = vmatpush2.msra.mxu0 0.0
      %445 = vmatprep.subr.mxu0 0.0
      %446 = vmatpush2.msra.mxu0 0.0
      %447 = vmatprep.subr.mxu0 0.0
      %448 = vmatpush2.msra.mxu0 0.0
      %449 = vmatprep.subr.mxu0 0.0
      %450 = vmatpush2.msra.mxu0 0.0
      %451 = vmatprep.subr.mxu0 0.0
      %452 = vmatpush2.msra.mxu0 0.0
      %453 = vmatprep.subr.mxu0 0.0
      %454 = vmatpush2.msra.mxu0 0.0
      %455 = vmatprep.subr.mxu0 0.0
      %456 = vmatpush2.msra.mxu0 0.0
      %457 = vmatprep.subr.mxu0 0.0
      %458 = vmatpush2.msra.mxu0 0.0
      %459 = vmatprep.subr.mxu0 0.0
      %460 = vmatpush2.msra.mxu0 0.0
      %461 = vmatprep.subr.mxu0 0.0
      %462 = vmatpush2.msra.mxu0 0.0
      %463 = vmatprep.mubr.f32.mxu0 0.0
      %464 = vmatmul.mubr.f32.gmra.mxu0 %v390
      %v465 = vpop.f32.mrf.mxu0
      %v466 = vadd.f32 0.0, %v465
      %v467 = vpop.f32.mrf.mxu0
      %v468 = vadd.f32 0.0, %v467
      %469 = vdwg.mxu0
      %v471 = vsel %vm388, %v362, 0
      %v474 = vsel %vm392, %v374, 0
      %v477 = vsel %vm392, %v375, 0
      %479 = vmatprep.subr.mxu0 0.0
      %480 = vmatpush1.msra.mxu0 0.0
      %481 = vmatprep.subr.mxu0 0.0
      %482 = vmatpush1.msra.mxu0 0.0
      %483 = vmatprep.subr.mxu0 0.0
      %484 = vmatpush1.msra.mxu0 0.0
      %485 = vmatprep.subr.mxu0 0.0
      %486 = vmatpush1.msra.mxu0 0.0
      %487 = vmatprep.subr.mxu0 0.0
      %488 = vmatpush1.msra.mxu0 0.0
      %489 = vmatprep.subr.mxu0 0.0
      %490 = vmatpush1.msra.mxu0 0.0
      %491 = vmatprep.subr.mxu0 0.0
      %492 = vmatpush1.msra.mxu0 0.0
      %493 = vmatprep.subr.mxu0 0.0
      %494 = vmatpush1.msra.mxu0 0.0
      %495 = vmatprep.subr.mxu0 0.0
      %496 = vmatpush1.msra.mxu0 0.0
      %497 = vmatprep.subr.mxu0 0.0
      %498 = vmatpush1.msra.mxu0 0.0
      %499 = vmatprep.subr.mxu0 0.0
      %500 = vmatpush1.msra.mxu0 0.0
      %501 = vmatprep.subr.mxu0 0.0
      %502 = vmatpush1.msra.mxu0 0.0
      %503 = vmatprep.subr.mxu0 0.0
      %504 = vmatpush1.msra.mxu0 0.0
      %505 = vmatprep.subr.mxu0 0.0
      %506 = vmatpush1.msra.mxu0 0.0
      %507 = vmatprep.subr.mxu0 0.0
      %508 = vmatpush1.msra.mxu0 0.0
      %509 = vmatprep.subr.mxu0 %v477
      %510 = vmatpush1.msra.mxu0 %v474
      %511 = vmatprep.subr.mxu0 0.0
      %512 = vmatpush2.msra.mxu0 0.0
      %513 = vmatprep.subr.mxu0 0.0
      %514 = vmatpush2.msra.mxu0 0.0
      %515 = vmatprep.subr.mxu0 0.0
      %516 = vmatpush2.msra.mxu0 0.0
      %517 = vmatprep.subr.mxu0 0.0
      %518 = vmatpush2.msra.mxu0 0.0
      %519 = vmatprep.subr.mxu0 0.0
      %520 = vmatpush2.msra.mxu0 0.0
      %521 = vmatprep.subr.mxu0 0.0
      %522 = vmatpush2.msra.mxu0 0.0
      %523 = vmatprep.subr.mxu0 0.0
      %524 = vmatpush2.msra.mxu0 0.0
      %525 = vmatprep.subr.mxu0 0.0
      %526 = vmatpush2.msra.mxu0 0.0
      %527 = vmatprep.subr.mxu0 0.0
      %528 = vmatpush2.msra.mxu0 0.0
      %529 = vmatprep.subr.mxu0 0.0
      %530 = vmatpush2.msra.mxu0 0.0
      %531 = vmatprep.subr.mxu0 0.0
      %532 = vmatpush2.msra.mxu0 0.0
      %533 = vmatprep.subr.mxu0 0.0
      %534 = vmatpush2.msra.mxu0 0.0
      %535 = vmatprep.subr.mxu0 0.0
      %536 = vmatpush2.msra.mxu0 0.0
      %537 = vmatprep.subr.mxu0 0.0
      %538 = vmatpush2.msra.mxu0 0.0
      %539 = vmatprep.subr.mxu0 0.0
      %540 = vmatpush2.msra.mxu0 0.0
      %541 = vmatprep.subr.mxu0 0.0
      %542 = vmatpush2.msra.mxu0 0.0
      %543 = vmatprep.mubr.f32.mxu0 0.0
      %544 = vmatmul.mubr.f32.gmra.mxu0 %v471
      %v545 = vpop.f32.mrf.mxu0
      %v546 = vadd.f32 %v466, %v545
      %v547 = vpop.f32.mrf.mxu0
      %v548 = vadd.f32 %v468, %v547
      %549 = vdwg.mxu0
      %s550 = scalar_lea.vmem %s5, 1
      %v551 = vld [vmem:[%s550] ss:$8 sm:$0x3]
      %552 = vrot.lane.b32.xlu0 %v347, 16
      %v553 = vpop.permute.xlu0 %552
      %554 = vrot.lane.b32.xlu0 %v351, 16
      %v555 = vpop.permute.xlu0 %554
      %vm556 = vcmp.lt.s32.totalorder %v358, 16
      %v557 = vsel %vm556, %v553, %v555
      %v558 = vsel %vm556, %v555, %v553
      %s559 = scalar_lea.vmem %s2, 8
      %v560 = vld [vmem:[%s559] sm:$0xff]
      %v562 = vlaneseq
      %v563 = vshrl.u32 %v562, 7
      %v564 = vsub.s32 0, %v563
      %v565 = vrot.slane %v551, %v564
      %v566 = vlaneseq
      %v567 = vshrl.u32 %v566, 7
      %v568 = vsub.s32 1, %v567
      %v569 = vrot.slane %v551, %v568
      %v572 = vmul.f32 %v558, %v565
      %v573 = vmul.f32 %v557, %v569
      %v575 = vsel %vm388, %v560, 0
      %v578 = vsel %vm392, %v572, 0
      %v581 = vsel %vm392, %v573, 0
      %583 = vmatprep.subr.mxu0 0.0
      %584 = vmatpush1.msra.mxu0 0.0
      %585 = vmatprep.subr.mxu0 0.0
      %586 = vmatpush1.msra.mxu0 0.0
      %587 = vmatprep.subr.mxu0 0.0
      %588 = vmatpush1.msra.mxu0 0.0
      %589 = vmatprep.subr.mxu0 0.0
      %590 = vmatpush1.msra.mxu0 0.0
      %591 = vmatprep.subr.mxu0 0.0
      %592 = vmatpush1.msra.mxu0 0.0
      %593 = vmatprep.subr.mxu0 0.0
      %594 = vmatpush1.msra.mxu0 0.0
      %595 = vmatprep.subr.mxu0 0.0
      %596 = vmatpush1.msra.mxu0 0.0
      %597 = vmatprep.subr.mxu0 0.0
      %598 = vmatpush1.msra.mxu0 0.0
      %599 = vmatprep.subr.mxu0 0.0
      %600 = vmatpush1.msra.mxu0 0.0
      %601 = vmatprep.subr.mxu0 0.0
      %602 = vmatpush1.msra.mxu0 0.0
      %603 = vmatprep.subr.mxu0 0.0
      %604 = vmatpush1.msra.mxu0 0.0
      %605 = vmatprep.subr.mxu0 0.0
      %606 = vmatpush1.msra.mxu0 0.0
      %607 = vmatprep.subr.mxu0 0.0
      %608 = vmatpush1.msra.mxu0 0.0
      %609 = vmatprep.subr.mxu0 0.0
      %610 = vmatpush1.msra.mxu0 0.0
      %611 = vmatprep.subr.mxu0 0.0
      %612 = vmatpush1.msra.mxu0 0.0
      %613 = vmatprep.subr.mxu0 %v581
      %614 = vmatpush1.msra.mxu0 %v578
      %615 = vmatprep.subr.mxu0 0.0
      %616 = vmatpush2.msra.mxu0 0.0
      %617 = vmatprep.subr.mxu0 0.0
      %618 = vmatpush2.msra.mxu0 0.0
      %619 = vmatprep.subr.mxu0 0.0
      %620 = vmatpush2.msra.mxu0 0.0
      %621 = vmatprep.subr.mxu0 0.0
      %622 = vmatpush2.msra.mxu0 0.0
      %623 = vmatprep.subr.mxu0 0.0
      %624 = vmatpush2.msra.mxu0 0.0
      %625 = vmatprep.subr.mxu0 0.0
      %626 = vmatpush2.msra.mxu0 0.0
      %627 = vmatprep.subr.mxu0 0.0
      %628 = vmatpush2.msra.mxu0 0.0
      %629 = vmatprep.subr.mxu0 0.0
      %630 = vmatpush2.msra.mxu0 0.0
      %631 = vmatprep.subr.mxu0 0.0
      %632 = vmatpush2.msra.mxu0 0.0
      %633 = vmatprep.subr.mxu0 0.0
      %634 = vmatpush2.msra.mxu0 0.0
      %635 = vmatprep.subr.mxu0 0.0
      %636 = vmatpush2.msra.mxu0 0.0
      %637 = vmatprep.subr.mxu0 0.0
      %638 = vmatpush2.msra.mxu0 0.0
      %639 = vmatprep.subr.mxu0 0.0
      %640 = vmatpush2.msra.mxu0 0.0
      %641 = vmatprep.subr.mxu0 0.0
      %642 = vmatpush2.msra.mxu0 0.0
      %643 = vmatprep.subr.mxu0 0.0
      %644 = vmatpush2.msra.mxu0 0.0
      %645 = vmatprep.subr.mxu0 0.0
      %646 = vmatpush2.msra.mxu0 0.0
      %647 = vmatprep.mubr.f32.mxu0 0.0
      %648 = vmatmul.mubr.f32.gmra.mxu0 %v575
      %v649 = vpop.f32.mrf.mxu0
      %v650 = vadd.f32 0.0, %v649
      %v651 = vpop.f32.mrf.mxu0
      %v652 = vadd.f32 0.0, %v651
      %653 = vdwg.mxu0
      %v654 = vadd.f32 %v546, %v650
      %v655 = vadd.f32 %v548, %v652
      %656 = vrot.lane.b32.xlu0 %v348, 16
      %v657 = vpop.permute.xlu0 %656
      %658 = vrot.lane.b32.xlu0 %v377, 16
      %v659 = vpop.permute.xlu0 %658
      %v660 = vsel %vm556, %v657, %v659
      %v661 = vsel %vm556, %v659, %v657
      %s662 = scalar_lea.vmem %s3, 8
      %v663 = vld [vmem:[%s662] sm:$0xff]
      %v664 = vmul.f32 %v661, %v565
      %v665 = vmul.f32 %v660, %v569
      %v667 = vsel %vm388, %v663, 0
      %v670 = vsel %vm392, %v664, 0
      %v673 = vsel %vm392, %v665, 0
      %675 = vmatprep.subr.mxu0 0.0
      %676 = vmatpush1.msra.mxu0 0.0
      %677 = vmatprep.subr.mxu0 0.0
      %678 = vmatpush1.msra.mxu0 0.0
      %679 = vmatprep.subr.mxu0 0.0
      %680 = vmatpush1.msra.mxu0 0.0
      %681 = vmatprep.subr.mxu0 0.0
      %682 = vmatpush1.msra.mxu0 0.0
      %683 = vmatprep.subr.mxu0 0.0
      %684 = vmatpush1.msra.mxu0 0.0
      %685 = vmatprep.subr.mxu0 0.0
      %686 = vmatpush1.msra.mxu0 0.0
      %687 = vmatprep.subr.mxu0 0.0
      %688 = vmatpush1.msra.mxu0 0.0
      %689 = vmatprep.subr.mxu0 0.0
      %690 = vmatpush1.msra.mxu0 0.0
      %691 = vmatprep.subr.mxu0 0.0
      %692 = vmatpush1.msra.mxu0 0.0
      %693 = vmatprep.subr.mxu0 0.0
      %694 = vmatpush1.msra.mxu0 0.0
      %695 = vmatprep.subr.mxu0 0.0
      %696 = vmatpush1.msra.mxu0 0.0
      %697 = vmatprep.subr.mxu0 0.0
      %698 = vmatpush1.msra.mxu0 0.0
      %699 = vmatprep.subr.mxu0 0.0
      %700 = vmatpush1.msra.mxu0 0.0
      %701 = vmatprep.subr.mxu0 0.0
      %702 = vmatpush1.msra.mxu0 0.0
      %703 = vmatprep.subr.mxu0 0.0
      %704 = vmatpush1.msra.mxu0 0.0
      %705 = vmatprep.subr.mxu0 %v673
      %706 = vmatpush1.msra.mxu0 %v670
      %707 = vmatprep.subr.mxu0 0.0
      %708 = vmatpush2.msra.mxu0 0.0
      %709 = vmatprep.subr.mxu0 0.0
      %710 = vmatpush2.msra.mxu0 0.0
      %711 = vmatprep.subr.mxu0 0.0
      %712 = vmatpush2.msra.mxu0 0.0
      %713 = vmatprep.subr.mxu0 0.0
      %714 = vmatpush2.msra.mxu0 0.0
      %715 = vmatprep.subr.mxu0 0.0
      %716 = vmatpush2.msra.mxu0 0.0
      %717 = vmatprep.subr.mxu0 0.0
      %718 = vmatpush2.msra.mxu0 0.0
      %719 = vmatprep.subr.mxu0 0.0
      %720 = vmatpush2.msra.mxu0 0.0
      %721 = vmatprep.subr.mxu0 0.0
      %722 = vmatpush2.msra.mxu0 0.0
      %723 = vmatprep.subr.mxu0 0.0
      %724 = vmatpush2.msra.mxu0 0.0
      %725 = vmatprep.subr.mxu0 0.0
      %726 = vmatpush2.msra.mxu0 0.0
      %727 = vmatprep.subr.mxu0 0.0
      %728 = vmatpush2.msra.mxu0 0.0
      %729 = vmatprep.subr.mxu0 0.0
      %730 = vmatpush2.msra.mxu0 0.0
      %731 = vmatprep.subr.mxu0 0.0
      %732 = vmatpush2.msra.mxu0 0.0
      %733 = vmatprep.subr.mxu0 0.0
      %734 = vmatpush2.msra.mxu0 0.0
      %735 = vmatprep.subr.mxu0 0.0
      %736 = vmatpush2.msra.mxu0 0.0
      %737 = vmatprep.subr.mxu0 0.0
      %738 = vmatpush2.msra.mxu0 0.0
      %739 = vmatprep.mubr.f32.mxu0 0.0
      %740 = vmatmul.mubr.f32.gmra.mxu0 %v667
      %v741 = vpop.f32.mrf.mxu0
      %v742 = vadd.f32 0.0, %v741
      %v743 = vpop.f32.mrf.mxu0
      %v744 = vadd.f32 0.0, %v743
      %745 = vdwg.mxu0
      %v746 = vadd.f32 %v654, %v742
      %v747 = vadd.f32 %v655, %v744
      %s748 = scalar_lea.vmem %s5, 2
      %v749 = vld [vmem:[%s748] ss:$8 sm:$0x3]
      %750 = vrot.lane.b32.xlu0 %v347, 15
      %v751 = vpop.permute.xlu0 %750
      %752 = vrot.lane.b32.xlu0 %v351, 15
      %v753 = vpop.permute.xlu0 %752
      %vm754 = vcmp.lt.s32.totalorder %v358, 15
      %v755 = vsel %vm754, %v751, %v753
      %v756 = vsel %vm754, %v753, %v751
      %s757 = scalar_lea.vmem %s2, 16
      %v758 = vld [vmem:[%s757] sm:$0xff]
      %v760 = vlaneseq
      %v761 = vshrl.u32 %v760, 7
      %v762 = vsub.s32 0, %v761
      %v763 = vrot.slane %v749, %v762
      %v764 = vlaneseq
      %v765 = vshrl.u32 %v764, 7
      %v766 = vsub.s32 1, %v765
      %v767 = vrot.slane %v749, %v766
      %v770 = vmul.f32 %v756, %v763
      %v771 = vmul.f32 %v755, %v767
      %v773 = vsel %vm388, %v758, 0
      %v776 = vsel %vm392, %v770, 0
      %v779 = vsel %vm392, %v771, 0
      %781 = vmatprep.subr.mxu0 0.0
      %782 = vmatpush1.msra.mxu0 0.0
      %783 = vmatprep.subr.mxu0 0.0
      %784 = vmatpush1.msra.mxu0 0.0
      %785 = vmatprep.subr.mxu0 0.0
      %786 = vmatpush1.msra.mxu0 0.0
      %787 = vmatprep.subr.mxu0 0.0
      %788 = vmatpush1.msra.mxu0 0.0
      %789 = vmatprep.subr.mxu0 0.0
      %790 = vmatpush1.msra.mxu0 0.0
      %791 = vmatprep.subr.mxu0 0.0
      %792 = vmatpush1.msra.mxu0 0.0
      %793 = vmatprep.subr.mxu0 0.0
      %794 = vmatpush1.msra.mxu0 0.0
      %795 = vmatprep.subr.mxu0 0.0
      %796 = vmatpush1.msra.mxu0 0.0
      %797 = vmatprep.subr.mxu0 0.0
      %798 = vmatpush1.msra.mxu0 0.0
      %799 = vmatprep.subr.mxu0 0.0
      %800 = vmatpush1.msra.mxu0 0.0
      %801 = vmatprep.subr.mxu0 0.0
      %802 = vmatpush1.msra.mxu0 0.0
      %803 = vmatprep.subr.mxu0 0.0
      %804 = vmatpush1.msra.mxu0 0.0
      %805 = vmatprep.subr.mxu0 0.0
      %806 = vmatpush1.msra.mxu0 0.0
      %807 = vmatprep.subr.mxu0 0.0
      %808 = vmatpush1.msra.mxu0 0.0
      %809 = vmatprep.subr.mxu0 0.0
      %810 = vmatpush1.msra.mxu0 0.0
      %811 = vmatprep.subr.mxu0 %v779
      %812 = vmatpush1.msra.mxu0 %v776
      %813 = vmatprep.subr.mxu0 0.0
      %814 = vmatpush2.msra.mxu0 0.0
      %815 = vmatprep.subr.mxu0 0.0
      %816 = vmatpush2.msra.mxu0 0.0
      %817 = vmatprep.subr.mxu0 0.0
      %818 = vmatpush2.msra.mxu0 0.0
      %819 = vmatprep.subr.mxu0 0.0
      %820 = vmatpush2.msra.mxu0 0.0
      %821 = vmatprep.subr.mxu0 0.0
      %822 = vmatpush2.msra.mxu0 0.0
      %823 = vmatprep.subr.mxu0 0.0
      %824 = vmatpush2.msra.mxu0 0.0
      %825 = vmatprep.subr.mxu0 0.0
      %826 = vmatpush2.msra.mxu0 0.0
      %827 = vmatprep.subr.mxu0 0.0
      %828 = vmatpush2.msra.mxu0 0.0
      %829 = vmatprep.subr.mxu0 0.0
      %830 = vmatpush2.msra.mxu0 0.0
      %831 = vmatprep.subr.mxu0 0.0
      %832 = vmatpush2.msra.mxu0 0.0
      %833 = vmatprep.subr.mxu0 0.0
      %834 = vmatpush2.msra.mxu0 0.0
      %835 = vmatprep.subr.mxu0 0.0
      %836 = vmatpush2.msra.mxu0 0.0
      %837 = vmatprep.subr.mxu0 0.0
      %838 = vmatpush2.msra.mxu0 0.0
      %839 = vmatprep.subr.mxu0 0.0
      %840 = vmatpush2.msra.mxu0 0.0
      %841 = vmatprep.subr.mxu0 0.0
      %842 = vmatpush2.msra.mxu0 0.0
      %843 = vmatprep.subr.mxu0 0.0
      %844 = vmatpush2.msra.mxu0 0.0
      %845 = vmatprep.mubr.f32.mxu0 0.0
      %846 = vmatmul.mubr.f32.gmra.mxu0 %v773
      %v847 = vpop.f32.mrf.mxu0
      %v848 = vadd.f32 0.0, %v847
      %v849 = vpop.f32.mrf.mxu0
      %v850 = vadd.f32 0.0, %v849
      %851 = vdwg.mxu0
      %v852 = vadd.f32 %v746, %v848
      %v853 = vadd.f32 %v747, %v850
      %854 = vrot.lane.b32.xlu0 %v348, 15
      %v855 = vpop.permute.xlu0 %854
      %856 = vrot.lane.b32.xlu0 %v377, 15
      %v857 = vpop.permute.xlu0 %856
      %v858 = vsel %vm754, %v855, %v857
      %v859 = vsel %vm754, %v857, %v855
      %s860 = scalar_lea.vmem %s3, 16
      %v861 = vld [vmem:[%s860] sm:$0xff]
      %v862 = vmul.f32 %v859, %v763
      %v863 = vmul.f32 %v858, %v767
      %v865 = vsel %vm388, %v861, 0
      %v868 = vsel %vm392, %v862, 0
      %v871 = vsel %vm392, %v863, 0
      %873 = vmatprep.subr.mxu0 0.0
      %874 = vmatpush1.msra.mxu0 0.0
      %875 = vmatprep.subr.mxu0 0.0
      %876 = vmatpush1.msra.mxu0 0.0
      %877 = vmatprep.subr.mxu0 0.0
      %878 = vmatpush1.msra.mxu0 0.0
      %879 = vmatprep.subr.mxu0 0.0
      %880 = vmatpush1.msra.mxu0 0.0
      %881 = vmatprep.subr.mxu0 0.0
      %882 = vmatpush1.msra.mxu0 0.0
      %883 = vmatprep.subr.mxu0 0.0
      %884 = vmatpush1.msra.mxu0 0.0
      %885 = vmatprep.subr.mxu0 0.0
      %886 = vmatpush1.msra.mxu0 0.0
      %887 = vmatprep.subr.mxu0 0.0
      %888 = vmatpush1.msra.mxu0 0.0
      %889 = vmatprep.subr.mxu0 0.0
      %890 = vmatpush1.msra.mxu0 0.0
      %891 = vmatprep.subr.mxu0 0.0
      %892 = vmatpush1.msra.mxu0 0.0
      %893 = vmatprep.subr.mxu0 0.0
      %894 = vmatpush1.msra.mxu0 0.0
      %895 = vmatprep.subr.mxu0 0.0
      %896 = vmatpush1.msra.mxu0 0.0
      %897 = vmatprep.subr.mxu0 0.0
      %898 = vmatpush1.msra.mxu0 0.0
      %899 = vmatprep.subr.mxu0 0.0
      %900 = vmatpush1.msra.mxu0 0.0
      %901 = vmatprep.subr.mxu0 0.0
      %902 = vmatpush1.msra.mxu0 0.0
      %903 = vmatprep.subr.mxu0 %v871
      %904 = vmatpush1.msra.mxu0 %v868
      %905 = vmatprep.subr.mxu0 0.0
      %906 = vmatpush2.msra.mxu0 0.0
      %907 = vmatprep.subr.mxu0 0.0
      %908 = vmatpush2.msra.mxu0 0.0
      %909 = vmatprep.subr.mxu0 0.0
      %910 = vmatpush2.msra.mxu0 0.0
      %911 = vmatprep.subr.mxu0 0.0
      %912 = vmatpush2.msra.mxu0 0.0
      %913 = vmatprep.subr.mxu0 0.0
      %914 = vmatpush2.msra.mxu0 0.0
      %915 = vmatprep.subr.mxu0 0.0
      %916 = vmatpush2.msra.mxu0 0.0
      %917 = vmatprep.subr.mxu0 0.0
      %918 = vmatpush2.msra.mxu0 0.0
      %919 = vmatprep.subr.mxu0 0.0
      %920 = vmatpush2.msra.mxu0 0.0
      %921 = vmatprep.subr.mxu0 0.0
      %922 = vmatpush2.msra.mxu0 0.0
      %923 = vmatprep.subr.mxu0 0.0
      %924 = vmatpush2.msra.mxu0 0.0
      %925 = vmatprep.subr.mxu0 0.0
      %926 = vmatpush2.msra.mxu0 0.0
      %927 = vmatprep.subr.mxu0 0.0
      %928 = vmatpush2.msra.mxu0 0.0
      %929 = vmatprep.subr.mxu0 0.0
      %930 = vmatpush2.msra.mxu0 0.0
      %931 = vmatprep.subr.mxu0 0.0
      %932 = vmatpush2.msra.mxu0 0.0
      %933 = vmatprep.subr.mxu0 0.0
      %934 = vmatpush2.msra.mxu0 0.0
      %935 = vmatprep.subr.mxu0 0.0
      %936 = vmatpush2.msra.mxu0 0.0
      %937 = vmatprep.mubr.f32.mxu0 0.0
      %938 = vmatmul.mubr.f32.gmra.mxu0 %v865
      %v939 = vpop.f32.mrf.mxu0
      %v940 = vadd.f32 0.0, %v939
      %v941 = vpop.f32.mrf.mxu0
      %v942 = vadd.f32 0.0, %v941
      %943 = vdwg.mxu0
      %v944 = vadd.f32 %v852, %v940
      %v945 = vadd.f32 %v853, %v942
      %s946 = scalar_lea.vmem %s5, 3
      %v947 = vld [vmem:[%s946] ss:$8 sm:$0x3]
      %948 = vrot.lane.b32.xlu0 %v347, 1
      %v949 = vpop.permute.xlu0 %948
      %950 = vrot.lane.b32.xlu0 %v351, 1
      %v951 = vpop.permute.xlu0 %950
      %vm952 = vcmp.lt.s32.totalorder %v358, 1
      %v953 = vsel %vm952, %v949, %v951
      %v954 = vsel %vm952, %v951, %v949
      %s955 = scalar_lea.vmem %s2, 24
      %v956 = vld [vmem:[%s955] sm:$0xff]
      %v958 = vlaneseq
      %v959 = vshrl.u32 %v958, 7
      %v960 = vsub.s32 0, %v959
      %v961 = vrot.slane %v947, %v960
      %v962 = vlaneseq
      %v963 = vshrl.u32 %v962, 7
      %v964 = vsub.s32 1, %v963
      %v965 = vrot.slane %v947, %v964
      %v968 = vmul.f32 %v954, %v961
      %v969 = vmul.f32 %v953, %v965
      %v971 = vsel %vm388, %v956, 0
      %v974 = vsel %vm392, %v968, 0
      %v977 = vsel %vm392, %v969, 0
      %979 = vmatprep.subr.mxu0 0.0
      %980 = vmatpush1.msra.mxu0 0.0
      %981 = vmatprep.subr.mxu0 0.0
      %982 = vmatpush1.msra.mxu0 0.0
      %983 = vmatprep.subr.mxu0 0.0
      %984 = vmatpush1.msra.mxu0 0.0
      %985 = vmatprep.subr.mxu0 0.0
      %986 = vmatpush1.msra.mxu0 0.0
      %987 = vmatprep.subr.mxu0 0.0
      %988 = vmatpush1.msra.mxu0 0.0
      %989 = vmatprep.subr.mxu0 0.0
      %990 = vmatpush1.msra.mxu0 0.0
      %991 = vmatprep.subr.mxu0 0.0
      %992 = vmatpush1.msra.mxu0 0.0
      %993 = vmatprep.subr.mxu0 0.0
      %994 = vmatpush1.msra.mxu0 0.0
      %995 = vmatprep.subr.mxu0 0.0
      %996 = vmatpush1.msra.mxu0 0.0
      %997 = vmatprep.subr.mxu0 0.0
      %998 = vmatpush1.msra.mxu0 0.0
      %999 = vmatprep.subr.mxu0 0.0
      %1000 = vmatpush1.msra.mxu0 0.0
      %1001 = vmatprep.subr.mxu0 0.0
      %1002 = vmatpush1.msra.mxu0 0.0
      %1003 = vmatprep.subr.mxu0 0.0
      %1004 = vmatpush1.msra.mxu0 0.0
      %1005 = vmatprep.subr.mxu0 0.0
      %1006 = vmatpush1.msra.mxu0 0.0
      %1007 = vmatprep.subr.mxu0 0.0
      %1008 = vmatpush1.msra.mxu0 0.0
      %1009 = vmatprep.subr.mxu0 %v977
      %1010 = vmatpush1.msra.mxu0 %v974
      %1011 = vmatprep.subr.mxu0 0.0
      %1012 = vmatpush2.msra.mxu0 0.0
      %1013 = vmatprep.subr.mxu0 0.0
      %1014 = vmatpush2.msra.mxu0 0.0
      %1015 = vmatprep.subr.mxu0 0.0
      %1016 = vmatpush2.msra.mxu0 0.0
      %1017 = vmatprep.subr.mxu0 0.0
      %1018 = vmatpush2.msra.mxu0 0.0
      %1019 = vmatprep.subr.mxu0 0.0
      %1020 = vmatpush2.msra.mxu0 0.0
      %1021 = vmatprep.subr.mxu0 0.0
      %1022 = vmatpush2.msra.mxu0 0.0
      %1023 = vmatprep.subr.mxu0 0.0
      %1024 = vmatpush2.msra.mxu0 0.0
      %1025 = vmatprep.subr.mxu0 0.0
      %1026 = vmatpush2.msra.mxu0 0.0
      %1027 = vmatprep.subr.mxu0 0.0
      %1028 = vmatpush2.msra.mxu0 0.0
      %1029 = vmatprep.subr.mxu0 0.0
      %1030 = vmatpush2.msra.mxu0 0.0
      %1031 = vmatprep.subr.mxu0 0.0
      %1032 = vmatpush2.msra.mxu0 0.0
      %1033 = vmatprep.subr.mxu0 0.0
      %1034 = vmatpush2.msra.mxu0 0.0
      %1035 = vmatprep.subr.mxu0 0.0
      %1036 = vmatpush2.msra.mxu0 0.0
      %1037 = vmatprep.subr.mxu0 0.0
      %1038 = vmatpush2.msra.mxu0 0.0
      %1039 = vmatprep.subr.mxu0 0.0
      %1040 = vmatpush2.msra.mxu0 0.0
      %1041 = vmatprep.subr.mxu0 0.0
      %1042 = vmatpush2.msra.mxu0 0.0
      %1043 = vmatprep.mubr.f32.mxu0 0.0
      %1044 = vmatmul.mubr.f32.gmra.mxu0 %v971
      %v1045 = vpop.f32.mrf.mxu0
      %v1046 = vadd.f32 0.0, %v1045
      %v1047 = vpop.f32.mrf.mxu0
      %v1048 = vadd.f32 0.0, %v1047
      %1049 = vdwg.mxu0
      %v1050 = vadd.f32 %v944, %v1046
      %v1051 = vadd.f32 %v945, %v1048
      %1052 = vrot.lane.b32.xlu0 %v348, 1
      %v1053 = vpop.permute.xlu0 %1052
      %1054 = vrot.lane.b32.xlu0 %v377, 1
      %v1055 = vpop.permute.xlu0 %1054
      %v1056 = vsel %vm952, %v1053, %v1055
      %v1057 = vsel %vm952, %v1055, %v1053
      %s1058 = scalar_lea.vmem %s3, 24
      %v1059 = vld [vmem:[%s1058] sm:$0xff]
      %v1060 = vmul.f32 %v1057, %v961
      %v1061 = vmul.f32 %v1056, %v965
      %v1063 = vsel %vm388, %v1059, 0
      %v1066 = vsel %vm392, %v1060, 0
      %v1069 = vsel %vm392, %v1061, 0
      %1071 = vmatprep.subr.mxu0 0.0
      %1072 = vmatpush1.msra.mxu0 0.0
      %1073 = vmatprep.subr.mxu0 0.0
      %1074 = vmatpush1.msra.mxu0 0.0
      %1075 = vmatprep.subr.mxu0 0.0
      %1076 = vmatpush1.msra.mxu0 0.0
      %1077 = vmatprep.subr.mxu0 0.0
      %1078 = vmatpush1.msra.mxu0 0.0
      %1079 = vmatprep.subr.mxu0 0.0
      %1080 = vmatpush1.msra.mxu0 0.0
      %1081 = vmatprep.subr.mxu0 0.0
      %1082 = vmatpush1.msra.mxu0 0.0
      %1083 = vmatprep.subr.mxu0 0.0
      %1084 = vmatpush1.msra.mxu0 0.0
      %1085 = vmatprep.subr.mxu0 0.0
      %1086 = vmatpush1.msra.mxu0 0.0
      %1087 = vmatprep.subr.mxu0 0.0
      %1088 = vmatpush1.msra.mxu0 0.0
      %1089 = vmatprep.subr.mxu0 0.0
      %1090 = vmatpush1.msra.mxu0 0.0
      %1091 = vmatprep.subr.mxu0 0.0
      %1092 = vmatpush1.msra.mxu0 0.0
      %1093 = vmatprep.subr.mxu0 0.0
      %1094 = vmatpush1.msra.mxu0 0.0
      %1095 = vmatprep.subr.mxu0 0.0
      %1096 = vmatpush1.msra.mxu0 0.0
      %1097 = vmatprep.subr.mxu0 0.0
      %1098 = vmatpush1.msra.mxu0 0.0
      %1099 = vmatprep.subr.mxu0 0.0
      %1100 = vmatpush1.msra.mxu0 0.0
      %1101 = vmatprep.subr.mxu0 %v1069
      %1102 = vmatpush1.msra.mxu0 %v1066
      %1103 = vmatprep.subr.mxu0 0.0
      %1104 = vmatpush2.msra.mxu0 0.0
      %1105 = vmatprep.subr.mxu0 0.0
      %1106 = vmatpush2.msra.mxu0 0.0
      %1107 = vmatprep.subr.mxu0 0.0
      %1108 = vmatpush2.msra.mxu0 0.0
      %1109 = vmatprep.subr.mxu0 0.0
      %1110 = vmatpush2.msra.mxu0 0.0
      %1111 = vmatprep.subr.mxu0 0.0
      %1112 = vmatpush2.msra.mxu0 0.0
      %1113 = vmatprep.subr.mxu0 0.0
      %1114 = vmatpush2.msra.mxu0 0.0
      %1115 = vmatprep.subr.mxu0 0.0
      %1116 = vmatpush2.msra.mxu0 0.0
      %1117 = vmatprep.subr.mxu0 0.0
      %1118 = vmatpush2.msra.mxu0 0.0
      %1119 = vmatprep.subr.mxu0 0.0
      %1120 = vmatpush2.msra.mxu0 0.0
      %1121 = vmatprep.subr.mxu0 0.0
      %1122 = vmatpush2.msra.mxu0 0.0
      %1123 = vmatprep.subr.mxu0 0.0
      %1124 = vmatpush2.msra.mxu0 0.0
      %1125 = vmatprep.subr.mxu0 0.0
      %1126 = vmatpush2.msra.mxu0 0.0
      %1127 = vmatprep.subr.mxu0 0.0
      %1128 = vmatpush2.msra.mxu0 0.0
      %1129 = vmatprep.subr.mxu0 0.0
      %1130 = vmatpush2.msra.mxu0 0.0
      %1131 = vmatprep.subr.mxu0 0.0
      %1132 = vmatpush2.msra.mxu0 0.0
      %1133 = vmatprep.subr.mxu0 0.0
      %1134 = vmatpush2.msra.mxu0 0.0
      %1135 = vmatprep.mubr.f32.mxu0 0.0
      %1136 = vmatmul.mubr.f32.gmra.mxu0 %v1063
      %v1137 = vpop.f32.mrf.mxu0
      %v1138 = vadd.f32 0.0, %v1137
      %v1139 = vpop.f32.mrf.mxu0
      %v1140 = vadd.f32 0.0, %v1139
      %1141 = vdwg.mxu0
      %v1142 = vadd.f32 %v1050, %v1138
      %v1143 = vadd.f32 %v1051, %v1140
      %s1144 = scalar_lea.vmem %s5, 4
      %v1145 = vld [vmem:[%s1144] ss:$8 sm:$0x3]
      %s1146 = scalar_lea.vmem %s2, 32
      %v1147 = vld [vmem:[%s1146] sm:$0xff]
      %v1149 = vlaneseq
      %v1150 = vshrl.u32 %v1149, 7
      %v1151 = vsub.s32 0, %v1150
      %v1152 = vrot.slane %v1145, %v1151
      %v1153 = vlaneseq
      %v1154 = vshrl.u32 %v1153, 7
      %v1155 = vsub.s32 1, %v1154
      %v1156 = vrot.slane %v1145, %v1155
      %v1157 = vcombine.low %v1152, %v1156
      %v1159 = vmul.f32 %v347, %v1157
      %v1161 = vcombine.high %v1159, %v1159
      %v1163 = vsel %vm388, %v1147, 0
      %v1165 = vsel %vm392, %v1159, 0
      %v1167 = vsel %vm392, %v1161, 0
      %1169 = vmatprep.subr.mxu0 0.0
      %1170 = vmatpush1.msra.mxu0 0.0
      %1171 = vmatprep.subr.mxu0 0.0
      %1172 = vmatpush1.msra.mxu0 0.0
      %1173 = vmatprep.subr.mxu0 0.0
      %1174 = vmatpush1.msra.mxu0 0.0
      %1175 = vmatprep.subr.mxu0 0.0
      %1176 = vmatpush1.msra.mxu0 0.0
      %1177 = vmatprep.subr.mxu0 0.0
      %1178 = vmatpush1.msra.mxu0 0.0
      %1179 = vmatprep.subr.mxu0 0.0
      %1180 = vmatpush1.msra.mxu0 0.0
      %1181 = vmatprep.subr.mxu0 0.0
      %1182 = vmatpush1.msra.mxu0 0.0
      %1183 = vmatprep.subr.mxu0 0.0
      %1184 = vmatpush1.msra.mxu0 0.0
      %1185 = vmatprep.subr.mxu0 0.0
      %1186 = vmatpush1.msra.mxu0 0.0
      %1187 = vmatprep.subr.mxu0 0.0
      %1188 = vmatpush1.msra.mxu0 0.0
      %1189 = vmatprep.subr.mxu0 0.0
      %1190 = vmatpush1.msra.mxu0 0.0
      %1191 = vmatprep.subr.mxu0 0.0
      %1192 = vmatpush1.msra.mxu0 0.0
      %1193 = vmatprep.subr.mxu0 0.0
      %1194 = vmatpush1.msra.mxu0 0.0
      %1195 = vmatprep.subr.mxu0 0.0
      %1196 = vmatpush1.msra.mxu0 0.0
      %1197 = vmatprep.subr.mxu0 0.0
      %1198 = vmatpush1.msra.mxu0 0.0
      %1199 = vmatprep.subr.mxu0 %v1167
      %1200 = vmatpush1.msra.mxu0 %v1165
      %1201 = vmatprep.subr.mxu0 0.0
      %1202 = vmatpush2.msra.mxu0 0.0
      %1203 = vmatprep.subr.mxu0 0.0
      %1204 = vmatpush2.msra.mxu0 0.0
      %1205 = vmatprep.subr.mxu0 0.0
      %1206 = vmatpush2.msra.mxu0 0.0
      %1207 = vmatprep.subr.mxu0 0.0
      %1208 = vmatpush2.msra.mxu0 0.0
      %1209 = vmatprep.subr.mxu0 0.0
      %1210 = vmatpush2.msra.mxu0 0.0
      %1211 = vmatprep.subr.mxu0 0.0
      %1212 = vmatpush2.msra.mxu0 0.0
      %1213 = vmatprep.subr.mxu0 0.0
      %1214 = vmatpush2.msra.mxu0 0.0
      %1215 = vmatprep.subr.mxu0 0.0
      %1216 = vmatpush2.msra.mxu0 0.0
      %1217 = vmatprep.subr.mxu0 0.0
      %1218 = vmatpush2.msra.mxu0 0.0
      %1219 = vmatprep.subr.mxu0 0.0
      %1220 = vmatpush2.msra.mxu0 0.0
      %1221 = vmatprep.subr.mxu0 0.0
      %1222 = vmatpush2.msra.mxu0 0.0
      %1223 = vmatprep.subr.mxu0 0.0
      %1224 = vmatpush2.msra.mxu0 0.0
      %1225 = vmatprep.subr.mxu0 0.0
      %1226 = vmatpush2.msra.mxu0 0.0
      %1227 = vmatprep.subr.mxu0 0.0
      %1228 = vmatpush2.msra.mxu0 0.0
      %1229 = vmatprep.subr.mxu0 0.0
      %1230 = vmatpush2.msra.mxu0 0.0
      %1231 = vmatprep.subr.mxu0 0.0
      %1232 = vmatpush2.msra.mxu0 0.0
      %1233 = vmatprep.mubr.f32.mxu0 0.0
      %1234 = vmatmul.mubr.f32.gmra.mxu0 %v1163
      %v1235 = vpop.f32.mrf.mxu0
      %v1236 = vadd.f32 0.0, %v1235
      %v1237 = vpop.f32.mrf.mxu0
      %v1238 = vadd.f32 0.0, %v1237
      %1239 = vdwg.mxu0
      %v1240 = vadd.f32 %v1142, %v1236
      %v1241 = vadd.f32 %v1143, %v1238
      %s1242 = scalar_lea.vmem %s3, 32
      %v1243 = vld [vmem:[%s1242] sm:$0xff]
      %v1244 = vmul.f32 %v348, %v1157
      %v1246 = vcombine.high %v1244, %v1244
      %v1248 = vsel %vm388, %v1243, 0
      %v1250 = vsel %vm392, %v1244, 0
      %v1252 = vsel %vm392, %v1246, 0
      %1254 = vmatprep.subr.mxu0 0.0
      %1255 = vmatpush1.msra.mxu0 0.0
      %1256 = vmatprep.subr.mxu0 0.0
      %1257 = vmatpush1.msra.mxu0 0.0
      %1258 = vmatprep.subr.mxu0 0.0
      %1259 = vmatpush1.msra.mxu0 0.0
      %1260 = vmatprep.subr.mxu0 0.0
      %1261 = vmatpush1.msra.mxu0 0.0
      %1262 = vmatprep.subr.mxu0 0.0
      %1263 = vmatpush1.msra.mxu0 0.0
      %1264 = vmatprep.subr.mxu0 0.0
      %1265 = vmatpush1.msra.mxu0 0.0
      %1266 = vmatprep.subr.mxu0 0.0
      %1267 = vmatpush1.msra.mxu0 0.0
      %1268 = vmatprep.subr.mxu0 0.0
      %1269 = vmatpush1.msra.mxu0 0.0
      %1270 = vmatprep.subr.mxu0 0.0
      %1271 = vmatpush1.msra.mxu0 0.0
      %1272 = vmatprep.subr.mxu0 0.0
      %1273 = vmatpush1.msra.mxu0 0.0
      %1274 = vmatprep.subr.mxu0 0.0
      %1275 = vmatpush1.msra.mxu0 0.0
      %1276 = vmatprep.subr.mxu0 0.0
      %1277 = vmatpush1.msra.mxu0 0.0
      %1278 = vmatprep.subr.mxu0 0.0
      %1279 = vmatpush1.msra.mxu0 0.0
      %1280 = vmatprep.subr.mxu0 0.0
      %1281 = vmatpush1.msra.mxu0 0.0
      %1282 = vmatprep.subr.mxu0 0.0
      %1283 = vmatpush1.msra.mxu0 0.0
      %1284 = vmatprep.subr.mxu0 %v1252
      %1285 = vmatpush1.msra.mxu0 %v1250
      %1286 = vmatprep.subr.mxu0 0.0
      %1287 = vmatpush2.msra.mxu0 0.0
      %1288 = vmatprep.subr.mxu0 0.0
      %1289 = vmatpush2.msra.mxu0 0.0
      %1290 = vmatprep.subr.mxu0 0.0
      %1291 = vmatpush2.msra.mxu0 0.0
      %1292 = vmatprep.subr.mxu0 0.0
      %1293 = vmatpush2.msra.mxu0 0.0
      %1294 = vmatprep.subr.mxu0 0.0
      %1295 = vmatpush2.msra.mxu0 0.0
      %1296 = vmatprep.subr.mxu0 0.0
      %1297 = vmatpush2.msra.mxu0 0.0
      %1298 = vmatprep.subr.mxu0 0.0
      %1299 = vmatpush2.msra.mxu0 0.0
      %1300 = vmatprep.subr.mxu0 0.0
      %1301 = vmatpush2.msra.mxu0 0.0
      %1302 = vmatprep.subr.mxu0 0.0
      %1303 = vmatpush2.msra.mxu0 0.0
      %1304 = vmatprep.subr.mxu0 0.0
      %1305 = vmatpush2.msra.mxu0 0.0
      %1306 = vmatprep.subr.mxu0 0.0
      %1307 = vmatpush2.msra.mxu0 0.0
      %1308 = vmatprep.subr.mxu0 0.0
      %1309 = vmatpush2.msra.mxu0 0.0
      %1310 = vmatprep.subr.mxu0 0.0
      %1311 = vmatpush2.msra.mxu0 0.0
      %1312 = vmatprep.subr.mxu0 0.0
      %1313 = vmatpush2.msra.mxu0 0.0
      %1314 = vmatprep.subr.mxu0 0.0
      %1315 = vmatpush2.msra.mxu0 0.0
      %1316 = vmatprep.subr.mxu0 0.0
      %1317 = vmatpush2.msra.mxu0 0.0
      %1318 = vmatprep.mubr.f32.mxu0 0.0
      %1319 = vmatmul.mubr.f32.gmra.mxu0 %v1248
      %v1320 = vpop.f32.mrf.mxu0
      %v1321 = vadd.f32 0.0, %v1320
      %v1322 = vpop.f32.mrf.mxu0
      %v1323 = vadd.f32 0.0, %v1322
      %1324 = vdwg.mxu0
      %v1325 = vadd.f32 %v1240, %v1321
      %v1326 = vadd.f32 %v1241, %v1323
      %s1327 = scalar_lea.vmem %s5, 5
      %v1328 = vld [vmem:[%s1327] ss:$8 sm:$0x3]
      %1329 = vrot.lane.b32.xlu0 %v347, 127
      %v1330 = vpop.permute.xlu0 %1329
      %1331 = vrot.lane.b32.xlu0 %v351, 127
      %v1332 = vpop.permute.xlu0 %1331
      %vm1333 = vcmp.lt.s32.totalorder %v358, 127
      %v1334 = vsel %vm1333, %v1330, %v1332
      %v1335 = vsel %vm1333, %v1332, %v1330
      %s1336 = scalar_lea.vmem %s2, 40
      %v1337 = vld [vmem:[%s1336] sm:$0xff]
      %v1339 = vlaneseq
      %v1340 = vshrl.u32 %v1339, 7
      %v1341 = vsub.s32 0, %v1340
      %v1342 = vrot.slane %v1328, %v1341
      %v1343 = vlaneseq
      %v1344 = vshrl.u32 %v1343, 7
      %v1345 = vsub.s32 1, %v1344
      %v1346 = vrot.slane %v1328, %v1345
      %v1349 = vmul.f32 %v1334, %v1342
      %v1350 = vmul.f32 %v1335, %v1346
      %v1352 = vsel %vm388, %v1337, 0
      %v1355 = vsel %vm392, %v1349, 0
      %v1358 = vsel %vm392, %v1350, 0
      %1360 = vmatprep.subr.mxu0 0.0
      %1361 = vmatpush1.msra.mxu0 0.0
      %1362 = vmatprep.subr.mxu0 0.0
      %1363 = vmatpush1.msra.mxu0 0.0
      %1364 = vmatprep.subr.mxu0 0.0
      %1365 = vmatpush1.msra.mxu0 0.0
      %1366 = vmatprep.subr.mxu0 0.0
      %1367 = vmatpush1.msra.mxu0 0.0
      %1368 = vmatprep.subr.mxu0 0.0
      %1369 = vmatpush1.msra.mxu0 0.0
      %1370 = vmatprep.subr.mxu0 0.0
      %1371 = vmatpush1.msra.mxu0 0.0
      %1372 = vmatprep.subr.mxu0 0.0
      %1373 = vmatpush1.msra.mxu0 0.0
      %1374 = vmatprep.subr.mxu0 0.0
      %1375 = vmatpush1.msra.mxu0 0.0
      %1376 = vmatprep.subr.mxu0 0.0
      %1377 = vmatpush1.msra.mxu0 0.0
      %1378 = vmatprep.subr.mxu0 0.0
      %1379 = vmatpush1.msra.mxu0 0.0
      %1380 = vmatprep.subr.mxu0 0.0
      %1381 = vmatpush1.msra.mxu0 0.0
      %1382 = vmatprep.subr.mxu0 0.0
      %1383 = vmatpush1.msra.mxu0 0.0
      %1384 = vmatprep.subr.mxu0 0.0
      %1385 = vmatpush1.msra.mxu0 0.0
      %1386 = vmatprep.subr.mxu0 0.0
      %1387 = vmatpush1.msra.mxu0 0.0
      %1388 = vmatprep.subr.mxu0 0.0
      %1389 = vmatpush1.msra.mxu0 0.0
      %1390 = vmatprep.subr.mxu0 %v1358
      %1391 = vmatpush1.msra.mxu0 %v1355
      %1392 = vmatprep.subr.mxu0 0.0
      %1393 = vmatpush2.msra.mxu0 0.0
      %1394 = vmatprep.subr.mxu0 0.0
      %1395 = vmatpush2.msra.mxu0 0.0
      %1396 = vmatprep.subr.mxu0 0.0
      %1397 = vmatpush2.msra.mxu0 0.0
      %1398 = vmatprep.subr.mxu0 0.0
      %1399 = vmatpush2.msra.mxu0 0.0
      %1400 = vmatprep.subr.mxu0 0.0
      %1401 = vmatpush2.msra.mxu0 0.0
      %1402 = vmatprep.subr.mxu0 0.0
      %1403 = vmatpush2.msra.mxu0 0.0
      %1404 = vmatprep.subr.mxu0 0.0
      %1405 = vmatpush2.msra.mxu0 0.0
      %1406 = vmatprep.subr.mxu0 0.0
      %1407 = vmatpush2.msra.mxu0 0.0
      %1408 = vmatprep.subr.mxu0 0.0
      %1409 = vmatpush2.msra.mxu0 0.0
      %1410 = vmatprep.subr.mxu0 0.0
      %1411 = vmatpush2.msra.mxu0 0.0
      %1412 = vmatprep.subr.mxu0 0.0
      %1413 = vmatpush2.msra.mxu0 0.0
      %1414 = vmatprep.subr.mxu0 0.0
      %1415 = vmatpush2.msra.mxu0 0.0
      %1416 = vmatprep.subr.mxu0 0.0
      %1417 = vmatpush2.msra.mxu0 0.0
      %1418 = vmatprep.subr.mxu0 0.0
      %1419 = vmatpush2.msra.mxu0 0.0
      %1420 = vmatprep.subr.mxu0 0.0
      %1421 = vmatpush2.msra.mxu0 0.0
      %1422 = vmatprep.subr.mxu0 0.0
      %1423 = vmatpush2.msra.mxu0 0.0
      %1424 = vmatprep.mubr.f32.mxu0 0.0
      %1425 = vmatmul.mubr.f32.gmra.mxu0 %v1352
      %v1426 = vpop.f32.mrf.mxu0
      %v1427 = vadd.f32 0.0, %v1426
      %v1428 = vpop.f32.mrf.mxu0
      %v1429 = vadd.f32 0.0, %v1428
      %1430 = vdwg.mxu0
      %v1431 = vadd.f32 %v1325, %v1427
      %v1432 = vadd.f32 %v1326, %v1429
      %1433 = vrot.lane.b32.xlu0 %v348, 127
      %v1434 = vpop.permute.xlu0 %1433
      %1435 = vrot.lane.b32.xlu0 %v377, 127
      %v1436 = vpop.permute.xlu0 %1435
      %v1437 = vsel %vm1333, %v1434, %v1436
      %v1438 = vsel %vm1333, %v1436, %v1434
      %s1439 = scalar_lea.vmem %s3, 40
      %v1440 = vld [vmem:[%s1439] sm:$0xff]
      %v1441 = vmul.f32 %v1437, %v1342
      %v1442 = vmul.f32 %v1438, %v1346
      %v1444 = vsel %vm388, %v1440, 0
      %v1447 = vsel %vm392, %v1441, 0
      %v1450 = vsel %vm392, %v1442, 0
      %1452 = vmatprep.subr.mxu0 0.0
      %1453 = vmatpush1.msra.mxu0 0.0
      %1454 = vmatprep.subr.mxu0 0.0
      %1455 = vmatpush1.msra.mxu0 0.0
      %1456 = vmatprep.subr.mxu0 0.0
      %1457 = vmatpush1.msra.mxu0 0.0
      %1458 = vmatprep.subr.mxu0 0.0
      %1459 = vmatpush1.msra.mxu0 0.0
      %1460 = vmatprep.subr.mxu0 0.0
      %1461 = vmatpush1.msra.mxu0 0.0
      %1462 = vmatprep.subr.mxu0 0.0
      %1463 = vmatpush1.msra.mxu0 0.0
      %1464 = vmatprep.subr.mxu0 0.0
      %1465 = vmatpush1.msra.mxu0 0.0
      %1466 = vmatprep.subr.mxu0 0.0
      %1467 = vmatpush1.msra.mxu0 0.0
      %1468 = vmatprep.subr.mxu0 0.0
      %1469 = vmatpush1.msra.mxu0 0.0
      %1470 = vmatprep.subr.mxu0 0.0
      %1471 = vmatpush1.msra.mxu0 0.0
      %1472 = vmatprep.subr.mxu0 0.0
      %1473 = vmatpush1.msra.mxu0 0.0
      %1474 = vmatprep.subr.mxu0 0.0
      %1475 = vmatpush1.msra.mxu0 0.0
      %1476 = vmatprep.subr.mxu0 0.0
      %1477 = vmatpush1.msra.mxu0 0.0
      %1478 = vmatprep.subr.mxu0 0.0
      %1479 = vmatpush1.msra.mxu0 0.0
      %1480 = vmatprep.subr.mxu0 0.0
      %1481 = vmatpush1.msra.mxu0 0.0
      %1482 = vmatprep.subr.mxu0 %v1450
      %1483 = vmatpush1.msra.mxu0 %v1447
      %1484 = vmatprep.subr.mxu0 0.0
      %1485 = vmatpush2.msra.mxu0 0.0
      %1486 = vmatprep.subr.mxu0 0.0
      %1487 = vmatpush2.msra.mxu0 0.0
      %1488 = vmatprep.subr.mxu0 0.0
      %1489 = vmatpush2.msra.mxu0 0.0
      %1490 = vmatprep.subr.mxu0 0.0
      %1491 = vmatpush2.msra.mxu0 0.0
      %1492 = vmatprep.subr.mxu0 0.0
      %1493 = vmatpush2.msra.mxu0 0.0
      %1494 = vmatprep.subr.mxu0 0.0
      %1495 = vmatpush2.msra.mxu0 0.0
      %1496 = vmatprep.subr.mxu0 0.0
      %1497 = vmatpush2.msra.mxu0 0.0
      %1498 = vmatprep.subr.mxu0 0.0
      %1499 = vmatpush2.msra.mxu0 0.0
      %1500 = vmatprep.subr.mxu0 0.0
      %1501 = vmatpush2.msra.mxu0 0.0
      %1502 = vmatprep.subr.mxu0 0.0
      %1503 = vmatpush2.msra.mxu0 0.0
      %1504 = vmatprep.subr.mxu0 0.0
      %1505 = vmatpush2.msra.mxu0 0.0
      %1506 = vmatprep.subr.mxu0 0.0
      %1507 = vmatpush2.msra.mxu0 0.0
      %1508 = vmatprep.subr.mxu0 0.0
      %1509 = vmatpush2.msra.mxu0 0.0
      %1510 = vmatprep.subr.mxu0 0.0
      %1511 = vmatpush2.msra.mxu0 0.0
      %1512 = vmatprep.subr.mxu0 0.0
      %1513 = vmatpush2.msra.mxu0 0.0
      %1514 = vmatprep.subr.mxu0 0.0
      %1515 = vmatpush2.msra.mxu0 0.0
      %1516 = vmatprep.mubr.f32.mxu0 0.0
      %1517 = vmatmul.mubr.f32.gmra.mxu0 %v1444
      %v1518 = vpop.f32.mrf.mxu0
      %v1519 = vadd.f32 0.0, %v1518
      %v1520 = vpop.f32.mrf.mxu0
      %v1521 = vadd.f32 0.0, %v1520
      %1522 = vdwg.mxu0
      %v1523 = vadd.f32 %v1431, %v1519
      %v1524 = vadd.f32 %v1432, %v1521
      %s1525 = scalar_lea.vmem %s5, 6
      %v1526 = vld [vmem:[%s1525] ss:$8 sm:$0x3]
      %1527 = vrot.lane.b32.xlu0 %v347, 113
      %v1528 = vpop.permute.xlu0 %1527
      %1529 = vrot.lane.b32.xlu0 %v351, 113
      %v1530 = vpop.permute.xlu0 %1529
      %vm1531 = vcmp.lt.s32.totalorder %v358, 113
      %v1532 = vsel %vm1531, %v1528, %v1530
      %v1533 = vsel %vm1531, %v1530, %v1528
      %s1534 = scalar_lea.vmem %s2, 48
      %v1535 = vld [vmem:[%s1534] sm:$0xff]
      %v1537 = vlaneseq
      %v1538 = vshrl.u32 %v1537, 7
      %v1539 = vsub.s32 0, %v1538
      %v1540 = vrot.slane %v1526, %v1539
      %v1541 = vlaneseq
      %v1542 = vshrl.u32 %v1541, 7
      %v1543 = vsub.s32 1, %v1542
      %v1544 = vrot.slane %v1526, %v1543
      %v1547 = vmul.f32 %v1532, %v1540
      %v1548 = vmul.f32 %v1533, %v1544
      %v1550 = vsel %vm388, %v1535, 0
      %v1553 = vsel %vm392, %v1547, 0
      %v1556 = vsel %vm392, %v1548, 0
      %1558 = vmatprep.subr.mxu0 0.0
      %1559 = vmatpush1.msra.mxu0 0.0
      %1560 = vmatprep.subr.mxu0 0.0
      %1561 = vmatpush1.msra.mxu0 0.0
      %1562 = vmatprep.subr.mxu0 0.0
      %1563 = vmatpush1.msra.mxu0 0.0
      %1564 = vmatprep.subr.mxu0 0.0
      %1565 = vmatpush1.msra.mxu0 0.0
      %1566 = vmatprep.subr.mxu0 0.0
      %1567 = vmatpush1.msra.mxu0 0.0
      %1568 = vmatprep.subr.mxu0 0.0
      %1569 = vmatpush1.msra.mxu0 0.0
      %1570 = vmatprep.subr.mxu0 0.0
      %1571 = vmatpush1.msra.mxu0 0.0
      %1572 = vmatprep.subr.mxu0 0.0
      %1573 = vmatpush1.msra.mxu0 0.0
      %1574 = vmatprep.subr.mxu0 0.0
      %1575 = vmatpush1.msra.mxu0 0.0
      %1576 = vmatprep.subr.mxu0 0.0
      %1577 = vmatpush1.msra.mxu0 0.0
      %1578 = vmatprep.subr.mxu0 0.0
      %1579 = vmatpush1.msra.mxu0 0.0
      %1580 = vmatprep.subr.mxu0 0.0
      %1581 = vmatpush1.msra.mxu0 0.0
      %1582 = vmatprep.subr.mxu0 0.0
      %1583 = vmatpush1.msra.mxu0 0.0
      %1584 = vmatprep.subr.mxu0 0.0
      %1585 = vmatpush1.msra.mxu0 0.0
      %1586 = vmatprep.subr.mxu0 0.0
      %1587 = vmatpush1.msra.mxu0 0.0
      %1588 = vmatprep.subr.mxu0 %v1556
      %1589 = vmatpush1.msra.mxu0 %v1553
      %1590 = vmatprep.subr.mxu0 0.0
      %1591 = vmatpush2.msra.mxu0 0.0
      %1592 = vmatprep.subr.mxu0 0.0
      %1593 = vmatpush2.msra.mxu0 0.0
      %1594 = vmatprep.subr.mxu0 0.0
      %1595 = vmatpush2.msra.mxu0 0.0
      %1596 = vmatprep.subr.mxu0 0.0
      %1597 = vmatpush2.msra.mxu0 0.0
      %1598 = vmatprep.subr.mxu0 0.0
      %1599 = vmatpush2.msra.mxu0 0.0
      %1600 = vmatprep.subr.mxu0 0.0
      %1601 = vmatpush2.msra.mxu0 0.0
      %1602 = vmatprep.subr.mxu0 0.0
      %1603 = vmatpush2.msra.mxu0 0.0
      %1604 = vmatprep.subr.mxu0 0.0
      %1605 = vmatpush2.msra.mxu0 0.0
      %1606 = vmatprep.subr.mxu0 0.0
      %1607 = vmatpush2.msra.mxu0 0.0
      %1608 = vmatprep.subr.mxu0 0.0
      %1609 = vmatpush2.msra.mxu0 0.0
      %1610 = vmatprep.subr.mxu0 0.0
      %1611 = vmatpush2.msra.mxu0 0.0
      %1612 = vmatprep.subr.mxu0 0.0
      %1613 = vmatpush2.msra.mxu0 0.0
      %1614 = vmatprep.subr.mxu0 0.0
      %1615 = vmatpush2.msra.mxu0 0.0
      %1616 = vmatprep.subr.mxu0 0.0
      %1617 = vmatpush2.msra.mxu0 0.0
      %1618 = vmatprep.subr.mxu0 0.0
      %1619 = vmatpush2.msra.mxu0 0.0
      %1620 = vmatprep.subr.mxu0 0.0
      %1621 = vmatpush2.msra.mxu0 0.0
      %1622 = vmatprep.mubr.f32.mxu0 0.0
      %1623 = vmatmul.mubr.f32.gmra.mxu0 %v1550
      %v1624 = vpop.f32.mrf.mxu0
      %v1625 = vadd.f32 0.0, %v1624
      %v1626 = vpop.f32.mrf.mxu0
      %v1627 = vadd.f32 0.0, %v1626
      %1628 = vdwg.mxu0
      %v1629 = vadd.f32 %v1523, %v1625
      %v1630 = vadd.f32 %v1524, %v1627
      %1631 = vrot.lane.b32.xlu0 %v348, 113
      %v1632 = vpop.permute.xlu0 %1631
      %1633 = vrot.lane.b32.xlu0 %v377, 113
      %v1634 = vpop.permute.xlu0 %1633
      %v1635 = vsel %vm1531, %v1632, %v1634
      %v1636 = vsel %vm1531, %v1634, %v1632
      %s1637 = scalar_lea.vmem %s3, 48
      %v1638 = vld [vmem:[%s1637] sm:$0xff]
      %v1639 = vmul.f32 %v1635, %v1540
      %v1640 = vmul.f32 %v1636, %v1544
      %v1642 = vsel %vm388, %v1638, 0
      %v1645 = vsel %vm392, %v1639, 0
      %v1648 = vsel %vm392, %v1640, 0
      %1650 = vmatprep.subr.mxu0 0.0
      %1651 = vmatpush1.msra.mxu0 0.0
      %1652 = vmatprep.subr.mxu0 0.0
      %1653 = vmatpush1.msra.mxu0 0.0
      %1654 = vmatprep.subr.mxu0 0.0
      %1655 = vmatpush1.msra.mxu0 0.0
      %1656 = vmatprep.subr.mxu0 0.0
      %1657 = vmatpush1.msra.mxu0 0.0
      %1658 = vmatprep.subr.mxu0 0.0
      %1659 = vmatpush1.msra.mxu0 0.0
      %1660 = vmatprep.subr.mxu0 0.0
      %1661 = vmatpush1.msra.mxu0 0.0
      %1662 = vmatprep.subr.mxu0 0.0
      %1663 = vmatpush1.msra.mxu0 0.0
      %1664 = vmatprep.subr.mxu0 0.0
      %1665 = vmatpush1.msra.mxu0 0.0
      %1666 = vmatprep.subr.mxu0 0.0
      %1667 = vmatpush1.msra.mxu0 0.0
      %1668 = vmatprep.subr.mxu0 0.0
      %1669 = vmatpush1.msra.mxu0 0.0
      %1670 = vmatprep.subr.mxu0 0.0
      %1671 = vmatpush1.msra.mxu0 0.0
      %1672 = vmatprep.subr.mxu0 0.0
      %1673 = vmatpush1.msra.mxu0 0.0
      %1674 = vmatprep.subr.mxu0 0.0
      %1675 = vmatpush1.msra.mxu0 0.0
      %1676 = vmatprep.subr.mxu0 0.0
      %1677 = vmatpush1.msra.mxu0 0.0
      %1678 = vmatprep.subr.mxu0 0.0
      %1679 = vmatpush1.msra.mxu0 0.0
      %1680 = vmatprep.subr.mxu0 %v1648
      %1681 = vmatpush1.msra.mxu0 %v1645
      %1682 = vmatprep.subr.mxu0 0.0
      %1683 = vmatpush2.msra.mxu0 0.0
      %1684 = vmatprep.subr.mxu0 0.0
      %1685 = vmatpush2.msra.mxu0 0.0
      %1686 = vmatprep.subr.mxu0 0.0
      %1687 = vmatpush2.msra.mxu0 0.0
      %1688 = vmatprep.subr.mxu0 0.0
      %1689 = vmatpush2.msra.mxu0 0.0
      %1690 = vmatprep.subr.mxu0 0.0
      %1691 = vmatpush2.msra.mxu0 0.0
      %1692 = vmatprep.subr.mxu0 0.0
      %1693 = vmatpush2.msra.mxu0 0.0
      %1694 = vmatprep.subr.mxu0 0.0
      %1695 = vmatpush2.msra.mxu0 0.0
      %1696 = vmatprep.subr.mxu0 0.0
      %1697 = vmatpush2.msra.mxu0 0.0
      %1698 = vmatprep.subr.mxu0 0.0
      %1699 = vmatpush2.msra.mxu0 0.0
      %1700 = vmatprep.subr.mxu0 0.0
      %1701 = vmatpush2.msra.mxu0 0.0
      %1702 = vmatprep.subr.mxu0 0.0
      %1703 = vmatpush2.msra.mxu0 0.0
      %1704 = vmatprep.subr.mxu0 0.0
      %1705 = vmatpush2.msra.mxu0 0.0
      %1706 = vmatprep.subr.mxu0 0.0
      %1707 = vmatpush2.msra.mxu0 0.0
      %1708 = vmatprep.subr.mxu0 0.0
      %1709 = vmatpush2.msra.mxu0 0.0
      %1710 = vmatprep.subr.mxu0 0.0
      %1711 = vmatpush2.msra.mxu0 0.0
      %1712 = vmatprep.subr.mxu0 0.0
      %1713 = vmatpush2.msra.mxu0 0.0
      %1714 = vmatprep.mubr.f32.mxu0 0.0
      %1715 = vmatmul.mubr.f32.gmra.mxu0 %v1642
      %v1716 = vpop.f32.mrf.mxu0
      %v1717 = vadd.f32 0.0, %v1716
      %v1718 = vpop.f32.mrf.mxu0
      %v1719 = vadd.f32 0.0, %v1718
      %1720 = vdwg.mxu0
      %v1721 = vadd.f32 %v1629, %v1717
      %v1722 = vadd.f32 %v1630, %v1719
      %s1723 = scalar_lea.vmem %s5, 7
      %v1724 = vld [vmem:[%s1723] ss:$8 sm:$0x3]
      %1725 = vrot.lane.b32.xlu0 %v347, 112
      %v1726 = vpop.permute.xlu0 %1725
      %1727 = vrot.lane.b32.xlu0 %v351, 112
      %v1728 = vpop.permute.xlu0 %1727
      %vm1729 = vcmp.lt.s32.totalorder %v358, 112
      %v1730 = vsel %vm1729, %v1726, %v1728
      %v1731 = vsel %vm1729, %v1728, %v1726
      %s1732 = scalar_lea.vmem %s2, 56
      %v1733 = vld [vmem:[%s1732] sm:$0xff]
      %v1735 = vlaneseq
      %v1736 = vshrl.u32 %v1735, 7
      %v1737 = vsub.s32 0, %v1736
      %v1738 = vrot.slane %v1724, %v1737
      %v1739 = vlaneseq
      %v1740 = vshrl.u32 %v1739, 7
      %v1741 = vsub.s32 1, %v1740
      %v1742 = vrot.slane %v1724, %v1741
      %v1745 = vmul.f32 %v1730, %v1738
      %v1746 = vmul.f32 %v1731, %v1742
      %v1748 = vsel %vm388, %v1733, 0
      %v1751 = vsel %vm392, %v1745, 0
      %v1754 = vsel %vm392, %v1746, 0
      %1756 = vmatprep.subr.mxu0 0.0
      %1757 = vmatpush1.msra.mxu0 0.0
      %1758 = vmatprep.subr.mxu0 0.0
      %1759 = vmatpush1.msra.mxu0 0.0
      %1760 = vmatprep.subr.mxu0 0.0
      %1761 = vmatpush1.msra.mxu0 0.0
      %1762 = vmatprep.subr.mxu0 0.0
      %1763 = vmatpush1.msra.mxu0 0.0
      %1764 = vmatprep.subr.mxu0 0.0
      %1765 = vmatpush1.msra.mxu0 0.0
      %1766 = vmatprep.subr.mxu0 0.0
      %1767 = vmatpush1.msra.mxu0 0.0
      %1768 = vmatprep.subr.mxu0 0.0
      %1769 = vmatpush1.msra.mxu0 0.0
      %1770 = vmatprep.subr.mxu0 0.0
      %1771 = vmatpush1.msra.mxu0 0.0
      %1772 = vmatprep.subr.mxu0 0.0
      %1773 = vmatpush1.msra.mxu0 0.0
      %1774 = vmatprep.subr.mxu0 0.0
      %1775 = vmatpush1.msra.mxu0 0.0
      %1776 = vmatprep.subr.mxu0 0.0
      %1777 = vmatpush1.msra.mxu0 0.0
      %1778 = vmatprep.subr.mxu0 0.0
      %1779 = vmatpush1.msra.mxu0 0.0
      %1780 = vmatprep.subr.mxu0 0.0
      %1781 = vmatpush1.msra.mxu0 0.0
      %1782 = vmatprep.subr.mxu0 0.0
      %1783 = vmatpush1.msra.mxu0 0.0
      %1784 = vmatprep.subr.mxu0 0.0
      %1785 = vmatpush1.msra.mxu0 0.0
      %1786 = vmatprep.subr.mxu0 %v1754
      %1787 = vmatpush1.msra.mxu0 %v1751
      %1788 = vmatprep.subr.mxu0 0.0
      %1789 = vmatpush2.msra.mxu0 0.0
      %1790 = vmatprep.subr.mxu0 0.0
      %1791 = vmatpush2.msra.mxu0 0.0
      %1792 = vmatprep.subr.mxu0 0.0
      %1793 = vmatpush2.msra.mxu0 0.0
      %1794 = vmatprep.subr.mxu0 0.0
      %1795 = vmatpush2.msra.mxu0 0.0
      %1796 = vmatprep.subr.mxu0 0.0
      %1797 = vmatpush2.msra.mxu0 0.0
      %1798 = vmatprep.subr.mxu0 0.0
      %1799 = vmatpush2.msra.mxu0 0.0
      %1800 = vmatprep.subr.mxu0 0.0
      %1801 = vmatpush2.msra.mxu0 0.0
      %1802 = vmatprep.subr.mxu0 0.0
      %1803 = vmatpush2.msra.mxu0 0.0
      %1804 = vmatprep.subr.mxu0 0.0
      %1805 = vmatpush2.msra.mxu0 0.0
      %1806 = vmatprep.subr.mxu0 0.0
      %1807 = vmatpush2.msra.mxu0 0.0
      %1808 = vmatprep.subr.mxu0 0.0
      %1809 = vmatpush2.msra.mxu0 0.0
      %1810 = vmatprep.subr.mxu0 0.0
      %1811 = vmatpush2.msra.mxu0 0.0
      %1812 = vmatprep.subr.mxu0 0.0
      %1813 = vmatpush2.msra.mxu0 0.0
      %1814 = vmatprep.subr.mxu0 0.0
      %1815 = vmatpush2.msra.mxu0 0.0
      %1816 = vmatprep.subr.mxu0 0.0
      %1817 = vmatpush2.msra.mxu0 0.0
      %1818 = vmatprep.subr.mxu0 0.0
      %1819 = vmatpush2.msra.mxu0 0.0
      %1820 = vmatprep.mubr.f32.mxu0 0.0
      %1821 = vmatmul.mubr.f32.gmra.mxu0 %v1748
      %v1822 = vpop.f32.mrf.mxu0
      %v1823 = vadd.f32 0.0, %v1822
      %v1824 = vpop.f32.mrf.mxu0
      %v1825 = vadd.f32 0.0, %v1824
      %1826 = vdwg.mxu0
      %v1827 = vadd.f32 %v1721, %v1823
      %v1828 = vadd.f32 %v1722, %v1825
      %1829 = vrot.lane.b32.xlu0 %v348, 112
      %v1830 = vpop.permute.xlu0 %1829
      %1831 = vrot.lane.b32.xlu0 %v377, 112
      %v1832 = vpop.permute.xlu0 %1831
      %v1833 = vsel %vm1729, %v1830, %v1832
      %v1834 = vsel %vm1729, %v1832, %v1830
      %s1835 = scalar_lea.vmem %s3, 56
      %v1836 = vld [vmem:[%s1835] sm:$0xff]
      %v1837 = vmul.f32 %v1833, %v1738
      %v1838 = vmul.f32 %v1834, %v1742
      %v1840 = vsel %vm388, %v1836, 0
      %v1843 = vsel %vm392, %v1837, 0
      %v1846 = vsel %vm392, %v1838, 0
      %1848 = vmatprep.subr.mxu0 0.0
      %1849 = vmatpush1.msra.mxu0 0.0
      %1850 = vmatprep.subr.mxu0 0.0
      %1851 = vmatpush1.msra.mxu0 0.0
      %1852 = vmatprep.subr.mxu0 0.0
      %1853 = vmatpush1.msra.mxu0 0.0
      %1854 = vmatprep.subr.mxu0 0.0
      %1855 = vmatpush1.msra.mxu0 0.0
      %1856 = vmatprep.subr.mxu0 0.0
      %1857 = vmatpush1.msra.mxu0 0.0
      %1858 = vmatprep.subr.mxu0 0.0
      %1859 = vmatpush1.msra.mxu0 0.0
      %1860 = vmatprep.subr.mxu0 0.0
      %1861 = vmatpush1.msra.mxu0 0.0
      %1862 = vmatprep.subr.mxu0 0.0
      %1863 = vmatpush1.msra.mxu0 0.0
      %1864 = vmatprep.subr.mxu0 0.0
      %1865 = vmatpush1.msra.mxu0 0.0
      %1866 = vmatprep.subr.mxu0 0.0
      %1867 = vmatpush1.msra.mxu0 0.0
      %1868 = vmatprep.subr.mxu0 0.0
      %1869 = vmatpush1.msra.mxu0 0.0
      %1870 = vmatprep.subr.mxu0 0.0
      %1871 = vmatpush1.msra.mxu0 0.0
      %1872 = vmatprep.subr.mxu0 0.0
      %1873 = vmatpush1.msra.mxu0 0.0
      %1874 = vmatprep.subr.mxu0 0.0
      %1875 = vmatpush1.msra.mxu0 0.0
      %1876 = vmatprep.subr.mxu0 0.0
      %1877 = vmatpush1.msra.mxu0 0.0
      %1878 = vmatprep.subr.mxu0 %v1846
      %1879 = vmatpush1.msra.mxu0 %v1843
      %1880 = vmatprep.subr.mxu0 0.0
      %1881 = vmatpush2.msra.mxu0 0.0
      %1882 = vmatprep.subr.mxu0 0.0
      %1883 = vmatpush2.msra.mxu0 0.0
      %1884 = vmatprep.subr.mxu0 0.0
      %1885 = vmatpush2.msra.mxu0 0.0
      %1886 = vmatprep.subr.mxu0 0.0
      %1887 = vmatpush2.msra.mxu0 0.0
      %1888 = vmatprep.subr.mxu0 0.0
      %1889 = vmatpush2.msra.mxu0 0.0
      %1890 = vmatprep.subr.mxu0 0.0
      %1891 = vmatpush2.msra.mxu0 0.0
      %1892 = vmatprep.subr.mxu0 0.0
      %1893 = vmatpush2.msra.mxu0 0.0
      %1894 = vmatprep.subr.mxu0 0.0
      %1895 = vmatpush2.msra.mxu0 0.0
      %1896 = vmatprep.subr.mxu0 0.0
      %1897 = vmatpush2.msra.mxu0 0.0
      %1898 = vmatprep.subr.mxu0 0.0
      %1899 = vmatpush2.msra.mxu0 0.0
      %1900 = vmatprep.subr.mxu0 0.0
      %1901 = vmatpush2.msra.mxu0 0.0
      %1902 = vmatprep.subr.mxu0 0.0
      %1903 = vmatpush2.msra.mxu0 0.0
      %1904 = vmatprep.subr.mxu0 0.0
      %1905 = vmatpush2.msra.mxu0 0.0
      %1906 = vmatprep.subr.mxu0 0.0
      %1907 = vmatpush2.msra.mxu0 0.0
      %1908 = vmatprep.subr.mxu0 0.0
      %1909 = vmatpush2.msra.mxu0 0.0
      %1910 = vmatprep.subr.mxu0 0.0
      %1911 = vmatpush2.msra.mxu0 0.0
      %1912 = vmatprep.mubr.f32.mxu0 0.0
      %1913 = vmatmul.mubr.f32.gmra.mxu0 %v1840
      %v1914 = vpop.f32.mrf.mxu0
      %v1915 = vadd.f32 0.0, %v1914
      %v1916 = vpop.f32.mrf.mxu0
      %v1917 = vadd.f32 0.0, %v1916
      %1918 = vdwg.mxu0
      %v1919 = vadd.f32 %v1827, %v1915
      %v1920 = vadd.f32 %v1828, %v1917
      %s1921 = scalar_lea.vmem %s5, 16
      %v1922 = vld [vmem:[%s1921] ss:$8 sm:$0x3]
      %1923 = vrot.lane.b32.xlu0 %v347, 111
      %v1924 = vpop.permute.xlu0 %1923
      %1925 = vrot.lane.b32.xlu0 %v351, 111
      %v1926 = vpop.permute.xlu0 %1925
      %vm1927 = vcmp.lt.s32.totalorder %v358, 111
      %v1928 = vsel %vm1927, %v1924, %v1926
      %v1929 = vsel %vm1927, %v1926, %v1924
      %s1930 = scalar_lea.vmem %s2, 64
      %v1931 = vld [vmem:[%s1930] sm:$0xff]
      %v1933 = vlaneseq
      %v1934 = vshrl.u32 %v1933, 7
      %v1935 = vsub.s32 0, %v1934
      %v1936 = vrot.slane %v1922, %v1935
      %v1937 = vlaneseq
      %v1938 = vshrl.u32 %v1937, 7
      %v1939 = vsub.s32 1, %v1938
      %v1940 = vrot.slane %v1922, %v1939
      %v1943 = vmul.f32 %v1928, %v1936
      %v1944 = vmul.f32 %v1929, %v1940
      %v1946 = vsel %vm388, %v1931, 0
      %v1949 = vsel %vm392, %v1943, 0
      %v1952 = vsel %vm392, %v1944, 0
      %1954 = vmatprep.subr.mxu0 0.0
      %1955 = vmatpush1.msra.mxu0 0.0
      %1956 = vmatprep.subr.mxu0 0.0
      %1957 = vmatpush1.msra.mxu0 0.0
      %1958 = vmatprep.subr.mxu0 0.0
      %1959 = vmatpush1.msra.mxu0 0.0
      %1960 = vmatprep.subr.mxu0 0.0
      %1961 = vmatpush1.msra.mxu0 0.0
      %1962 = vmatprep.subr.mxu0 0.0
      %1963 = vmatpush1.msra.mxu0 0.0
      %1964 = vmatprep.subr.mxu0 0.0
      %1965 = vmatpush1.msra.mxu0 0.0
      %1966 = vmatprep.subr.mxu0 0.0
      %1967 = vmatpush1.msra.mxu0 0.0
      %1968 = vmatprep.subr.mxu0 0.0
      %1969 = vmatpush1.msra.mxu0 0.0
      %1970 = vmatprep.subr.mxu0 0.0
      %1971 = vmatpush1.msra.mxu0 0.0
      %1972 = vmatprep.subr.mxu0 0.0
      %1973 = vmatpush1.msra.mxu0 0.0
      %1974 = vmatprep.subr.mxu0 0.0
      %1975 = vmatpush1.msra.mxu0 0.0
      %1976 = vmatprep.subr.mxu0 0.0
      %1977 = vmatpush1.msra.mxu0 0.0
      %1978 = vmatprep.subr.mxu0 0.0
      %1979 = vmatpush1.msra.mxu0 0.0
      %1980 = vmatprep.subr.mxu0 0.0
      %1981 = vmatpush1.msra.mxu0 0.0
      %1982 = vmatprep.subr.mxu0 0.0
      %1983 = vmatpush1.msra.mxu0 0.0
      %1984 = vmatprep.subr.mxu0 %v1952
      %1985 = vmatpush1.msra.mxu0 %v1949
      %1986 = vmatprep.subr.mxu0 0.0
      %1987 = vmatpush2.msra.mxu0 0.0
      %1988 = vmatprep.subr.mxu0 0.0
      %1989 = vmatpush2.msra.mxu0 0.0
      %1990 = vmatprep.subr.mxu0 0.0
      %1991 = vmatpush2.msra.mxu0 0.0
      %1992 = vmatprep.subr.mxu0 0.0
      %1993 = vmatpush2.msra.mxu0 0.0
      %1994 = vmatprep.subr.mxu0 0.0
      %1995 = vmatpush2.msra.mxu0 0.0
      %1996 = vmatprep.subr.mxu0 0.0
      %1997 = vmatpush2.msra.mxu0 0.0
      %1998 = vmatprep.subr.mxu0 0.0
      %1999 = vmatpush2.msra.mxu0 0.0
      %2000 = vmatprep.subr.mxu0 0.0
      %2001 = vmatpush2.msra.mxu0 0.0
      %2002 = vmatprep.subr.mxu0 0.0
      %2003 = vmatpush2.msra.mxu0 0.0
      %2004 = vmatprep.subr.mxu0 0.0
      %2005 = vmatpush2.msra.mxu0 0.0
      %2006 = vmatprep.subr.mxu0 0.0
      %2007 = vmatpush2.msra.mxu0 0.0
      %2008 = vmatprep.subr.mxu0 0.0
      %2009 = vmatpush2.msra.mxu0 0.0
      %2010 = vmatprep.subr.mxu0 0.0
      %2011 = vmatpush2.msra.mxu0 0.0
      %2012 = vmatprep.subr.mxu0 0.0
      %2013 = vmatpush2.msra.mxu0 0.0
      %2014 = vmatprep.subr.mxu0 0.0
      %2015 = vmatpush2.msra.mxu0 0.0
      %2016 = vmatprep.subr.mxu0 0.0
      %2017 = vmatpush2.msra.mxu0 0.0
      %2018 = vmatprep.mubr.f32.mxu0 0.0
      %2019 = vmatmul.mubr.f32.gmra.mxu0 %v1946
      %v2020 = vpop.f32.mrf.mxu0
      %v2021 = vadd.f32 0.0, %v2020
      %v2022 = vpop.f32.mrf.mxu0
      %v2023 = vadd.f32 0.0, %v2022
      %2024 = vdwg.mxu0
      %v2025 = vadd.f32 %v1919, %v2021
      %v2026 = vadd.f32 %v1920, %v2023
      %2027 = vrot.lane.b32.xlu0 %v348, 111
      %v2028 = vpop.permute.xlu0 %2027
      %2029 = vrot.lane.b32.xlu0 %v377, 111
      %v2030 = vpop.permute.xlu0 %2029
      %v2031 = vsel %vm1927, %v2028, %v2030
      %v2032 = vsel %vm1927, %v2030, %v2028
      %s2033 = scalar_lea.vmem %s3, 64
      %v2034 = vld [vmem:[%s2033] sm:$0xff]
      %v2035 = vmul.f32 %v2031, %v1936
      %v2036 = vmul.f32 %v2032, %v1940
      %v2038 = vsel %vm388, %v2034, 0
      %v2041 = vsel %vm392, %v2035, 0
      %v2044 = vsel %vm392, %v2036, 0
      %2046 = vmatprep.subr.mxu0 0.0
      %2047 = vmatpush1.msra.mxu0 0.0
      %2048 = vmatprep.subr.mxu0 0.0
      %2049 = vmatpush1.msra.mxu0 0.0
      %2050 = vmatprep.subr.mxu0 0.0
      %2051 = vmatpush1.msra.mxu0 0.0
      %2052 = vmatprep.subr.mxu0 0.0
      %2053 = vmatpush1.msra.mxu0 0.0
      %2054 = vmatprep.subr.mxu0 0.0
      %2055 = vmatpush1.msra.mxu0 0.0
      %2056 = vmatprep.subr.mxu0 0.0
      %2057 = vmatpush1.msra.mxu0 0.0
      %2058 = vmatprep.subr.mxu0 0.0
      %2059 = vmatpush1.msra.mxu0 0.0
      %2060 = vmatprep.subr.mxu0 0.0
      %2061 = vmatpush1.msra.mxu0 0.0
      %2062 = vmatprep.subr.mxu0 0.0
      %2063 = vmatpush1.msra.mxu0 0.0
      %2064 = vmatprep.subr.mxu0 0.0
      %2065 = vmatpush1.msra.mxu0 0.0
      %2066 = vmatprep.subr.mxu0 0.0
      %2067 = vmatpush1.msra.mxu0 0.0
      %2068 = vmatprep.subr.mxu0 0.0
      %2069 = vmatpush1.msra.mxu0 0.0
      %2070 = vmatprep.subr.mxu0 0.0
      %2071 = vmatpush1.msra.mxu0 0.0
      %2072 = vmatprep.subr.mxu0 0.0
      %2073 = vmatpush1.msra.mxu0 0.0
      %2074 = vmatprep.subr.mxu0 0.0
      %2075 = vmatpush1.msra.mxu0 0.0
      %2076 = vmatprep.subr.mxu0 %v2044
      %2077 = vmatpush1.msra.mxu0 %v2041
      %2078 = vmatprep.subr.mxu0 0.0
      %2079 = vmatpush2.msra.mxu0 0.0
      %2080 = vmatprep.subr.mxu0 0.0
      %2081 = vmatpush2.msra.mxu0 0.0
      %2082 = vmatprep.subr.mxu0 0.0
      %2083 = vmatpush2.msra.mxu0 0.0
      %2084 = vmatprep.subr.mxu0 0.0
      %2085 = vmatpush2.msra.mxu0 0.0
      %2086 = vmatprep.subr.mxu0 0.0
      %2087 = vmatpush2.msra.mxu0 0.0
      %2088 = vmatprep.subr.mxu0 0.0
      %2089 = vmatpush2.msra.mxu0 0.0
      %2090 = vmatprep.subr.mxu0 0.0
      %2091 = vmatpush2.msra.mxu0 0.0
      %2092 = vmatprep.subr.mxu0 0.0
      %2093 = vmatpush2.msra.mxu0 0.0
      %2094 = vmatprep.subr.mxu0 0.0
      %2095 = vmatpush2.msra.mxu0 0.0
      %2096 = vmatprep.subr.mxu0 0.0
      %2097 = vmatpush2.msra.mxu0 0.0
      %2098 = vmatprep.subr.mxu0 0.0
      %2099 = vmatpush2.msra.mxu0 0.0
      %2100 = vmatprep.subr.mxu0 0.0
      %2101 = vmatpush2.msra.mxu0 0.0
      %2102 = vmatprep.subr.mxu0 0.0
      %2103 = vmatpush2.msra.mxu0 0.0
      %2104 = vmatprep.subr.mxu0 0.0
      %2105 = vmatpush2.msra.mxu0 0.0
      %2106 = vmatprep.subr.mxu0 0.0
      %2107 = vmatpush2.msra.mxu0 0.0
      %2108 = vmatprep.subr.mxu0 0.0
      %2109 = vmatpush2.msra.mxu0 0.0
      %2110 = vmatprep.mubr.f32.mxu0 0.0
      %2111 = vmatmul.mubr.f32.gmra.mxu0 %v2038
      %v2112 = vpop.f32.mrf.mxu0
      %v2113 = vadd.f32 0.0, %v2112
      %v2114 = vpop.f32.mrf.mxu0
      %v2115 = vadd.f32 0.0, %v2114
      %2116 = vdwg.mxu0
      %v2117 = vadd.f32 %v2025, %v2113
      %v2118 = vadd.f32 %v2026, %v2115
      %v2119 = vld [vmem:[%s4] sm:$0xff]
      %2121 = vset.pattern.permute.xlu0 0
      %2122 = vperm.xlu0 %2121, %v2119
      %v2123 = vpop.permute.xlu0 %2122
      %v2125 = vadd.f32 %v2117, %v2123
      %v2126 = vadd.f32 %v2118, %v2123
      %v2127 = vmax.f32 %v2125, 0.0
      %v2128 = vmax.f32 %v2126, 0.0
      %2129 = vst [vmem:[%s338] sm:$0xff] %v2127
      %2130 = vst [vmem:[%s338 + $0x8] sm:$0xff] %v2128
      %v2131 = vadd.f32 %v2127, %v2128
      %2132 = vadd.xlane.f32.xlu0 %v2131
      %v2133 = vpop.xlane.xlu0 %2132
      %vm2134 = vcmask 7168
      %2135 = vst.msk [vmem:[%s342] sm:$0xff] %vm2134, %v2133
      %v2136 = vmul.f32 %v2127, %v2127
      %v2137 = vmul.f32 %v2128, %v2128
      %v2138 = vadd.f32 %v2136, %v2137
      %2139 = vadd.xlane.f32.xlu0 %v2138
      %v2140 = vpop.xlane.xlu0 %2139
      %2141 = vst.msk [vmem:[%s346] sm:$0xff] %vm2134, %v2140
      %p2142 = scmp.lt.s32.totalorder %s20, 1
      %s2143 = scalar_select %p2142, %s20, 1
      %s2144 = smul.addr %s2143, 2
      %s2145 = smul.addr %s2144, 8
      %s2146 = scalar_lea.vmem %s6, %s2145
      %p2147 = scmp.lt.s32.totalorder %s20, 1
      %s2148 = scalar_select %p2147, %s20, 1
      %s2149 = smul.addr %s2148, 8
      %s2150 = scalar_lea.vmem %s7, %s2149
      %p2151 = scmp.lt.s32.totalorder %s20, 1
      %s2152 = scalar_select %p2151, %s20, 1
      %s2153 = smul.addr %s2152, 8
      %s2154 = scalar_lea.vmem %s8, %s2153
      // Predicated region
      $region45: #{upsample_forward.5} parent=43 // pred_check
        %p2155 = pneg %p174
      $region46: #{upsample_forward.5} parent=43 // pred_check_branch
        %2157 = sbr.rel (%p2155) target = $region48
      $region47: #{upsample_forward.5} parent=43 // pred_region
        _
      $region48: #{upsample_forward.5} parent=43 // pred_fallthru
        _
      // Predicated region
      $region49: #{upsample_forward.5} parent=43 // pred_check
        %p2158 = pneg %p200
      $region50: #{upsample_forward.5} parent=43 // pred_check_branch
        %2160 = sbr.rel (%p2158) target = $region52
      $region51: #{upsample_forward.5} parent=43 // pred_region
        _
      $region52: #{upsample_forward.5} parent=43 // pred_fallthru
        _
      // Predicated region
      $region53: #{upsample_forward.5} parent=43 // pred_check
        %p2161 = pneg %p226
      $region54: #{upsample_forward.5} parent=43 // pred_check_branch
        %2163 = sbr.rel (%p2161) target = $region56
      $region55: #{upsample_forward.5} parent=43 // pred_region
        _
      $region56: #{upsample_forward.5} parent=43 // pred_fallthru
        _
    $region44: #{upsample_forward.5} parent=5 // pred_fallthru
      _
    %p2164 = scmp.le.s32.totalorder 2, %s15
    // Predicated region
    $region57: #{upsample_forward.5} parent=5 // pred_check
      %p2165 = pneg %p2164
    $region58: #{upsample_forward.5} parent=5 // pred_check_branch
      %2167 = sbr.rel (%p2165) target = $region60
    $region59: #{upsample_forward.5} parent=5 // pred_region
      %s2168 = ssub.s32 %s15, 2
      // Predicated region
      $region61: #{upsample_forward.5} parent=59 // pred_check
        %p2169 = pneg %p180
      $region62: #{upsample_forward.5} parent=59 // pred_check_branch
        %2171 = sbr.rel (%p2169) target = $region64
      $region63: #{upsample_forward.5} parent=59 // pred_region
        %p2172 = scmp.lt.s32.totalorder %s21, 1
        %s2173 = scalar_select %p2172, %s21, 1
        %s2174 = smul.addr %s2173, 2
        %s2175 = smul.addr %s2174, 8
        %s2176 = scalar_lea.vmem %s6, %s2175
      $region64: #{upsample_forward.5} parent=59 // pred_fallthru
        _
      // Predicated region
      $region65: #{upsample_forward.5} parent=59 // pred_check
        %p2177 = pneg %p206
      $region66: #{upsample_forward.5} parent=59 // pred_check_branch
        %2179 = sbr.rel (%p2177) target = $region68
      $region67: #{upsample_forward.5} parent=59 // pred_region
        %p2180 = scmp.lt.s32.totalorder %s21, 1
        %s2181 = scalar_select %p2180, %s21, 1
        %s2182 = smul.addr %s2181, 8
        %s2183 = scalar_lea.vmem %s7, %s2182
      $region68: #{upsample_forward.5} parent=59 // pred_fallthru
        _
      // Predicated region
      $region69: #{upsample_forward.5} parent=59 // pred_check
        %p2184 = pneg %p232
      $region70: #{upsample_forward.5} parent=59 // pred_check_branch
        %2186 = sbr.rel (%p2184) target = $region72
      $region71: #{upsample_forward.5} parent=59 // pred_region
        %p2187 = scmp.lt.s32.totalorder %s21, 1
        %s2188 = scalar_select %p2187, %s21, 1
        %s2189 = smul.addr %s2188, 8
        %s2190 = scalar_lea.vmem %s8, %s2189
      $region72: #{upsample_forward.5} parent=59 // pred_fallthru
        _
    $region60: #{upsample_forward.5} parent=5 // pred_fallthru
      _
  $region6: #{upsample_forward.5} parent=0 // loop_footer
    %s19 = sadd.s32 1, %s15
  $region7: #{upsample_forward.5} parent=0 // loop_footer_branch
    %14 = sbr.rel target = $region3
  $region8: #{upsample_forward.5} parent=0 // loop_exit
    _

</llo_original>
